<compile_context>
chip_gen: v5e
topology: v5e:2x2
jax: 0.10.0
libtpu: 0.0.40
codegen_flags: <defaults>
</compile_context>

<pallas_src>
import numpy as np
import jax
import jax.numpy as jnp
from jax import lax
from jax.experimental import pallas as pl
from jax.experimental.pallas import tpu as pltpu


# ---- problem constants (Projector on 16x16 RGB images, batch 2) ------------
N = 2                                  # batch
H = W = 16                             # spatial size
Hp = Wp = 18                           # zero-padded grid ("same" 3x3 conv)
M = Hp * Wp                            # flattened padded grid per image (324)
D = 128                                # lane offset of padded-grid position 0
CW = 384                               # computed lane width (3 full vregs >= M)
LB = 640                               # activation buffer lane width (mult of 128)
CREAL = (3, 6, 12, 18, 24, 1)          # real channel counts
CPAD = (8, 8, 16, 24, 24, 8)           # padded to multiples of 8 (sublane-aligned)
# flat lane offset of tap (kh, kw) relative to the center position
OFFSETS = tuple((kh - 1) * Wp + (kw - 1) for kh in range(3) for kw in range(3))

# Lane mask: 1.0 at interior grid positions (real pixels), 0.0 at padded-grid
# border positions and out-of-grid lanes.
_p = np.arange(CW)
_hh, _ww = _p // Wp, _p % Wp
_inside = (_p < M) & (_hh >= 1) & (_hh <= Hp - 2) & (_ww >= 1) & (_ww <= Wp - 2)
MASK_NP = _inside.astype(np.float32).reshape(1, CW)

# Advisory cost estimate (real channel counts).
_FLOPS = 2 * 9 * N * H * W * sum(CREAL[i] * CREAL[i + 1] for i in range(5))
_TRANS = N * CPAD[-1] * CW
_BYTES = 4 * (N * CPAD[0] * LB + N * CPAD[-1] * CW
              + sum(9 * CPAD[i] * CPAD[i + 1] + CPAD[i + 1] for i in range(5)))


def _projector_kernel(x_ref, mask_ref,
                      w1, b1, w2, b2, w3, b3, w4, b4, w5, b5,
                      o_ref, a1, a2, a3, a4):
    """Fused 5-layer forward pass; one image per grid step.

    x_ref   : (8, LB)  channels-on-sublanes input; padded-grid position p lives
                       at lane D+p, zeros elsewhere (incl. padded channels).
    mask_ref: (1, CW)  1.0 at interior positions, 0.0 at borders / out-of-grid.
    w*      : (9*Cout_p, Cin_p) tap-stacked weights (zero-padded rows/cols).
    b*      : (Cout_p, 1) biases (zero-padded).
    o_ref   : (8, CW)  sigmoid output of the last conv; only channel-row 0 and
                       lanes [0, M) are meaningful — the host wrapper slices
                       out the interior pixels (do not consume o_ref directly).
    a1..a4  : (C_pad, LB) VMEM scratch for the hidden activations.
    """
    # Zero only the halo/margin lanes (taps reach at most 19 lanes outside the
    # computed region); lanes [D, D+CW) are fully rewritten every layer.
    for a in (a1, a2, a3, a4):
        a[:, 0:D] = jnp.zeros((a.shape[0], D), jnp.float32)
        a[:, D + CW:LB] = jnp.zeros((a.shape[0], LB - D - CW), jnp.float32)

    interior = mask_ref[...] != 0.0                       # (1, CW) bool

    def layer(in_ref, w_ref, b_ref, out_ref, last):
        cout_p = b_ref.shape[0]
        acc = None
        for k, off in enumerate(OFFSETS):                 # 9 static taps
            wk = w_ref[k * cout_p:(k + 1) * cout_p, :]    # (Cout_p, Cin_p)
            tap = in_ref[:, D + off:D + off + CW]         # (Cin_p, CW) lane slice
            part = jnp.dot(wk, tap, preferred_element_type=jnp.float32)
            acc = part if acc is None else acc + part
        y = acc + b_ref[...]                              # lane-broadcast bias
        if last:
            out_ref[...] = jax.nn.sigmoid(y)              # full (8, CW) dense store
        else:
            # ReLU, then force border / out-of-grid lanes to exact zero so the
            # next layer's taps read correct "same" zero padding.
            out_ref[:, D:D + CW] = jnp.where(interior, jnp.maximum(y, 0.0), 0.0)

    layer(x_ref, w1, b1, a1, False)
    layer(a1,    w2, b2, a2, False)
    layer(a2,    w3, b3, a3, False)
    layer(a3,    w4, b4, a4, False)
    layer(a4,    w5, b5, o_ref, True)


def pack_params(params):
    """One-time packing of HWIO conv params into the kernel layout.

    Per layer: (3,3,Cin,Cout) -> (9*Cout_p, Cin_p) with tap-major rows matching
    OFFSETS order, zeros in padded positions; bias -> (Cout_p, 1).
    """
    packed = []
    for li, (w_hwio, b) in enumerate(params):
        cin, cout = CREAL[li], CREAL[li + 1]
        cin_p, cout_p = CPAD[li], CPAD[li + 1]
        w = jnp.transpose(w_hwio, (0, 1, 3, 2))                       # (3,3,cout,cin)
        w = jnp.pad(w, ((0, 0), (0, 0), (0, cout_p - cout), (0, cin_p - cin)))
        packed.append(jnp.reshape(w, (9 * cout_p, cin_p)))
        packed.append(jnp.pad(b, (0, cout_p - cout)).reshape(cout_p, 1))
    return tuple(packed)


@jax.jit
def forward(x_nchw, packed):
    """Forward pass matching Projector.forward. Input NCHW, output (N,1,H,W)."""
    # Minimal host glue (fuses to one small pad/reshape op): NCHW -> per-image
    # channels-on-sublanes slab with the padded grid at lanes [D, D+M).
    xp = jnp.pad(x_nchw, ((0, 0), (0, 0), (1, 1), (1, 1))).reshape(N, CREAL[0], M)
    x_in = jnp.pad(xp, ((0, 0), (0, CPAD[0] - CREAL[0]), (D, LB - D - M)))
    mask = jnp.asarray(MASK_NP)

    w_specs = [pl.BlockSpec(p.shape, lambda n: (0, 0)) for p in packed]
    out = pl.pallas_call(
        _projector_kernel,
        grid=(N,),                                        # one image per step
        out_shape=jax.ShapeDtypeStruct((N, CPAD[-1], CW), jnp.float32),
        in_specs=[pl.BlockSpec((None, CPAD[0], LB), lambda n: (n, 0, 0)),
                  pl.BlockSpec((1, CW), lambda n: (0, 0))] + w_specs,
        out_specs=pl.BlockSpec((None, CPAD[-1], CW), lambda n: (n, 0, 0)),
        scratch_shapes=[pltpu.VMEM((CPAD[i], LB), jnp.float32) for i in (1, 2, 3, 4)],
        compiler_params=pltpu.CompilerParams(
            dimension_semantics=("parallel",)),           # v7x: 2 TCs, one image each
        cost_estimate=pl.CostEstimate(flops=_FLOPS, transcendentals=_TRANS,
                                      bytes_accessed=_BYTES),
    )(x_in, mask, *packed)

    # Extract the interior pixels (channel-row 0, padded-grid interior lanes).
    y = out[:, 0, :M].reshape(N, Hp, Wp)[:, 1:H + 1, 1:W + 1]
    return y.reshape(N, 1, H, W)


def _reference_forward(x_nchw, params):
    """Pure-JAX reference (lax.conv) for correctness checking."""
    y = jnp.transpose(x_nchw, (0, 2, 3, 1))
    n_layers = len(params)
    for i, (w, b) in enumerate(params):
        dn = lax.conv_dimension_numbers(y.shape, w.shape, ("NHWC", "HWIO", "NHWC"))
        y = lax.conv_general_dilated(y, w, (1, 1), "SAME", dimension_numbers=dn) + b
        y = jax.nn.sigmoid(y) if i == n_layers - 1 else jnp.maximum(y, 0.0)
    return jnp.transpose(y, (0, 3, 1, 2))


def make_params(key):
    """Deterministic synthetic weights with the Projector's shapes (HWIO layout)."""
    params = []
    for i in range(5):
        cin, cout = CREAL[i], CREAL[i + 1]
        key, kw_, kb = jax.random.split(key, 3)
        w_oihw = jax.random.normal(kw_, (cout, cin, 3, 3), jnp.float32) / jnp.sqrt(9.0 * cin)
        b = jax.random.normal(kb, (cout,), jnp.float32) * 0.01
        params.append((jnp.transpose(w_oihw, (2, 3, 1, 0)), b))   # OIHW -> HWIO
    return params


if __name__ == "__main__":
    # TODO(synk): training path (Adam / MSELoss / fit / evaluate / project_mask)
    # is host-side utility code, not kernel work; only the forward pass is implemented.
    key = jax.random.PRNGKey(0)
    key, kx = jax.random.split(key)
    params = make_params(key)

    # small shapes consistent with the module: batch=2, 3-channel 16x16 images (NCHW)
    x = jax.random.normal(kx, (N, CREAL[0], H, W), jnp.float32)

    packed = pack_params(params)                      # one-time weight packing
    y = jax.block_until_ready(forward(x, packed))

    y_ref = jax.block_until_ready(_reference_forward(x, params))
    assert y.shape == (N, 1, H, W), y.shape
    err = float(jnp.max(jnp.abs(y - y_ref)))
    assert jnp.allclose(y, y_ref, atol=1e-4, rtol=1e-4), err

    print("KERNEL_OK")
</pallas_src>

<mosaic_0001>
module attributes {stable_mosaic.version = 11 : i64} {
  func.func @_projector_kernel(%arg0: i32, %arg1: memref<1x8x640xf32, #tpu.memory_space<vmem>>, %arg2: memref<1x384xf32, #tpu.memory_space<vmem>>, %arg3: memref<72x8xf32, #tpu.memory_space<vmem>>, %arg4: memref<8x1xf32, #tpu.memory_space<vmem>>, %arg5: memref<144x8xf32, #tpu.memory_space<vmem>>, %arg6: memref<16x1xf32, #tpu.memory_space<vmem>>, %arg7: memref<216x16xf32, #tpu.memory_space<vmem>>, %arg8: memref<24x1xf32, #tpu.memory_space<vmem>>, %arg9: memref<216x24xf32, #tpu.memory_space<vmem>>, %arg10: memref<24x1xf32, #tpu.memory_space<vmem>>, %arg11: memref<72x24xf32, #tpu.memory_space<vmem>>, %arg12: memref<8x1xf32, #tpu.memory_space<vmem>>, %arg13: memref<1x8x384xf32, #tpu.memory_space<vmem>>, %arg14: memref<8x640xf32, #tpu.memory_space<vmem>>, %arg15: memref<16x640xf32, #tpu.memory_space<vmem>>, %arg16: memref<24x640xf32, #tpu.memory_space<vmem>>, %arg17: memref<24x640xf32, #tpu.memory_space<vmem>>) attributes {dimension_semantics = [#tpu.dimension_semantics<parallel>], iteration_bounds = array<i64: 2>, scalar_prefetch = 0 : i64, scratch_operands = 4 : i64, tpu.core_type = #tpu.core_type<tc>, window_params = [{transform_indices = @transform_0, window_bounds = array<i64: 1, 8, 640>}, {pipeline_mode = #tpu.pipeline_mode<synchronous>, transform_indices = @transform_1, window_bounds = array<i64: 1, 384>}, {pipeline_mode = #tpu.pipeline_mode<synchronous>, transform_indices = @transform_2, window_bounds = array<i64: 72, 8>}, {pipeline_mode = #tpu.pipeline_mode<synchronous>, transform_indices = @transform_3, window_bounds = array<i64: 8, 1>}, {pipeline_mode = #tpu.pipeline_mode<synchronous>, transform_indices = @transform_4, window_bounds = array<i64: 144, 8>}, {pipeline_mode = #tpu.pipeline_mode<synchronous>, transform_indices = @transform_5, window_bounds = array<i64: 16, 1>}, {pipeline_mode = #tpu.pipeline_mode<synchronous>, transform_indices = @transform_6, window_bounds = array<i64: 216, 16>}, {pipeline_mode = #tpu.pipeline_mode<synchronous>, transform_indices = @transform_7, window_bounds = array<i64: 24, 1>}, {pipeline_mode = #tpu.pipeline_mode<synchronous>, transform_indices = @transform_8, window_bounds = array<i64: 216, 24>}, {pipeline_mode = #tpu.pipeline_mode<synchronous>, transform_indices = @transform_9, window_bounds = array<i64: 24, 1>}, {pipeline_mode = #tpu.pipeline_mode<synchronous>, transform_indices = @transform_10, window_bounds = array<i64: 72, 24>}, {pipeline_mode = #tpu.pipeline_mode<synchronous>, transform_indices = @transform_11, window_bounds = array<i64: 8, 1>}, {transform_indices = @transform_12, window_bounds = array<i64: 1, 8, 384>}]} {
    %cst = arith.constant 0.000000e+00 : f32
    %0 = vector.broadcast %cst : f32 to vector<8x128xf32>
    %c0 = arith.constant 0 : index
    %c0_0 = arith.constant 0 : index
    %1 = vector.load %arg14[%c0, %c0_0] : memref<8x640xf32, #tpu.memory_space<vmem>>, vector<8x128xf32>
    tpu.vector_store %arg14[%c0, %c0_0], %0 {strides = array<i32>} : memref<8x640xf32, #tpu.memory_space<vmem>>, vector<8x128xf32>,
    %cst_1 = arith.constant 0.000000e+00 : f32
    %2 = vector.broadcast %cst_1 : f32 to vector<8x128xf32>
    %c0_2 = arith.constant 0 : index
    %c512 = arith.constant 512 : index
    %3 = vector.load %arg14[%c0_2, %c512] : memref<8x640xf32, #tpu.memory_space<vmem>>, vector<8x128xf32>
    tpu.vector_store %arg14[%c0_2, %c512], %2 {strides = array<i32>} : memref<8x640xf32, #tpu.memory_space<vmem>>, vector<8x128xf32>,
    %cst_3 = arith.constant 0.000000e+00 : f32
    %4 = vector.broadcast %cst_3 : f32 to vector<16x128xf32>
    %c0_4 = arith.constant 0 : index
    %c0_5 = arith.constant 0 : index
    %5 = vector.load %arg15[%c0_4, %c0_5] : memref<16x640xf32, #tpu.memory_space<vmem>>, vector<16x128xf32>
    tpu.vector_store %arg15[%c0_4, %c0_5], %4 {strides = array<i32>} : memref<16x640xf32, #tpu.memory_space<vmem>>, vector<16x128xf32>,
    %cst_6 = arith.constant 0.000000e+00 : f32
    %6 = vector.broadcast %cst_6 : f32 to vector<16x128xf32>
    %c0_7 = arith.constant 0 : index
    %c512_8 = arith.constant 512 : index
    %7 = vector.load %arg15[%c0_7, %c512_8] : memref<16x640xf32, #tpu.memory_space<vmem>>, vector<16x128xf32>
    tpu.vector_store %arg15[%c0_7, %c512_8], %6 {strides = array<i32>} : memref<16x640xf32, #tpu.memory_space<vmem>>, vector<16x128xf32>,
    %cst_9 = arith.constant 0.000000e+00 : f32
    %8 = vector.broadcast %cst_9 : f32 to vector<24x128xf32>
    %c0_10 = arith.constant 0 : index
    %c0_11 = arith.constant 0 : index
    %9 = vector.load %arg16[%c0_10, %c0_11] : memref<24x640xf32, #tpu.memory_space<vmem>>, vector<24x128xf32>
    tpu.vector_store %arg16[%c0_10, %c0_11], %8 {strides = array<i32>} : memref<24x640xf32, #tpu.memory_space<vmem>>, vector<24x128xf32>,
    %cst_12 = arith.constant 0.000000e+00 : f32
    %10 = vector.broadcast %cst_12 : f32 to vector<24x128xf32>
    %c0_13 = arith.constant 0 : index
    %c512_14 = arith.constant 512 : index
    %11 = vector.load %arg16[%c0_13, %c512_14] : memref<24x640xf32, #tpu.memory_space<vmem>>, vector<24x128xf32>
    tpu.vector_store %arg16[%c0_13, %c512_14], %10 {strides = array<i32>} : memref<24x640xf32, #tpu.memory_space<vmem>>, vector<24x128xf32>,
    %cst_15 = arith.constant 0.000000e+00 : f32
    %12 = vector.broadcast %cst_15 : f32 to vector<24x128xf32>
    %c0_16 = arith.constant 0 : index
    %c0_17 = arith.constant 0 : index
    %13 = vector.load %arg17[%c0_16, %c0_17] : memref<24x640xf32, #tpu.memory_space<vmem>>, vector<24x128xf32>
    tpu.vector_store %arg17[%c0_16, %c0_17], %12 {strides = array<i32>} : memref<24x640xf32, #tpu.memory_space<vmem>>, vector<24x128xf32>,
    %cst_18 = arith.constant 0.000000e+00 : f32
    %14 = vector.broadcast %cst_18 : f32 to vector<24x128xf32>
    %c0_19 = arith.constant 0 : index
    %c512_20 = arith.constant 512 : index
    %15 = vector.load %arg17[%c0_19, %c512_20] : memref<24x640xf32, #tpu.memory_space<vmem>>, vector<24x128xf32>
    tpu.vector_store %arg17[%c0_19, %c512_20], %14 {strides = array<i32>} : memref<24x640xf32, #tpu.memory_space<vmem>>, vector<24x128xf32>,
    %c0_21 = arith.constant 0 : index
    %c0_22 = arith.constant 0 : index
    %16 = vector.load %arg2[%c0_21, %c0_22] : memref<1x384xf32, #tpu.memory_space<vmem>>, vector<1x384xf32>
    %cst_23 = arith.constant 0.000000e+00 : f32
    %17 = vector.broadcast %cst_23 : f32 to vector<1x384xf32>
    %18 = arith.cmpf one, %16, %17 : vector<1x384xf32>
    %c0_24 = arith.constant 0 : index
    %c0_25 = arith.constant 0 : index
    %19 = vector.load %arg3[%c0_24, %c0_25] : memref<72x8xf32, #tpu.memory_space<vmem>>, vector<8x8xf32>
    %c0_26 = arith.constant 0 : index
    %c0_27 = arith.constant 0 : index
    %c109 = arith.constant 109 : index
    %20 = vector.load %arg1[%c0_26, %c0_27, %c109] : memref<1x8x640xf32, #tpu.memory_space<vmem>>, vector<1x8x384xf32>
    %21 = vector.shape_cast %20 : vector<1x8x384xf32> to vector<8x384xf32>
    %cst_28 = arith.constant dense<0.000000e+00> : vector<8x384xf32>
    %22 = tpu.matmul %19, %21, %cst_28 {dimension_numbers = #tpu.dot_dimension_numbers<[1], [0], [0], [1], [0, 0, 1, 1], [], []>} : vector<8x8xf32>, vector<8x384xf32>, vector<8x384xf32> -> vector<8x384xf32>
    %c8 = arith.constant 8 : index
    %c0_29 = arith.constant 0 : index
    %23 = vector.load %arg3[%c8, %c0_29] : memref<72x8xf32, #tpu.memory_space<vmem>>, vector<8x8xf32>
    %c0_30 = arith.constant 0 : index
    %c0_31 = arith.constant 0 : index
    %c110 = arith.constant 110 : index
    %24 = vector.load %arg1[%c0_30, %c0_31, %c110] : memref<1x8x640xf32, #tpu.memory_space<vmem>>, vector<1x8x384xf32>
    %25 = vector.shape_cast %24 : vector<1x8x384xf32> to vector<8x384xf32>
    %cst_32 = arith.constant dense<0.000000e+00> : vector<8x384xf32>
    %26 = tpu.matmul %23, %25, %cst_32 {dimension_numbers = #tpu.dot_dimension_numbers<[1], [0], [0], [1], [0, 0, 1, 1], [], []>} : vector<8x8xf32>, vector<8x384xf32>, vector<8x384xf32> -> vector<8x384xf32>
    %27 = arith.addf %22, %26 : vector<8x384xf32>
    %c16 = arith.constant 16 : index
    %c0_33 = arith.constant 0 : index
    %28 = vector.load %arg3[%c16, %c0_33] : memref<72x8xf32, #tpu.memory_space<vmem>>, vector<8x8xf32>
    %c0_34 = arith.constant 0 : index
    %c0_35 = arith.constant 0 : index
    %c111 = arith.constant 111 : index
    %29 = vector.load %arg1[%c0_34, %c0_35, %c111] : memref<1x8x640xf32, #tpu.memory_space<vmem>>, vector<1x8x384xf32>
    %30 = vector.shape_cast %29 : vector<1x8x384xf32> to vector<8x384xf32>
    %cst_36 = arith.constant dense<0.000000e+00> : vector<8x384xf32>
    %31 = tpu.matmul %28, %30, %cst_36 {dimension_numbers = #tpu.dot_dimension_numbers<[1], [0], [0], [1], [0, 0, 1, 1], [], []>} : vector<8x8xf32>, vector<8x384xf32>, vector<8x384xf32> -> vector<8x384xf32>
    %32 = arith.addf %27, %31 : vector<8x384xf32>
    %c24 = arith.constant 24 : index
    %c0_37 = arith.constant 0 : index
    %33 = vector.load %arg3[%c24, %c0_37] : memref<72x8xf32, #tpu.memory_space<vmem>>, vector<8x8xf32>
    %c0_38 = arith.constant 0 : index
    %c0_39 = arith.constant 0 : index
    %c127 = arith.constant 127 : index
    %34 = vector.load %arg1[%c0_38, %c0_39, %c127] : memref<1x8x640xf32, #tpu.memory_space<vmem>>, vector<1x8x384xf32>
    %35 = vector.shape_cast %34 : vector<1x8x384xf32> to vector<8x384xf32>
    %cst_40 = arith.constant dense<0.000000e+00> : vector<8x384xf32>
    %36 = tpu.matmul %33, %35, %cst_40 {dimension_numbers = #tpu.dot_dimension_numbers<[1], [0], [0], [1], [0, 0, 1, 1], [], []>} : vector<8x8xf32>, vector<8x384xf32>, vector<8x384xf32> -> vector<8x384xf32>
    %37 = arith.addf %32, %36 : vector<8x384xf32>
    %c32 = arith.constant 32 : index
    %c0_41 = arith.constant 0 : index
    %38 = vector.load %arg3[%c32, %c0_41] : memref<72x8xf32, #tpu.memory_space<vmem>>, vector<8x8xf32>
    %c0_42 = arith.constant 0 : index
    %c0_43 = arith.constant 0 : index
    %c128 = arith.constant 128 : index
    %39 = vector.load %arg1[%c0_42, %c0_43, %c128] : memref<1x8x640xf32, #tpu.memory_space<vmem>>, vector<1x8x384xf32>
    %40 = vector.shape_cast %39 : vector<1x8x384xf32> to vector<8x384xf32>
    %cst_44 = arith.constant dense<0.000000e+00> : vector<8x384xf32>
    %41 = tpu.matmul %38, %40, %cst_44 {dimension_numbers = #tpu.dot_dimension_numbers<[1], [0], [0], [1], [0, 0, 1, 1], [], []>} : vector<8x8xf32>, vector<8x384xf32>, vector<8x384xf32> -> vector<8x384xf32>
    %42 = arith.addf %37, %41 : vector<8x384xf32>
    %c40 = arith.constant 40 : index
    %c0_45 = arith.constant 0 : index
    %43 = vector.load %arg3[%c40, %c0_45] : memref<72x8xf32, #tpu.memory_space<vmem>>, vector<8x8xf32>
    %c0_46 = arith.constant 0 : index
    %c0_47 = arith.constant 0 : index
    %c129 = arith.constant 129 : index
    %44 = vector.load %arg1[%c0_46, %c0_47, %c129] : memref<1x8x640xf32, #tpu.memory_space<vmem>>, vector<1x8x384xf32>
    %45 = vector.shape_cast %44 : vector<1x8x384xf32> to vector<8x384xf32>
    %cst_48 = arith.constant dense<0.000000e+00> : vector<8x384xf32>
    %46 = tpu.matmul %43, %45, %cst_48 {dimension_numbers = #tpu.dot_dimension_numbers<[1], [0], [0], [1], [0, 0, 1, 1], [], []>} : vector<8x8xf32>, vector<8x384xf32>, vector<8x384xf32> -> vector<8x384xf32>
    %47 = arith.addf %42, %46 : vector<8x384xf32>
    %c48 = arith.constant 48 : index
    %c0_49 = arith.constant 0 : index
    %48 = vector.load %arg3[%c48, %c0_49] : memref<72x8xf32, #tpu.memory_space<vmem>>, vector<8x8xf32>
    %c0_50 = arith.constant 0 : index
    %c0_51 = arith.constant 0 : index
    %c145 = arith.constant 145 : index
    %49 = vector.load %arg1[%c0_50, %c0_51, %c145] : memref<1x8x640xf32, #tpu.memory_space<vmem>>, vector<1x8x384xf32>
    %50 = vector.shape_cast %49 : vector<1x8x384xf32> to vector<8x384xf32>
    %cst_52 = arith.constant dense<0.000000e+00> : vector<8x384xf32>
    %51 = tpu.matmul %48, %50, %cst_52 {dimension_numbers = #tpu.dot_dimension_numbers<[1], [0], [0], [1], [0, 0, 1, 1], [], []>} : vector<8x8xf32>, vector<8x384xf32>, vector<8x384xf32> -> vector<8x384xf32>
    %52 = arith.addf %47, %51 : vector<8x384xf32>
    %c56 = arith.constant 56 : index
    %c0_53 = arith.constant 0 : index
    %53 = vector.load %arg3[%c56, %c0_53] : memref<72x8xf32, #tpu.memory_space<vmem>>, vector<8x8xf32>
    %c0_54 = arith.constant 0 : index
    %c0_55 = arith.constant 0 : index
    %c146 = arith.constant 146 : index
    %54 = vector.load %arg1[%c0_54, %c0_55, %c146] : memref<1x8x640xf32, #tpu.memory_space<vmem>>, vector<1x8x384xf32>
    %55 = vector.shape_cast %54 : vector<1x8x384xf32> to vector<8x384xf32>
    %cst_56 = arith.constant dense<0.000000e+00> : vector<8x384xf32>
    %56 = tpu.matmul %53, %55, %cst_56 {dimension_numbers = #tpu.dot_dimension_numbers<[1], [0], [0], [1], [0, 0, 1, 1], [], []>} : vector<8x8xf32>, vector<8x384xf32>, vector<8x384xf32> -> vector<8x384xf32>
    %57 = arith.addf %52, %56 : vector<8x384xf32>
    %c64 = arith.constant 64 : index
    %c0_57 = arith.constant 0 : index
    %58 = vector.load %arg3[%c64, %c0_57] : memref<72x8xf32, #tpu.memory_space<vmem>>, vector<8x8xf32>
    %c0_58 = arith.constant 0 : index
    %c0_59 = arith.constant 0 : index
    %c147 = arith.constant 147 : index
    %59 = vector.load %arg1[%c0_58, %c0_59, %c147] : memref<1x8x640xf32, #tpu.memory_space<vmem>>, vector<1x8x384xf32>
    %60 = vector.shape_cast %59 : vector<1x8x384xf32> to vector<8x384xf32>
    %cst_60 = arith.constant dense<0.000000e+00> : vector<8x384xf32>
    %61 = tpu.matmul %58, %60, %cst_60 {dimension_numbers = #tpu.dot_dimension_numbers<[1], [0], [0], [1], [0, 0, 1, 1], [], []>} : vector<8x8xf32>, vector<8x384xf32>, vector<8x384xf32> -> vector<8x384xf32>
    %62 = arith.addf %57, %61 : vector<8x384xf32>
    %c0_61 = arith.constant 0 : index
    %c0_62 = arith.constant 0 : index
    %63 = vector.load %arg4[%c0_61, %c0_62] : memref<8x1xf32, #tpu.memory_space<vmem>>, vector<8x1xf32>
    %64 = vector.broadcast %63 : vector<8x1xf32> to vector<8x384xf32>
    %65 = arith.addf %62, %64 : vector<8x384xf32>
    %cst_63 = arith.constant 0.000000e+00 : f32
    %66 = vector.broadcast %cst_63 : f32 to vector<8x384xf32>
    %67 = arith.maximumf %65, %66 : vector<8x384xf32>
    %cst_64 = arith.constant 0.000000e+00 : f32
    %68 = vector.shape_cast %18 : vector<1x384xi1> to vector<1x384xi1>
    %69 = vector.broadcast %68 : vector<1x384xi1> to vector<8x384xi1>
    %70 = vector.broadcast %cst_64 : f32 to vector<8x384xf32>
    %71 = arith.select %69, %67, %70 : vector<8x384xi1>, vector<8x384xf32>
    %c0_65 = arith.constant 0 : index
    %c128_66 = arith.constant 128 : index
    %72 = vector.load %arg14[%c0_65, %c128_66] : memref<8x640xf32, #tpu.memory_space<vmem>>, vector<8x384xf32>
    tpu.vector_store %arg14[%c0_65, %c128_66], %71 {strides = array<i32>} : memref<8x640xf32, #tpu.memory_space<vmem>>, vector<8x384xf32>,
    %c0_67 = arith.constant 0 : index
    %c0_68 = arith.constant 0 : index
    %73 = vector.load %arg5[%c0_67, %c0_68] : memref<144x8xf32, #tpu.memory_space<vmem>>, vector<16x8xf32>
    %c0_69 = arith.constant 0 : index
    %c109_70 = arith.constant 109 : index
    %74 = vector.load %arg14[%c0_69, %c109_70] : memref<8x640xf32, #tpu.memory_space<vmem>>, vector<8x384xf32>
    %cst_71 = arith.constant dense<0.000000e+00> : vector<16x384xf32>
    %75 = tpu.matmul %73, %74, %cst_71 {dimension_numbers = #tpu.dot_dimension_numbers<[1], [0], [0], [1], [0, 0, 1, 1], [], []>} : vector<16x8xf32>, vector<8x384xf32>, vector<16x384xf32> -> vector<16x384xf32>
    %c16_72 = arith.constant 16 : index
    %c0_73 = arith.constant 0 : index
    %76 = vector.load %arg5[%c16_72, %c0_73] : memref<144x8xf32, #tpu.memory_space<vmem>>, vector<16x8xf32>
    %c0_74 = arith.constant 0 : index
    %c110_75 = arith.constant 110 : index
    %77 = vector.load %arg14[%c0_74, %c110_75] : memref<8x640xf32, #tpu.memory_space<vmem>>, vector<8x384xf32>
    %cst_76 = arith.constant dense<0.000000e+00> : vector<16x384xf32>
    %78 = tpu.matmul %76, %77, %cst_76 {dimension_numbers = #tpu.dot_dimension_numbers<[1], [0], [0], [1], [0, 0, 1, 1], [], []>} : vector<16x8xf32>, vector<8x384xf32>, vector<16x384xf32> -> vector<16x384xf32>
    %79 = arith.addf %75, %78 : vector<16x384xf32>
    %c32_77 = arith.constant 32 : index
    %c0_78 = arith.constant 0 : index
    %80 = vector.load %arg5[%c32_77, %c0_78] : memref<144x8xf32, #tpu.memory_space<vmem>>, vector<16x8xf32>
    %c0_79 = arith.constant 0 : index
    %c111_80 = arith.constant 111 : index
    %81 = vector.load %arg14[%c0_79, %c111_80] : memref<8x640xf32, #tpu.memory_space<vmem>>, vector<8x384xf32>
    %cst_81 = arith.constant dense<0.000000e+00> : vector<16x384xf32>
    %82 = tpu.matmul %80, %81, %cst_81 {dimension_numbers = #tpu.dot_dimension_numbers<[1], [0], [0], [1], [0, 0, 1, 1], [], []>} : vector<16x8xf32>, vector<8x384xf32>, vector<16x384xf32> -> vector<16x384xf32>
    %83 = arith.addf %79, %82 : vector<16x384xf32>
    %c48_82 = arith.constant 48 : index
    %c0_83 = arith.constant 0 : index
    %84 = vector.load %arg5[%c48_82, %c0_83] : memref<144x8xf32, #tpu.memory_space<vmem>>, vector<16x8xf32>
    %c0_84 = arith.constant 0 : index
    %c127_85 = arith.constant 127 : index
    %85 = vector.load %arg14[%c0_84, %c127_85] : memref<8x640xf32, #tpu.memory_space<vmem>>, vector<8x384xf32>
    %cst_86 = arith.constant dense<0.000000e+00> : vector<16x384xf32>
    %86 = tpu.matmul %84, %85, %cst_86 {dimension_numbers = #tpu.dot_dimension_numbers<[1], [0], [0], [1], [0, 0, 1, 1], [], []>} : vector<16x8xf32>, vector<8x384xf32>, vector<16x384xf32> -> vector<16x384xf32>
    %87 = arith.addf %83, %86 : vector<16x384xf32>
    %c64_87 = arith.constant 64 : index
    %c0_88 = arith.constant 0 : index
    %88 = vector.load %arg5[%c64_87, %c0_88] : memref<144x8xf32, #tpu.memory_space<vmem>>, vector<16x8xf32>
    %c0_89 = arith.constant 0 : index
    %c128_90 = arith.constant 128 : index
    %89 = vector.load %arg14[%c0_89, %c128_90] : memref<8x640xf32, #tpu.memory_space<vmem>>, vector<8x384xf32>
    %cst_91 = arith.constant dense<0.000000e+00> : vector<16x384xf32>
    %90 = tpu.matmul %88, %89, %cst_91 {dimension_numbers = #tpu.dot_dimension_numbers<[1], [0], [0], [1], [0, 0, 1, 1], [], []>} : vector<16x8xf32>, vector<8x384xf32>, vector<16x384xf32> -> vector<16x384xf32>
    %91 = arith.addf %87, %90 : vector<16x384xf32>
    %c80 = arith.constant 80 : index
    %c0_92 = arith.constant 0 : index
    %92 = vector.load %arg5[%c80, %c0_92] : memref<144x8xf32, #tpu.memory_space<vmem>>, vector<16x8xf32>
    %c0_93 = arith.constant 0 : index
    %c129_94 = arith.constant 129 : index
    %93 = vector.load %arg14[%c0_93, %c129_94] : memref<8x640xf32, #tpu.memory_space<vmem>>, vector<8x384xf32>
    %cst_95 = arith.constant dense<0.000000e+00> : vector<16x384xf32>
    %94 = tpu.matmul %92, %93, %cst_95 {dimension_numbers = #tpu.dot_dimension_numbers<[1], [0], [0], [1], [0, 0, 1, 1], [], []>} : vector<16x8xf32>, vector<8x384xf32>, vector<16x384xf32> -> vector<16x384xf32>
    %95 = arith.addf %91, %94 : vector<16x384xf32>
    %c96 = arith.constant 96 : index
    %c0_96 = arith.constant 0 : index
    %96 = vector.load %arg5[%c96, %c0_96] : memref<144x8xf32, #tpu.memory_space<vmem>>, vector<16x8xf32>
    %c0_97 = arith.constant 0 : index
    %c145_98 = arith.constant 145 : index
    %97 = vector.load %arg14[%c0_97, %c145_98] : memref<8x640xf32, #tpu.memory_space<vmem>>, vector<8x384xf32>
    %cst_99 = arith.constant dense<0.000000e+00> : vector<16x384xf32>
    %98 = tpu.matmul %96, %97, %cst_99 {dimension_numbers = #tpu.dot_dimension_numbers<[1], [0], [0], [1], [0, 0, 1, 1], [], []>} : vector<16x8xf32>, vector<8x384xf32>, vector<16x384xf32> -> vector<16x384xf32>
    %99 = arith.addf %95, %98 : vector<16x384xf32>
    %c112 = arith.constant 112 : index
    %c0_100 = arith.constant 0 : index
    %100 = vector.load %arg5[%c112, %c0_100] : memref<144x8xf32, #tpu.memory_space<vmem>>, vector<16x8xf32>
    %c0_101 = arith.constant 0 : index
    %c146_102 = arith.constant 146 : index
    %101 = vector.load %arg14[%c0_101, %c146_102] : memref<8x640xf32, #tpu.memory_space<vmem>>, vector<8x384xf32>
    %cst_103 = arith.constant dense<0.000000e+00> : vector<16x384xf32>
    %102 = tpu.matmul %100, %101, %cst_103 {dimension_numbers = #tpu.dot_dimension_numbers<[1], [0], [0], [1], [0, 0, 1, 1], [], []>} : vector<16x8xf32>, vector<8x384xf32>, vector<16x384xf32> -> vector<16x384xf32>
    %103 = arith.addf %99, %102 : vector<16x384xf32>
    %c128_104 = arith.constant 128 : index
    %c0_105 = arith.constant 0 : index
    %104 = vector.load %arg5[%c128_104, %c0_105] : memref<144x8xf32, #tpu.memory_space<vmem>>, vector<16x8xf32>
    %c0_106 = arith.constant 0 : index
    %c147_107 = arith.constant 147 : index
    %105 = vector.load %arg14[%c0_106, %c147_107] : memref<8x640xf32, #tpu.memory_space<vmem>>, vector<8x384xf32>
    %cst_108 = arith.constant dense<0.000000e+00> : vector<16x384xf32>
    %106 = tpu.matmul %104, %105, %cst_108 {dimension_numbers = #tpu.dot_dimension_numbers<[1], [0], [0], [1], [0, 0, 1, 1], [], []>} : vector<16x8xf32>, vector<8x384xf32>, vector<16x384xf32> -> vector<16x384xf32>
    %107 = arith.addf %103, %106 : vector<16x384xf32>
    %c0_109 = arith.constant 0 : index
    %c0_110 = arith.constant 0 : index
    %108 = vector.load %arg6[%c0_109, %c0_110] : memref<16x1xf32, #tpu.memory_space<vmem>>, vector<16x1xf32>
    %109 = vector.broadcast %108 : vector<16x1xf32> to vector<16x384xf32>
    %110 = arith.addf %107, %109 : vector<16x384xf32>
    %cst_111 = arith.constant 0.000000e+00 : f32
    %111 = vector.broadcast %cst_111 : f32 to vector<16x384xf32>
    %112 = arith.maximumf %110, %111 : vector<16x384xf32>
    %cst_112 = arith.constant 0.000000e+00 : f32
    %113 = vector.shape_cast %18 : vector<1x384xi1> to vector<1x384xi1>
    %114 = vector.broadcast %113 : vector<1x384xi1> to vector<16x384xi1>
    %115 = vector.broadcast %cst_112 : f32 to vector<16x384xf32>
    %116 = arith.select %114, %112, %115 : vector<16x384xi1>, vector<16x384xf32>
    %c0_113 = arith.constant 0 : index
    %c128_114 = arith.constant 128 : index
    %117 = vector.load %arg15[%c0_113, %c128_114] : memref<16x640xf32, #tpu.memory_space<vmem>>, vector<16x384xf32>
    tpu.vector_store %arg15[%c0_113, %c128_114], %116 {strides = array<i32>} : memref<16x640xf32, #tpu.memory_space<vmem>>, vector<16x384xf32>,
    %c0_115 = arith.constant 0 : index
    %c0_116 = arith.constant 0 : index
    %118 = vector.load %arg7[%c0_115, %c0_116] : memref<216x16xf32, #tpu.memory_space<vmem>>, vector<24x16xf32>
    %c0_117 = arith.constant 0 : index
    %c109_118 = arith.constant 109 : index
    %119 = vector.load %arg15[%c0_117, %c109_118] : memref<16x640xf32, #tpu.memory_space<vmem>>, vector<16x384xf32>
    %cst_119 = arith.constant dense<0.000000e+00> : vector<24x384xf32>
    %120 = tpu.matmul %118, %119, %cst_119 {dimension_numbers = #tpu.dot_dimension_numbers<[1], [0], [0], [1], [0, 0, 1, 1], [], []>} : vector<24x16xf32>, vector<16x384xf32>, vector<24x384xf32> -> vector<24x384xf32>
    %c24_120 = arith.constant 24 : index
    %c0_121 = arith.constant 0 : index
    %121 = vector.load %arg7[%c24_120, %c0_121] : memref<216x16xf32, #tpu.memory_space<vmem>>, vector<24x16xf32>
    %c0_122 = arith.constant 0 : index
    %c110_123 = arith.constant 110 : index
    %122 = vector.load %arg15[%c0_122, %c110_123] : memref<16x640xf32, #tpu.memory_space<vmem>>, vector<16x384xf32>
    %cst_124 = arith.constant dense<0.000000e+00> : vector<24x384xf32>
    %123 = tpu.matmul %121, %122, %cst_124 {dimension_numbers = #tpu.dot_dimension_numbers<[1], [0], [0], [1], [0, 0, 1, 1], [], []>} : vector<24x16xf32>, vector<16x384xf32>, vector<24x384xf32> -> vector<24x384xf32>
    %124 = arith.addf %120, %123 : vector<24x384xf32>
    %c48_125 = arith.constant 48 : index
    %c0_126 = arith.constant 0 : index
    %125 = vector.load %arg7[%c48_125, %c0_126] : memref<216x16xf32, #tpu.memory_space<vmem>>, vector<24x16xf32>
    %c0_127 = arith.constant 0 : index
    %c111_128 = arith.constant 111 : index
    %126 = vector.load %arg15[%c0_127, %c111_128] : memref<16x640xf32, #tpu.memory_space<vmem>>, vector<16x384xf32>
    %cst_129 = arith.constant dense<0.000000e+00> : vector<24x384xf32>
    %127 = tpu.matmul %125, %126, %cst_129 {dimension_numbers = #tpu.dot_dimension_numbers<[1], [0], [0], [1], [0, 0, 1, 1], [], []>} : vector<24x16xf32>, vector<16x384xf32>, vector<24x384xf32> -> vector<24x384xf32>
    %128 = arith.addf %124, %127 : vector<24x384xf32>
    %c72 = arith.constant 72 : index
    %c0_130 = arith.constant 0 : index
    %129 = vector.load %arg7[%c72, %c0_130] : memref<216x16xf32, #tpu.memory_space<vmem>>, vector<24x16xf32>
    %c0_131 = arith.constant 0 : index
    %c127_132 = arith.constant 127 : index
    %130 = vector.load %arg15[%c0_131, %c127_132] : memref<16x640xf32, #tpu.memory_space<vmem>>, vector<16x384xf32>
    %cst_133 = arith.constant dense<0.000000e+00> : vector<24x384xf32>
    %131 = tpu.matmul %129, %130, %cst_133 {dimension_numbers = #tpu.dot_dimension_numbers<[1], [0], [0], [1], [0, 0, 1, 1], [], []>} : vector<24x16xf32>, vector<16x384xf32>, vector<24x384xf32> -> vector<24x384xf32>
    %132 = arith.addf %128, %131 : vector<24x384xf32>
    %c96_134 = arith.constant 96 : index
    %c0_135 = arith.constant 0 : index
    %133 = vector.load %arg7[%c96_134, %c0_135] : memref<216x16xf32, #tpu.memory_space<vmem>>, vector<24x16xf32>
    %c0_136 = arith.constant 0 : index
    %c128_137 = arith.constant 128 : index
    %134 = vector.load %arg15[%c0_136, %c128_137] : memref<16x640xf32, #tpu.memory_space<vmem>>, vector<16x384xf32>
    %cst_138 = arith.constant dense<0.000000e+00> : vector<24x384xf32>
    %135 = tpu.matmul %133, %134, %cst_138 {dimension_numbers = #tpu.dot_dimension_numbers<[1], [0], [0], [1], [0, 0, 1, 1], [], []>} : vector<24x16xf32>, vector<16x384xf32>, vector<24x384xf32> -> vector<24x384xf32>
    %136 = arith.addf %132, %135 : vector<24x384xf32>
    %c120 = arith.constant 120 : index
    %c0_139 = arith.constant 0 : index
    %137 = vector.load %arg7[%c120, %c0_139] : memref<216x16xf32, #tpu.memory_space<vmem>>, vector<24x16xf32>
    %c0_140 = arith.constant 0 : index
    %c129_141 = arith.constant 129 : index
    %138 = vector.load %arg15[%c0_140, %c129_141] : memref<16x640xf32, #tpu.memory_space<vmem>>, vector<16x384xf32>
    %cst_142 = arith.constant dense<0.000000e+00> : vector<24x384xf32>
    %139 = tpu.matmul %137, %138, %cst_142 {dimension_numbers = #tpu.dot_dimension_numbers<[1], [0], [0], [1], [0, 0, 1, 1], [], []>} : vector<24x16xf32>, vector<16x384xf32>, vector<24x384xf32> -> vector<24x384xf32>
    %140 = arith.addf %136, %139 : vector<24x384xf32>
    %c144 = arith.constant 144 : index
    %c0_143 = arith.constant 0 : index
    %141 = vector.load %arg7[%c144, %c0_143] : memref<216x16xf32, #tpu.memory_space<vmem>>, vector<24x16xf32>
    %c0_144 = arith.constant 0 : index
    %c145_145 = arith.constant 145 : index
    %142 = vector.load %arg15[%c0_144, %c145_145] : memref<16x640xf32, #tpu.memory_space<vmem>>, vector<16x384xf32>
    %cst_146 = arith.constant dense<0.000000e+00> : vector<24x384xf32>
    %143 = tpu.matmul %141, %142, %cst_146 {dimension_numbers = #tpu.dot_dimension_numbers<[1], [0], [0], [1], [0, 0, 1, 1], [], []>} : vector<24x16xf32>, vector<16x384xf32>, vector<24x384xf32> -> vector<24x384xf32>
    %144 = arith.addf %140, %143 : vector<24x384xf32>
    %c168 = arith.constant 168 : index
    %c0_147 = arith.constant 0 : index
    %145 = vector.load %arg7[%c168, %c0_147] : memref<216x16xf32, #tpu.memory_space<vmem>>, vector<24x16xf32>
    %c0_148 = arith.constant 0 : index
    %c146_149 = arith.constant 146 : index
    %146 = vector.load %arg15[%c0_148, %c146_149] : memref<16x640xf32, #tpu.memory_space<vmem>>, vector<16x384xf32>
    %cst_150 = arith.constant dense<0.000000e+00> : vector<24x384xf32>
    %147 = tpu.matmul %145, %146, %cst_150 {dimension_numbers = #tpu.dot_dimension_numbers<[1], [0], [0], [1], [0, 0, 1, 1], [], []>} : vector<24x16xf32>, vector<16x384xf32>, vector<24x384xf32> -> vector<24x384xf32>
    %148 = arith.addf %144, %147 : vector<24x384xf32>
    %c192 = arith.constant 192 : index
    %c0_151 = arith.constant 0 : index
    %149 = vector.load %arg7[%c192, %c0_151] : memref<216x16xf32, #tpu.memory_space<vmem>>, vector<24x16xf32>
    %c0_152 = arith.constant 0 : index
    %c147_153 = arith.constant 147 : index
    %150 = vector.load %arg15[%c0_152, %c147_153] : memref<16x640xf32, #tpu.memory_space<vmem>>, vector<16x384xf32>
    %cst_154 = arith.constant dense<0.000000e+00> : vector<24x384xf32>
    %151 = tpu.matmul %149, %150, %cst_154 {dimension_numbers = #tpu.dot_dimension_numbers<[1], [0], [0], [1], [0, 0, 1, 1], [], []>} : vector<24x16xf32>, vector<16x384xf32>, vector<24x384xf32> -> vector<24x384xf32>
    %152 = arith.addf %148, %151 : vector<24x384xf32>
    %c0_155 = arith.constant 0 : index
    %c0_156 = arith.constant 0 : index
    %153 = vector.load %arg8[%c0_155, %c0_156] : memref<24x1xf32, #tpu.memory_space<vmem>>, vector<24x1xf32>
    %154 = vector.broadcast %153 : vector<24x1xf32> to vector<24x384xf32>
    %155 = arith.addf %152, %154 : vector<24x384xf32>
    %cst_157 = arith.constant 0.000000e+00 : f32
    %156 = vector.broadcast %cst_157 : f32 to vector<24x384xf32>
    %157 = arith.maximumf %155, %156 : vector<24x384xf32>
    %cst_158 = arith.constant 0.000000e+00 : f32
    %158 = vector.shape_cast %18 : vector<1x384xi1> to vector<1x384xi1>
    %159 = vector.broadcast %158 : vector<1x384xi1> to vector<24x384xi1>
    %160 = vector.broadcast %cst_158 : f32 to vector<24x384xf32>
    %161 = arith.select %159, %157, %160 : vector<24x384xi1>, vector<24x384xf32>
    %c0_159 = arith.constant 0 : index
    %c128_160 = arith.constant 128 : index
    %162 = vector.load %arg16[%c0_159, %c128_160] : memref<24x640xf32, #tpu.memory_space<vmem>>, vector<24x384xf32>
    tpu.vector_store %arg16[%c0_159, %c128_160], %161 {strides = array<i32>} : memref<24x640xf32, #tpu.memory_space<vmem>>, vector<24x384xf32>,
    %c0_161 = arith.constant 0 : index
    %c0_162 = arith.constant 0 : index
    %163 = vector.load %arg9[%c0_161, %c0_162] : memref<216x24xf32, #tpu.memory_space<vmem>>, vector<24x24xf32>
    %c0_163 = arith.constant 0 : index
    %c109_164 = arith.constant 109 : index
    %164 = vector.load %arg16[%c0_163, %c109_164] : memref<24x640xf32, #tpu.memory_space<vmem>>, vector<24x384xf32>
    %cst_165 = arith.constant dense<0.000000e+00> : vector<24x384xf32>
    %165 = tpu.matmul %163, %164, %cst_165 {dimension_numbers = #tpu.dot_dimension_numbers<[1], [0], [0], [1], [0, 0, 1, 1], [], []>} : vector<24x24xf32>, vector<24x384xf32>, vector<24x384xf32> -> vector<24x384xf32>
    %c24_166 = arith.constant 24 : index
    %c0_167 = arith.constant 0 : index
    %166 = vector.load %arg9[%c24_166, %c0_167] : memref<216x24xf32, #tpu.memory_space<vmem>>, vector<24x24xf32>
    %c0_168 = arith.constant 0 : index
    %c110_169 = arith.constant 110 : index
    %167 = vector.load %arg16[%c0_168, %c110_169] : memref<24x640xf32, #tpu.memory_space<vmem>>, vector<24x384xf32>
    %cst_170 = arith.constant dense<0.000000e+00> : vector<24x384xf32>
    %168 = tpu.matmul %166, %167, %cst_170 {dimension_numbers = #tpu.dot_dimension_numbers<[1], [0], [0], [1], [0, 0, 1, 1], [], []>} : vector<24x24xf32>, vector<24x384xf32>, vector<24x384xf32> -> vector<24x384xf32>
    %169 = arith.addf %165, %168 : vector<24x384xf32>
    %c48_171 = arith.constant 48 : index
    %c0_172 = arith.constant 0 : index
    %170 = vector.load %arg9[%c48_171, %c0_172] : memref<216x24xf32, #tpu.memory_space<vmem>>, vector<24x24xf32>
    %c0_173 = arith.constant 0 : index
    %c111_174 = arith.constant 111 : index
    %171 = vector.load %arg16[%c0_173, %c111_174] : memref<24x640xf32, #tpu.memory_space<vmem>>, vector<24x384xf32>
    %cst_175 = arith.constant dense<0.000000e+00> : vector<24x384xf32>
    %172 = tpu.matmul %170, %171, %cst_175 {dimension_numbers = #tpu.dot_dimension_numbers<[1], [0], [0], [1], [0, 0, 1, 1], [], []>} : vector<24x24xf32>, vector<24x384xf32>, vector<24x384xf32> -> vector<24x384xf32>
    %173 = arith.addf %169, %172 : vector<24x384xf32>
    %c72_176 = arith.constant 72 : index
    %c0_177 = arith.constant 0 : index
    %174 = vector.load %arg9[%c72_176, %c0_177] : memref<216x24xf32, #tpu.memory_space<vmem>>, vector<24x24xf32>
    %c0_178 = arith.constant 0 : index
    %c127_179 = arith.constant 127 : index
    %175 = vector.load %arg16[%c0_178, %c127_179] : memref<24x640xf32, #tpu.memory_space<vmem>>, vector<24x384xf32>
    %cst_180 = arith.constant dense<0.000000e+00> : vector<24x384xf32>
    %176 = tpu.matmul %174, %175, %cst_180 {dimension_numbers = #tpu.dot_dimension_numbers<[1], [0], [0], [1], [0, 0, 1, 1], [], []>} : vector<24x24xf32>, vector<24x384xf32>, vector<24x384xf32> -> vector<24x384xf32>
    %177 = arith.addf %173, %176 : vector<24x384xf32>
    %c96_181 = arith.constant 96 : index
    %c0_182 = arith.constant 0 : index
    %178 = vector.load %arg9[%c96_181, %c0_182] : memref<216x24xf32, #tpu.memory_space<vmem>>, vector<24x24xf32>
    %c0_183 = arith.constant 0 : index
    %c128_184 = arith.constant 128 : index
    %179 = vector.load %arg16[%c0_183, %c128_184] : memref<24x640xf32, #tpu.memory_space<vmem>>, vector<24x384xf32>
    %cst_185 = arith.constant dense<0.000000e+00> : vector<24x384xf32>
    %180 = tpu.matmul %178, %179, %cst_185 {dimension_numbers = #tpu.dot_dimension_numbers<[1], [0], [0], [1], [0, 0, 1, 1], [], []>} : vector<24x24xf32>, vector<24x384xf32>, vector<24x384xf32> -> vector<24x384xf32>
    %181 = arith.addf %177, %180 : vector<24x384xf32>
    %c120_186 = arith.constant 120 : index
    %c0_187 = arith.constant 0 : index
    %182 = vector.load %arg9[%c120_186, %c0_187] : memref<216x24xf32, #tpu.memory_space<vmem>>, vector<24x24xf32>
    %c0_188 = arith.constant 0 : index
    %c129_189 = arith.constant 129 : index
    %183 = vector.load %arg16[%c0_188, %c129_189] : memref<24x640xf32, #tpu.memory_space<vmem>>, vector<24x384xf32>
    %cst_190 = arith.constant dense<0.000000e+00> : vector<24x384xf32>
    %184 = tpu.matmul %182, %183, %cst_190 {dimension_numbers = #tpu.dot_dimension_numbers<[1], [0], [0], [1], [0, 0, 1, 1], [], []>} : vector<24x24xf32>, vector<24x384xf32>, vector<24x384xf32> -> vector<24x384xf32>
    %185 = arith.addf %181, %184 : vector<24x384xf32>
    %c144_191 = arith.constant 144 : index
    %c0_192 = arith.constant 0 : index
    %186 = vector.load %arg9[%c144_191, %c0_192] : memref<216x24xf32, #tpu.memory_space<vmem>>, vector<24x24xf32>
    %c0_193 = arith.constant 0 : index
    %c145_194 = arith.constant 145 : index
    %187 = vector.load %arg16[%c0_193, %c145_194] : memref<24x640xf32, #tpu.memory_space<vmem>>, vector<24x384xf32>
    %cst_195 = arith.constant dense<0.000000e+00> : vector<24x384xf32>
    %188 = tpu.matmul %186, %187, %cst_195 {dimension_numbers = #tpu.dot_dimension_numbers<[1], [0], [0], [1], [0, 0, 1, 1], [], []>} : vector<24x24xf32>, vector<24x384xf32>, vector<24x384xf32> -> vector<24x384xf32>
    %189 = arith.addf %185, %188 : vector<24x384xf32>
    %c168_196 = arith.constant 168 : index
    %c0_197 = arith.constant 0 : index
    %190 = vector.load %arg9[%c168_196, %c0_197] : memref<216x24xf32, #tpu.memory_space<vmem>>, vector<24x24xf32>
    %c0_198 = arith.constant 0 : index
    %c146_199 = arith.constant 146 : index
    %191 = vector.load %arg16[%c0_198, %c146_199] : memref<24x640xf32, #tpu.memory_space<vmem>>, vector<24x384xf32>
    %cst_200 = arith.constant dense<0.000000e+00> : vector<24x384xf32>
    %192 = tpu.matmul %190, %191, %cst_200 {dimension_numbers = #tpu.dot_dimension_numbers<[1], [0], [0], [1], [0, 0, 1, 1], [], []>} : vector<24x24xf32>, vector<24x384xf32>, vector<24x384xf32> -> vector<24x384xf32>
    %193 = arith.addf %189, %192 : vector<24x384xf32>
    %c192_201 = arith.constant 192 : index
    %c0_202 = arith.constant 0 : index
    %194 = vector.load %arg9[%c192_201, %c0_202] : memref<216x24xf32, #tpu.memory_space<vmem>>, vector<24x24xf32>
    %c0_203 = arith.constant 0 : index
    %c147_204 = arith.constant 147 : index
    %195 = vector.load %arg16[%c0_203, %c147_204] : memref<24x640xf32, #tpu.memory_space<vmem>>, vector<24x384xf32>
    %cst_205 = arith.constant dense<0.000000e+00> : vector<24x384xf32>
    %196 = tpu.matmul %194, %195, %cst_205 {dimension_numbers = #tpu.dot_dimension_numbers<[1], [0], [0], [1], [0, 0, 1, 1], [], []>} : vector<24x24xf32>, vector<24x384xf32>, vector<24x384xf32> -> vector<24x384xf32>
    %197 = arith.addf %193, %196 : vector<24x384xf32>
    %c0_206 = arith.constant 0 : index
    %c0_207 = arith.constant 0 : index
    %198 = vector.load %arg10[%c0_206, %c0_207] : memref<24x1xf32, #tpu.memory_space<vmem>>, vector<24x1xf32>
    %199 = vector.broadcast %198 : vector<24x1xf32> to vector<24x384xf32>
    %200 = arith.addf %197, %199 : vector<24x384xf32>
    %cst_208 = arith.constant 0.000000e+00 : f32
    %201 = vector.broadcast %cst_208 : f32 to vector<24x384xf32>
    %202 = arith.maximumf %200, %201 : vector<24x384xf32>
    %cst_209 = arith.constant 0.000000e+00 : f32
    %203 = vector.shape_cast %18 : vector<1x384xi1> to vector<1x384xi1>
    %204 = vector.broadcast %203 : vector<1x384xi1> to vector<24x384xi1>
    %205 = vector.broadcast %cst_209 : f32 to vector<24x384xf32>
    %206 = arith.select %204, %202, %205 : vector<24x384xi1>, vector<24x384xf32>
    %c0_210 = arith.constant 0 : index
    %c128_211 = arith.constant 128 : index
    %207 = vector.load %arg17[%c0_210, %c128_211] : memref<24x640xf32, #tpu.memory_space<vmem>>, vector<24x384xf32>
    tpu.vector_store %arg17[%c0_210, %c128_211], %206 {strides = array<i32>} : memref<24x640xf32, #tpu.memory_space<vmem>>, vector<24x384xf32>,
    %c0_212 = arith.constant 0 : index
    %c0_213 = arith.constant 0 : index
    %208 = vector.load %arg11[%c0_212, %c0_213] : memref<72x24xf32, #tpu.memory_space<vmem>>, vector<8x24xf32>
    %c0_214 = arith.constant 0 : index
    %c109_215 = arith.constant 109 : index
    %209 = vector.load %arg17[%c0_214, %c109_215] : memref<24x640xf32, #tpu.memory_space<vmem>>, vector<24x384xf32>
    %cst_216 = arith.constant dense<0.000000e+00> : vector<8x384xf32>
    %210 = tpu.matmul %208, %209, %cst_216 {dimension_numbers = #tpu.dot_dimension_numbers<[1], [0], [0], [1], [0, 0, 1, 1], [], []>} : vector<8x24xf32>, vector<24x384xf32>, vector<8x384xf32> -> vector<8x384xf32>
    %c8_217 = arith.constant 8 : index
    %c0_218 = arith.constant 0 : index
    %211 = vector.load %arg11[%c8_217, %c0_218] : memref<72x24xf32, #tpu.memory_space<vmem>>, vector<8x24xf32>
    %c0_219 = arith.constant 0 : index
    %c110_220 = arith.constant 110 : index
    %212 = vector.load %arg17[%c0_219, %c110_220] : memref<24x640xf32, #tpu.memory_space<vmem>>, vector<24x384xf32>
    %cst_221 = arith.constant dense<0.000000e+00> : vector<8x384xf32>
    %213 = tpu.matmul %211, %212, %cst_221 {dimension_numbers = #tpu.dot_dimension_numbers<[1], [0], [0], [1], [0, 0, 1, 1], [], []>} : vector<8x24xf32>, vector<24x384xf32>, vector<8x384xf32> -> vector<8x384xf32>
    %214 = arith.addf %210, %213 : vector<8x384xf32>
    %c16_222 = arith.constant 16 : index
    %c0_223 = arith.constant 0 : index
    %215 = vector.load %arg11[%c16_222, %c0_223] : memref<72x24xf32, #tpu.memory_space<vmem>>, vector<8x24xf32>
    %c0_224 = arith.constant 0 : index
    %c111_225 = arith.constant 111 : index
    %216 = vector.load %arg17[%c0_224, %c111_225] : memref<24x640xf32, #tpu.memory_space<vmem>>, vector<24x384xf32>
    %cst_226 = arith.constant dense<0.000000e+00> : vector<8x384xf32>
    %217 = tpu.matmul %215, %216, %cst_226 {dimension_numbers = #tpu.dot_dimension_numbers<[1], [0], [0], [1], [0, 0, 1, 1], [], []>} : vector<8x24xf32>, vector<24x384xf32>, vector<8x384xf32> -> vector<8x384xf32>
    %218 = arith.addf %214, %217 : vector<8x384xf32>
    %c24_227 = arith.constant 24 : index
    %c0_228 = arith.constant 0 : index
    %219 = vector.load %arg11[%c24_227, %c0_228] : memref<72x24xf32, #tpu.memory_space<vmem>>, vector<8x24xf32>
    %c0_229 = arith.constant 0 : index
    %c127_230 = arith.constant 127 : index
    %220 = vector.load %arg17[%c0_229, %c127_230] : memref<24x640xf32, #tpu.memory_space<vmem>>, vector<24x384xf32>
    %cst_231 = arith.constant dense<0.000000e+00> : vector<8x384xf32>
    %221 = tpu.matmul %219, %220, %cst_231 {dimension_numbers = #tpu.dot_dimension_numbers<[1], [0], [0], [1], [0, 0, 1, 1], [], []>} : vector<8x24xf32>, vector<24x384xf32>, vector<8x384xf32> -> vector<8x384xf32>
    %222 = arith.addf %218, %221 : vector<8x384xf32>
    %c32_232 = arith.constant 32 : index
    %c0_233 = arith.constant 0 : index
    %223 = vector.load %arg11[%c32_232, %c0_233] : memref<72x24xf32, #tpu.memory_space<vmem>>, vector<8x24xf32>
    %c0_234 = arith.constant 0 : index
    %c128_235 = arith.constant 128 : index
    %224 = vector.load %arg17[%c0_234, %c128_235] : memref<24x640xf32, #tpu.memory_space<vmem>>, vector<24x384xf32>
    %cst_236 = arith.constant dense<0.000000e+00> : vector<8x384xf32>
    %225 = tpu.matmul %223, %224, %cst_236 {dimension_numbers = #tpu.dot_dimension_numbers<[1], [0], [0], [1], [0, 0, 1, 1], [], []>} : vector<8x24xf32>, vector<24x384xf32>, vector<8x384xf32> -> vector<8x384xf32>
    %226 = arith.addf %222, %225 : vector<8x384xf32>
    %c40_237 = arith.constant 40 : index
    %c0_238 = arith.constant 0 : index
    %227 = vector.load %arg11[%c40_237, %c0_238] : memref<72x24xf32, #tpu.memory_space<vmem>>, vector<8x24xf32>
    %c0_239 = arith.constant 0 : index
    %c129_240 = arith.constant 129 : index
    %228 = vector.load %arg17[%c0_239, %c129_240] : memref<24x640xf32, #tpu.memory_space<vmem>>, vector<24x384xf32>
    %cst_241 = arith.constant dense<0.000000e+00> : vector<8x384xf32>
    %229 = tpu.matmul %227, %228, %cst_241 {dimension_numbers = #tpu.dot_dimension_numbers<[1], [0], [0], [1], [0, 0, 1, 1], [], []>} : vector<8x24xf32>, vector<24x384xf32>, vector<8x384xf32> -> vector<8x384xf32>
    %230 = arith.addf %226, %229 : vector<8x384xf32>
    %c48_242 = arith.constant 48 : index
    %c0_243 = arith.constant 0 : index
    %231 = vector.load %arg11[%c48_242, %c0_243] : memref<72x24xf32, #tpu.memory_space<vmem>>, vector<8x24xf32>
    %c0_244 = arith.constant 0 : index
    %c145_245 = arith.constant 145 : index
    %232 = vector.load %arg17[%c0_244, %c145_245] : memref<24x640xf32, #tpu.memory_space<vmem>>, vector<24x384xf32>
    %cst_246 = arith.constant dense<0.000000e+00> : vector<8x384xf32>
    %233 = tpu.matmul %231, %232, %cst_246 {dimension_numbers = #tpu.dot_dimension_numbers<[1], [0], [0], [1], [0, 0, 1, 1], [], []>} : vector<8x24xf32>, vector<24x384xf32>, vector<8x384xf32> -> vector<8x384xf32>
    %234 = arith.addf %230, %233 : vector<8x384xf32>
    %c56_247 = arith.constant 56 : index
    %c0_248 = arith.constant 0 : index
    %235 = vector.load %arg11[%c56_247, %c0_248] : memref<72x24xf32, #tpu.memory_space<vmem>>, vector<8x24xf32>
    %c0_249 = arith.constant 0 : index
    %c146_250 = arith.constant 146 : index
    %236 = vector.load %arg17[%c0_249, %c146_250] : memref<24x640xf32, #tpu.memory_space<vmem>>, vector<24x384xf32>
    %cst_251 = arith.constant dense<0.000000e+00> : vector<8x384xf32>
    %237 = tpu.matmul %235, %236, %cst_251 {dimension_numbers = #tpu.dot_dimension_numbers<[1], [0], [0], [1], [0, 0, 1, 1], [], []>} : vector<8x24xf32>, vector<24x384xf32>, vector<8x384xf32> -> vector<8x384xf32>
    %238 = arith.addf %234, %237 : vector<8x384xf32>
    %c64_252 = arith.constant 64 : index
    %c0_253 = arith.constant 0 : index
    %239 = vector.load %arg11[%c64_252, %c0_253] : memref<72x24xf32, #tpu.memory_space<vmem>>, vector<8x24xf32>
    %c0_254 = arith.constant 0 : index
    %c147_255 = arith.constant 147 : index
    %240 = vector.load %arg17[%c0_254, %c147_255] : memref<24x640xf32, #tpu.memory_space<vmem>>, vector<24x384xf32>
    %cst_256 = arith.constant dense<0.000000e+00> : vector<8x384xf32>
    %241 = tpu.matmul %239, %240, %cst_256 {dimension_numbers = #tpu.dot_dimension_numbers<[1], [0], [0], [1], [0, 0, 1, 1], [], []>} : vector<8x24xf32>, vector<24x384xf32>, vector<8x384xf32> -> vector<8x384xf32>
    %242 = arith.addf %238, %241 : vector<8x384xf32>
    %c0_257 = arith.constant 0 : index
    %c0_258 = arith.constant 0 : index
    %243 = vector.load %arg12[%c0_257, %c0_258] : memref<8x1xf32, #tpu.memory_space<vmem>>, vector<8x1xf32>
    %244 = vector.broadcast %243 : vector<8x1xf32> to vector<8x384xf32>
    %245 = arith.addf %242, %244 : vector<8x384xf32>
    %246 = arith.negf %245 : vector<8x384xf32>
    %247 = math.exp %246 : vector<8x384xf32>
    %cst_259 = arith.constant 1.000000e+00 : f32
    %248 = vector.broadcast %cst_259 : f32 to vector<8x384xf32>
    %249 = arith.addf %248, %247 : vector<8x384xf32>
    %250 = arith.divf %248, %249 : vector<8x384xf32>
    %c0_260 = arith.constant 0 : index
    %c0_261 = arith.constant 0 : index
    %c0_262 = arith.constant 0 : index
    %251 = vector.load %arg13[%c0_260, %c0_261, %c0_262] : memref<1x8x384xf32, #tpu.memory_space<vmem>>, vector<1x8x384xf32>
    %252 = vector.shape_cast %251 : vector<1x8x384xf32> to vector<8x384xf32>
    %253 = vector.shape_cast %250 : vector<8x384xf32> to vector<1x8x384xf32>
    tpu.vector_store %arg13[%c0_260, %c0_261, %c0_262], %253 {strides = array<i32>} : memref<1x8x384xf32, #tpu.memory_space<vmem>>, vector<1x8x384xf32>,
    return
  }
  func.func @transform_0(%arg0: i32) -> (i32, i32, i32) {
    %c0_i32 = arith.constant 0 : i32
    %c0_i32_0 = arith.constant 0 : i32
    %c0_i32_1 = arith.constant 0 : i32
    return %arg0, %c0_i32, %c0_i32_0 : i32, i32, i32
  }
  func.func @transform_1(%arg0: i32) -> (i32, i32) {
    %c0_i32 = arith.constant 0 : i32
    %c0_i32_0 = arith.constant 0 : i32
    %c0_i32_1 = arith.constant 0 : i32
    return %c0_i32, %c0_i32_0 : i32, i32
  }
  func.func @transform_2(%arg0: i32) -> (i32, i32) {
    %c0_i32 = arith.constant 0 : i32
    %c0_i32_0 = arith.constant 0 : i32
    %c0_i32_1 = arith.constant 0 : i32
    return %c0_i32, %c0_i32_0 : i32, i32
  }
  func.func @transform_3(%arg0: i32) -> (i32, i32) {
    %c0_i32 = arith.constant 0 : i32
    %c0_i32_0 = arith.constant 0 : i32
    %c0_i32_1 = arith.constant 0 : i32
    return %c0_i32, %c0_i32_0 : i32, i32
  }
  func.func @transform_4(%arg0: i32) -> (i32, i32) {
    %c0_i32 = arith.constant 0 : i32
    %c0_i32_0 = arith.constant 0 : i32
    %c0_i32_1 = arith.constant 0 : i32
    return %c0_i32, %c0_i32_0 : i32, i32
  }
  func.func @transform_5(%arg0: i32) -> (i32, i32) {
    %c0_i32 = arith.constant 0 : i32
    %c0_i32_0 = arith.constant 0 : i32
    %c0_i32_1 = arith.constant 0 : i32
    return %c0_i32, %c0_i32_0 : i32, i32
  }
  func.func @transform_6(%arg0: i32) -> (i32, i32) {
    %c0_i32 = arith.constant 0 : i32
    %c0_i32_0 = arith.constant 0 : i32
    %c0_i32_1 = arith.constant 0 : i32
    return %c0_i32, %c0_i32_0 : i32, i32
  }
  func.func @transform_7(%arg0: i32) -> (i32, i32) {
    %c0_i32 = arith.constant 0 : i32
    %c0_i32_0 = arith.constant 0 : i32
    %c0_i32_1 = arith.constant 0 : i32
    return %c0_i32, %c0_i32_0 : i32, i32
  }
  func.func @transform_8(%arg0: i32) -> (i32, i32) {
    %c0_i32 = arith.constant 0 : i32
    %c0_i32_0 = arith.constant 0 : i32
    %c0_i32_1 = arith.constant 0 : i32
    return %c0_i32, %c0_i32_0 : i32, i32
  }
  func.func @transform_9(%arg0: i32) -> (i32, i32) {
    %c0_i32 = arith.constant 0 : i32
    %c0_i32_0 = arith.constant 0 : i32
    %c0_i32_1 = arith.constant 0 : i32
    return %c0_i32, %c0_i32_0 : i32, i32
  }
  func.func @transform_10(%arg0: i32) -> (i32, i32) {
    %c0_i32 = arith.constant 0 : i32
    %c0_i32_0 = arith.constant 0 : i32
    %c0_i32_1 = arith.constant 0 : i32
    return %c0_i32, %c0_i32_0 : i32, i32
  }
  func.func @transform_11(%arg0: i32) -> (i32, i32) {
    %c0_i32 = arith.constant 0 : i32
    %c0_i32_0 = arith.constant 0 : i32
    %c0_i32_1 = arith.constant 0 : i32
    return %c0_i32, %c0_i32_0 : i32, i32
  }
  func.func @transform_12(%arg0: i32) -> (i32, i32, i32) {
    %c0_i32 = arith.constant 0 : i32
    %c0_i32_0 = arith.constant 0 : i32
    %c0_i32_1 = arith.constant 0 : i32
    return %arg0, %c0_i32, %c0_i32_0 : i32, i32, i32
  }
}

</mosaic_0001>

<llo_original>
// kernel: squeeze.1
$region0: #{squeeze.1}
  %s0 = inlined_call_operand.vmem [shape: f32[2,324], index: 0, kind: input, shape index: {}]
  %s1 = inlined_call_operand.vmem [shape: f32[2,18,18], index: 1, kind: output, shape index: {}]
  $region1: #{squeeze.1} parent=0
    #allocation0 [shape = 'u8[12288]{0}', space=vmem, size = 0x3000, scoped, tag = 'scoped mem for input reshape']
    %s3 = ssub.s32 4, 1
    %s4 = scalar_lea.vmem %s0, 4
    %v5 = vld [vmem:[%s4] sm:%s3]
    %s6 = scalar_lea.vmem [#allocation0], 16
    %7 = vst [vmem:[%s6] sm:%s3] %v5
    %s8 = scalar_lea.vmem %s0, 2
    %v9 = vld [vmem:[%s8] sm:%s3]
    %s10 = scalar_lea.vmem [#allocation0], 8
    %11 = vst [vmem:[%s10] sm:%s3] %v9
    %v12 = vld [vmem:[%s0] sm:%s3]
    %13 = vst [vmem:[#allocation0] sm:%s3] %v12
    %v14 = vld [vmem:[#allocation0] sm:$0x3]
    %vm15 = vcmask 146432
    %16 = vst.msk [vmem:[%s1] ss:$24 sm:$0x3] %vm15, %v14
    %s17 = scalar_lea.vmem [#allocation0], 17
    %s18 = smov 3
    %v19 = vld [vmem:[%s17] ss:$-1 sm:%s18]
    %20 = vrot.lane.b32.xlu0 %v19, 114
    %v21 = vpop.permute.xlu0 %20
    %vm22 = vcmask 146432
    %s23 = scalar_lea.vmem %s1, 39
    %24 = vst.msk [vmem:[%s23] ss:$-24 sm:$0x3] %vm22, %v21
    %s25 = scalar_lea.vmem [#allocation0], 9
    %s26 = smov 3
    %v27 = vld [vmem:[%s25] ss:$-1 sm:%s26]
    %28 = vrot.lane.b32.xlu0 %v27, 112
    %v29 = vpop.permute.xlu0 %28
    %vm30 = vcmask 146432
    %s31 = scalar_lea.vmem %s1, 32
    %32 = vst.msk [vmem:[%s31] ss:$-24 sm:$0x3] %vm30, %v29
    %v33 = vld [vmem:[#allocation0] sm:$0x3]
    %34 = vrot.lane.b32.xlu0 %v33, 110
    %v35 = vpop.permute.xlu0 %34
    %vm36 = vcmask 146432
    %s37 = scalar_lea.vmem %s1, 1
    %38 = vst.msk [vmem:[%s37] ss:$24 sm:$0x3] %vm36, %v35
    %s39 = scalar_lea.vmem [#allocation0], 17
    %s40 = smov 3
    %v41 = vld [vmem:[%s39] ss:$-1 sm:%s40]
    %42 = vrot.lane.b32.xlu0 %v41, 96
    %v43 = vpop.permute.xlu0 %42
    %vm44 = vcmask 146432
    %s45 = scalar_lea.vmem %s1, 40
    %46 = vst.msk [vmem:[%s45] ss:$-24 sm:$0x3] %vm44, %v43
    %s47 = scalar_lea.vmem [#allocation0], 9
    %s48 = smov 3
    %v49 = vld [vmem:[%s47] ss:$-1 sm:%s48]
    %50 = vrot.lane.b32.xlu0 %v49, 94
    %v51 = vpop.permute.xlu0 %50
    %vm52 = vcmask 146432
    %s53 = scalar_lea.vmem %s1, 33
    %54 = vst.msk [vmem:[%s53] ss:$-24 sm:$0x3] %vm52, %v51
    %v55 = vld [vmem:[#allocation0] sm:$0x3]
    %56 = vrot.lane.b32.xlu0 %v55, 92
    %v57 = vpop.permute.xlu0 %56
    %vm58 = vcmask 146432
    %s59 = scalar_lea.vmem %s1, 2
    %60 = vst.msk [vmem:[%s59] ss:$24 sm:$0x3] %vm58, %v57
    %s61 = scalar_lea.vmem [#allocation0], 17
    %s62 = smov 3
    %v63 = vld [vmem:[%s61] ss:$-1 sm:%s62]
    %64 = vrot.lane.b32.xlu0 %v63, 78
    %v65 = vpop.permute.xlu0 %64
    %vm66 = vcmask 146432
    %s67 = scalar_lea.vmem %s1, 41
    %68 = vst.msk [vmem:[%s67] ss:$-24 sm:$0x3] %vm66, %v65
    %s69 = scalar_lea.vmem [#allocation0], 9
    %s70 = smov 3
    %v71 = vld [vmem:[%s69] ss:$-1 sm:%s70]
    %72 = vrot.lane.b32.xlu0 %v71, 76
    %v73 = vpop.permute.xlu0 %72
    %vm74 = vcmask 146432
    %s75 = scalar_lea.vmem %s1, 34
    %76 = vst.msk [vmem:[%s75] ss:$-24 sm:$0x3] %vm74, %v73
    %v77 = vld [vmem:[#allocation0] sm:$0x3]
    %78 = vrot.lane.b32.xlu0 %v77, 74
    %v79 = vpop.permute.xlu0 %78
    %vm80 = vcmask 146432
    %s81 = scalar_lea.vmem %s1, 3
    %82 = vst.msk [vmem:[%s81] ss:$24 sm:$0x3] %vm80, %v79
    %s83 = scalar_lea.vmem [#allocation0], 9
    %s84 = smov 3
    %v85 = vld [vmem:[%s83] ss:$-1 sm:%s84]
    %86 = vrot.lane.b32.xlu0 %v85, 58
    %v87 = vpop.permute.xlu0 %86
    %vm88 = vcmask 146432
    %s89 = scalar_lea.vmem %s1, 35
    %90 = vst.msk [vmem:[%s89] ss:$-24 sm:$0x3] %vm88, %v87
    %v91 = vld [vmem:[#allocation0] sm:$0x3]
    %92 = vrot.lane.b32.xlu0 %v91, 56
    %v93 = vpop.permute.xlu0 %92
    %vm94 = vcmask 146432
    %s95 = scalar_lea.vmem %s1, 4
    %96 = vst.msk [vmem:[%s95] ss:$24 sm:$0x3] %vm94, %v93
    %s97 = scalar_lea.vmem [#allocation0], 9
    %s98 = smov 3
    %v99 = vld [vmem:[%s97] ss:$-1 sm:%s98]
    %100 = vrot.lane.b32.xlu0 %v99, 40
    %v101 = vpop.permute.xlu0 %100
    %vm102 = vcmask 146432
    %s103 = scalar_lea.vmem %s1, 36
    %104 = vst.msk [vmem:[%s103] ss:$-24 sm:$0x3] %vm102, %v101
    %v105 = vld [vmem:[#allocation0] sm:$0x3]
    %106 = vrot.lane.b32.xlu0 %v105, 38
    %v107 = vpop.permute.xlu0 %106
    %vm108 = vcmask 146432
    %s109 = scalar_lea.vmem %s1, 5
    %110 = vst.msk [vmem:[%s109] ss:$24 sm:$0x3] %vm108, %v107
    %s111 = scalar_lea.vmem [#allocation0], 9
    %s112 = smov 3
    %v113 = vld [vmem:[%s111] ss:$-1 sm:%s112]
    %114 = vrot.lane.b32.xlu0 %v113, 22
    %v115 = vpop.permute.xlu0 %114
    %vm116 = vcmask 146432
    %s117 = scalar_lea.vmem %s1, 37
    %118 = vst.msk [vmem:[%s117] ss:$-24 sm:$0x3] %vm116, %v115
    %v119 = vld [vmem:[#allocation0] sm:$0x3]
    %120 = vrot.lane.b32.xlu0 %v119, 20
    %v121 = vpop.permute.xlu0 %120
    %vm122 = vcmask 146432
    %s123 = scalar_lea.vmem %s1, 6
    %124 = vst.msk [vmem:[%s123] ss:$24 sm:$0x3] %vm122, %v121
    %s125 = scalar_lea.vmem [#allocation0], 9
    %s126 = smov 3
    %v127 = vld [vmem:[%s125] ss:$-1 sm:%s126]
    %s128 = scalar_lea.vmem [#allocation0], 17
    %s129 = smov 3
    %v130 = vld [vmem:[%s128] ss:$-1 sm:%s129]
    %vm131 = vcmask 1014784
    %v132 = vsel %vm131, %v130, %v127
    %133 = vrot.lane.b32.xlu0 %v132, 4
    %v134 = vpop.permute.xlu0 %133
    %vm135 = vcmask 31744
    %s136 = scalar_lea.vmem %s1, 38
    %137 = vst.msk [vmem:[%s136] ss:$-24 sm:$0x3] %vm135, %v134
    %vm138 = vcmask 146464
    %s139 = scalar_lea.vmem %s1, 38
    %140 = vst.msk [vmem:[%s139] ss:$-24 sm:$0x3] %vm138, %v134
    %v141 = vld [vmem:[#allocation0] sm:$0x3]
    %s142 = scalar_lea.vmem [#allocation0], 8
    %v143 = vld [vmem:[%s142] sm:$0x3]
    %vm144 = vcmask 1031168
    %v145 = vsel %vm144, %v143, %v141
    %146 = vrot.lane.b32.xlu0 %v145, 2
    %v147 = vpop.permute.xlu0 %146
    %vm148 = vcmask 15360
    %s149 = scalar_lea.vmem %s1, 7
    %150 = vst.msk [vmem:[%s149] ss:$24 sm:$0x3] %vm148, %v147
    %vm151 = vcmask 146448
    %s152 = scalar_lea.vmem %s1, 7
    %153 = vst.msk [vmem:[%s152] ss:$24 sm:$0x3] %vm151, %v147

// kernel: forward.1
$region0: #{forward.1}
  #allocation0 [shape = 'u32[]', space=smem, size = 0x4, offset = 0x4, fixed_abs, tag = 'smem constant byte address 0x4 - core index']
  #allocation1 [shape = 'u32[72,128]{1,0:T(1,128)}', space=vmem, size = 0x9000, scoped, tag = 'internal scratch']
  #allocation2 [shape = 'f32[8,640]{1,0:T(8,128)}', space=vmem, size = 0x5000, scoped, tag = 'scratch operand']
  #allocation3 [shape = 'f32[16,640]{1,0:T(8,128)}', space=vmem, size = 0xa000, scoped, tag = 'scratch operand']
  #allocation4 [shape = 'f32[24,640]{1,0:T(8,128)}', space=vmem, size = 0xf000, scoped, tag = 'scratch operand']
  #allocation5 [shape = 'f32[24,640]{1,0:T(8,128)}', space=vmem, size = 0xf000, scoped, tag = 'scratch operand']
  %s0 = inlined_call_operand.vmem [shape: f32[2,8,640], index: 0, kind: input, shape index: {}]
  %s1 = inlined_call_operand.vmem [shape: f32[1,384], index: 1, kind: input, shape index: {}]
  %s2 = inlined_call_operand.vmem [shape: f32[72,8], index: 2, kind: input, shape index: {}]
  %s3 = inlined_call_operand.vmem [shape: f32[8,1], index: 3, kind: input, shape index: {}]
  %s4 = inlined_call_operand.vmem [shape: f32[144,8], index: 4, kind: input, shape index: {}]
  %s5 = inlined_call_operand.vmem [shape: f32[16,1], index: 5, kind: input, shape index: {}]
  %s6 = inlined_call_operand.vmem [shape: f32[216,16], index: 6, kind: input, shape index: {}]
  %s7 = inlined_call_operand.vmem [shape: f32[24,1], index: 7, kind: input, shape index: {}]
  %s8 = inlined_call_operand.vmem [shape: f32[216,24], index: 8, kind: input, shape index: {}]
  %s9 = inlined_call_operand.vmem [shape: f32[24,1], index: 9, kind: input, shape index: {}]
  %s10 = inlined_call_operand.vmem [shape: f32[72,24], index: 10, kind: input, shape index: {}]
  %s11 = inlined_call_operand.vmem [shape: f32[8,1], index: 11, kind: input, shape index: {}]
  %s12 = inlined_call_operand.vmem [shape: f32[2,8,384], index: 12, kind: output, shape index: {}]
  %s13 = sld [smem:[#allocation0]]
  $region81: #{forward.1} parent=0
    _
  %s15 = ssub.s32 1, %s13
  %s16 = scalar_select 0, %s15, %s13
  loop: start=0, step=1, limit=4
  $region2: #{forward.1} parent=0 // loop_pre_header
    _
  $region3: #{forward.1} parent=0 // loop_header
    %s18 = sphi 0, %s22
    %p19 = scmp.ge.s32.totalorder %s18, 4
    %s28 = sphi 0, %s30
    %s31 = sphi 0, %s28
    %s32 = sphi 0, %s31
    %s48 = sphi 0, %s32
    %s52 = sphi 0, %s52
    %s54 = sphi 0, %s52
    %s55 = sphi 0, %s54
    %s69 = sphi 0, %s55
    %s73 = sphi 0, %s73
    %s75 = sphi 0, %s73
    %s76 = sphi 0, %s75
    %s90 = sphi 0, %s76
    %s94 = sphi 0, %s94
    %s96 = sphi 0, %s94
    %s97 = sphi 0, %s96
    %s111 = sphi 0, %s97
    %s115 = sphi 0, %s115
    %s117 = sphi 0, %s115
    %s118 = sphi 0, %s117
    %s132 = sphi 0, %s118
    %s136 = sphi 0, %s136
    %s138 = sphi 0, %s136
    %s139 = sphi 0, %s138
    %s153 = sphi 0, %s139
    %s157 = sphi 0, %s157
    %s159 = sphi 0, %s157
    %s160 = sphi 0, %s159
    %s174 = sphi 0, %s160
    %s178 = sphi 0, %s178
    %s180 = sphi 0, %s178
    %s181 = sphi 0, %s180
    %s195 = sphi 0, %s181
    %s199 = sphi 0, %s199
    %s201 = sphi 0, %s199
    %s202 = sphi 0, %s201
    %s216 = sphi 0, %s202
    %s220 = sphi 0, %s220
    %s222 = sphi 0, %s220
    %s223 = sphi 0, %s222
    %s237 = sphi 0, %s223
    %s241 = sphi 0, %s241
    %s243 = sphi 0, %s241
    %s244 = sphi 0, %s243
    %s258 = sphi 0, %s244
    %s262 = sphi 0, %s262
    %s264 = sphi 0, %s262
    %s265 = sphi 0, %s264
    %s279 = sphi 0, %s265
    %s285 = sphi 0, %s287
    %s288 = sphi 0, %s285
    %s289 = sphi 0, %s288
    %s305 = sphi 0, %s289
  $region4: #{forward.1} parent=0 // loop_header_branch
    %21 = sbr.rel (%p19) target = $region8
  $region5: #{forward.1} parent=0 // loop_body
    %s23 = ssub.s32 %s18, 1
    %s24 = ssub.s32 %s18, 2
    %s25 = sadd.s32 %s18, 1
    %s26 = ssub.s32 %s18, %s25
    %p27 = scmp.eq.s32.totalorder %s26, 0
    %s29 = sadd.s32 %s28, 1
    %s30 = scalar_select %p27, %s28, %s29
    %p33 = pneg %p27
    %p34 = scmp.eq.s32.totalorder %s18, 1
    %p35 = por %p33, %p34
    %p36 = scmp.ne.s32.totalorder %s28, %s31
    %p37 = scmp.eq.s32.totalorder %s18, 0
    %p38 = por %p36, %p37
    %p39 = scmp.ne.s32.totalorder %s28, %s31
    %p40 = scmp.eq.s32.totalorder %s23, 1
    %p41 = por %p39, %p40
    %p42 = scmp.ne.s32.totalorder %s31, %s32
    %p43 = scmp.eq.s32.totalorder %s23, 0
    %p44 = por %p42, %p43
    %p45 = scmp.ne.s32.totalorder %s31, %s32
    %p46 = scmp.eq.s32.totalorder %s24, 1
    %p47 = por %p45, %p46
    %p49 = scmp.ne.s32.totalorder %s32, %s48
    %p50 = scmp.eq.s32.totalorder %s24, 0
    %p51 = por %p49, %p50
    %s53 = sadd.s32 %s52, 1
    %p56 = scmp.eq.s32.totalorder %s18, 1
    %p57 = scmp.ne.s32.totalorder %s52, %s54
    %p58 = scmp.eq.s32.totalorder %s18, 0
    %p59 = por %p57, %p58
    %p60 = scmp.ne.s32.totalorder %s52, %s54
    %p61 = scmp.eq.s32.totalorder %s23, 1
    %p62 = por %p60, %p61
    %p63 = scmp.ne.s32.totalorder %s54, %s55
    %p64 = scmp.eq.s32.totalorder %s23, 0
    %p65 = por %p63, %p64
    %p66 = scmp.ne.s32.totalorder %s54, %s55
    %p67 = scmp.eq.s32.totalorder %s24, 1
    %p68 = por %p66, %p67
    %p70 = scmp.ne.s32.totalorder %s55, %s69
    %p71 = scmp.eq.s32.totalorder %s24, 0
    %p72 = por %p70, %p71
    %s74 = sadd.s32 %s73, 1
    %p77 = scmp.eq.s32.totalorder %s18, 1
    %p78 = scmp.ne.s32.totalorder %s73, %s75
    %p79 = scmp.eq.s32.totalorder %s18, 0
    %p80 = por %p78, %p79
    %p81 = scmp.ne.s32.totalorder %s73, %s75
    %p82 = scmp.eq.s32.totalorder %s23, 1
    %p83 = por %p81, %p82
    %p84 = scmp.ne.s32.totalorder %s75, %s76
    %p85 = scmp.eq.s32.totalorder %s23, 0
    %p86 = por %p84, %p85
    %p87 = scmp.ne.s32.totalorder %s75, %s76
    %p88 = scmp.eq.s32.totalorder %s24, 1
    %p89 = por %p87, %p88
    %p91 = scmp.ne.s32.totalorder %s76, %s90
    %p92 = scmp.eq.s32.totalorder %s24, 0
    %p93 = por %p91, %p92
    %s95 = sadd.s32 %s94, 1
    %p98 = scmp.eq.s32.totalorder %s18, 1
    %p99 = scmp.ne.s32.totalorder %s94, %s96
    %p100 = scmp.eq.s32.totalorder %s18, 0
    %p101 = por %p99, %p100
    %p102 = scmp.ne.s32.totalorder %s94, %s96
    %p103 = scmp.eq.s32.totalorder %s23, 1
    %p104 = por %p102, %p103
    %p105 = scmp.ne.s32.totalorder %s96, %s97
    %p106 = scmp.eq.s32.totalorder %s23, 0
    %p107 = por %p105, %p106
    %p108 = scmp.ne.s32.totalorder %s96, %s97
    %p109 = scmp.eq.s32.totalorder %s24, 1
    %p110 = por %p108, %p109
    %p112 = scmp.ne.s32.totalorder %s97, %s111
    %p113 = scmp.eq.s32.totalorder %s24, 0
    %p114 = por %p112, %p113
    %s116 = sadd.s32 %s115, 1
    %p119 = scmp.eq.s32.totalorder %s18, 1
    %p120 = scmp.ne.s32.totalorder %s115, %s117
    %p121 = scmp.eq.s32.totalorder %s18, 0
    %p122 = por %p120, %p121
    %p123 = scmp.ne.s32.totalorder %s115, %s117
    %p124 = scmp.eq.s32.totalorder %s23, 1
    %p125 = por %p123, %p124
    %p126 = scmp.ne.s32.totalorder %s117, %s118
    %p127 = scmp.eq.s32.totalorder %s23, 0
    %p128 = por %p126, %p127
    %p129 = scmp.ne.s32.totalorder %s117, %s118
    %p130 = scmp.eq.s32.totalorder %s24, 1
    %p131 = por %p129, %p130
    %p133 = scmp.ne.s32.totalorder %s118, %s132
    %p134 = scmp.eq.s32.totalorder %s24, 0
    %p135 = por %p133, %p134
    %s137 = sadd.s32 %s136, 1
    %p140 = scmp.eq.s32.totalorder %s18, 1
    %p141 = scmp.ne.s32.totalorder %s136, %s138
    %p142 = scmp.eq.s32.totalorder %s18, 0
    %p143 = por %p141, %p142
    %p144 = scmp.ne.s32.totalorder %s136, %s138
    %p145 = scmp.eq.s32.totalorder %s23, 1
    %p146 = por %p144, %p145
    %p147 = scmp.ne.s32.totalorder %s138, %s139
    %p148 = scmp.eq.s32.totalorder %s23, 0
    %p149 = por %p147, %p148
    %p150 = scmp.ne.s32.totalorder %s138, %s139
    %p151 = scmp.eq.s32.totalorder %s24, 1
    %p152 = por %p150, %p151
    %p154 = scmp.ne.s32.totalorder %s139, %s153
    %p155 = scmp.eq.s32.totalorder %s24, 0
    %p156 = por %p154, %p155
    %s158 = sadd.s32 %s157, 1
    %p161 = scmp.eq.s32.totalorder %s18, 1
    %p162 = scmp.ne.s32.totalorder %s157, %s159
    %p163 = scmp.eq.s32.totalorder %s18, 0
    %p164 = por %p162, %p163
    %p165 = scmp.ne.s32.totalorder %s157, %s159
    %p166 = scmp.eq.s32.totalorder %s23, 1
    %p167 = por %p165, %p166
    %p168 = scmp.ne.s32.totalorder %s159, %s160
    %p169 = scmp.eq.s32.totalorder %s23, 0
    %p170 = por %p168, %p169
    %p171 = scmp.ne.s32.totalorder %s159, %s160
    %p172 = scmp.eq.s32.totalorder %s24, 1
    %p173 = por %p171, %p172
    %p175 = scmp.ne.s32.totalorder %s160, %s174
    %p176 = scmp.eq.s32.totalorder %s24, 0
    %p177 = por %p175, %p176
    %s179 = sadd.s32 %s178, 1
    %p182 = scmp.eq.s32.totalorder %s18, 1
    %p183 = scmp.ne.s32.totalorder %s178, %s180
    %p184 = scmp.eq.s32.totalorder %s18, 0
    %p185 = por %p183, %p184
    %p186 = scmp.ne.s32.totalorder %s178, %s180
    %p187 = scmp.eq.s32.totalorder %s23, 1
    %p188 = por %p186, %p187
    %p189 = scmp.ne.s32.totalorder %s180, %s181
    %p190 = scmp.eq.s32.totalorder %s23, 0
    %p191 = por %p189, %p190
    %p192 = scmp.ne.s32.totalorder %s180, %s181
    %p193 = scmp.eq.s32.totalorder %s24, 1
    %p194 = por %p192, %p193
    %p196 = scmp.ne.s32.totalorder %s181, %s195
    %p197 = scmp.eq.s32.totalorder %s24, 0
    %p198 = por %p196, %p197
    %s200 = sadd.s32 %s199, 1
    %p203 = scmp.eq.s32.totalorder %s18, 1
    %p204 = scmp.ne.s32.totalorder %s199, %s201
    %p205 = scmp.eq.s32.totalorder %s18, 0
    %p206 = por %p204, %p205
    %p207 = scmp.ne.s32.totalorder %s199, %s201
    %p208 = scmp.eq.s32.totalorder %s23, 1
    %p209 = por %p207, %p208
    %p210 = scmp.ne.s32.totalorder %s201, %s202
    %p211 = scmp.eq.s32.totalorder %s23, 0
    %p212 = por %p210, %p211
    %p213 = scmp.ne.s32.totalorder %s201, %s202
    %p214 = scmp.eq.s32.totalorder %s24, 1
    %p215 = por %p213, %p214
    %p217 = scmp.ne.s32.totalorder %s202, %s216
    %p218 = scmp.eq.s32.totalorder %s24, 0
    %p219 = por %p217, %p218
    %s221 = sadd.s32 %s220, 1
    %p224 = scmp.eq.s32.totalorder %s18, 1
    %p225 = scmp.ne.s32.totalorder %s220, %s222
    %p226 = scmp.eq.s32.totalorder %s18, 0
    %p227 = por %p225, %p226
    %p228 = scmp.ne.s32.totalorder %s220, %s222
    %p229 = scmp.eq.s32.totalorder %s23, 1
    %p230 = por %p228, %p229
    %p231 = scmp.ne.s32.totalorder %s222, %s223
    %p232 = scmp.eq.s32.totalorder %s23, 0
    %p233 = por %p231, %p232
    %p234 = scmp.ne.s32.totalorder %s222, %s223
    %p235 = scmp.eq.s32.totalorder %s24, 1
    %p236 = por %p234, %p235
    %p238 = scmp.ne.s32.totalorder %s223, %s237
    %p239 = scmp.eq.s32.totalorder %s24, 0
    %p240 = por %p238, %p239
    %s242 = sadd.s32 %s241, 1
    %p245 = scmp.eq.s32.totalorder %s18, 1
    %p246 = scmp.ne.s32.totalorder %s241, %s243
    %p247 = scmp.eq.s32.totalorder %s18, 0
    %p248 = por %p246, %p247
    %p249 = scmp.ne.s32.totalorder %s241, %s243
    %p250 = scmp.eq.s32.totalorder %s23, 1
    %p251 = por %p249, %p250
    %p252 = scmp.ne.s32.totalorder %s243, %s244
    %p253 = scmp.eq.s32.totalorder %s23, 0
    %p254 = por %p252, %p253
    %p255 = scmp.ne.s32.totalorder %s243, %s244
    %p256 = scmp.eq.s32.totalorder %s24, 1
    %p257 = por %p255, %p256
    %p259 = scmp.ne.s32.totalorder %s244, %s258
    %p260 = scmp.eq.s32.totalorder %s24, 0
    %p261 = por %p259, %p260
    %s263 = sadd.s32 %s262, 1
    %p266 = scmp.eq.s32.totalorder %s18, 1
    %p267 = scmp.ne.s32.totalorder %s262, %s264
    %p268 = scmp.eq.s32.totalorder %s18, 0
    %p269 = por %p267, %p268
    %p270 = scmp.ne.s32.totalorder %s262, %s264
    %p271 = scmp.eq.s32.totalorder %s23, 1
    %p272 = por %p270, %p271
    %p273 = scmp.ne.s32.totalorder %s264, %s265
    %p274 = scmp.eq.s32.totalorder %s23, 0
    %p275 = por %p273, %p274
    %p276 = scmp.ne.s32.totalorder %s264, %s265
    %p277 = scmp.eq.s32.totalorder %s24, 1
    %p278 = por %p276, %p277
    %p280 = scmp.ne.s32.totalorder %s265, %s279
    %p281 = scmp.eq.s32.totalorder %s24, 0
    %p282 = por %p280, %p281
    %s283 = ssub.s32 %s18, %s25
    %p284 = scmp.eq.s32.totalorder %s283, 0
    %s286 = sadd.s32 %s285, 1
    %s287 = scalar_select %p284, %s285, %s286
    %p290 = pneg %p284
    %p291 = scmp.eq.s32.totalorder %s18, 1
    %p292 = por %p290, %p291
    %p293 = scmp.ne.s32.totalorder %s285, %s288
    %p294 = scmp.eq.s32.totalorder %s18, 0
    %p295 = por %p293, %p294
    %p296 = scmp.ne.s32.totalorder %s285, %s288
    %p297 = scmp.eq.s32.totalorder %s23, 1
    %p298 = por %p296, %p297
    %p299 = scmp.ne.s32.totalorder %s288, %s289
    %p300 = scmp.eq.s32.totalorder %s23, 0
    %p301 = por %p299, %p300
    %p302 = scmp.ne.s32.totalorder %s288, %s289
    %p303 = scmp.eq.s32.totalorder %s24, 1
    %p304 = por %p302, %p303
    %p306 = scmp.ne.s32.totalorder %s289, %s305
    %p307 = scmp.eq.s32.totalorder %s24, 0
    %p308 = por %p306, %p307
    %p309 = scmp.le.s32.totalorder 1, %s18
    %p310 = scmp.lt.s32.totalorder %s18, 3
    %p311 = pnand %p309, %p310
    %p312 = pneg %p311
    // Predicated region
    $region9: #{forward.1} parent=5 // pred_check
      _
    $region10: #{forward.1} parent=5 // pred_check_branch
      %314 = sbr.rel (%p311) target = $region12
    $region11: #{forward.1} parent=5 // pred_region
      %s315 = ssub.s32 %s18, 1
      // Predicated region
      $region13: #{forward.1} parent=11 // pred_check
        %p316 = pneg %p65
      $region14: #{forward.1} parent=11 // pred_check_branch
        %318 = sbr.rel (%p316) target = $region16
      $region15: #{forward.1} parent=11 // pred_region
        _
      $region16: #{forward.1} parent=11 // pred_fallthru
        _
      // Predicated region
      $region17: #{forward.1} parent=11 // pred_check
        %p319 = pneg %p86
      $region18: #{forward.1} parent=11 // pred_check_branch
        %321 = sbr.rel (%p319) target = $region20
      $region19: #{forward.1} parent=11 // pred_region
        _
      $region20: #{forward.1} parent=11 // pred_fallthru
        _
      // Predicated region
      $region21: #{forward.1} parent=11 // pred_check
        %p322 = pneg %p107
      $region22: #{forward.1} parent=11 // pred_check_branch
        %324 = sbr.rel (%p322) target = $region24
      $region23: #{forward.1} parent=11 // pred_region
        _
      $region24: #{forward.1} parent=11 // pred_fallthru
        _
      // Predicated region
      $region25: #{forward.1} parent=11 // pred_check
        %p325 = pneg %p128
      $region26: #{forward.1} parent=11 // pred_check_branch
        %327 = sbr.rel (%p325) target = $region28
      $region27: #{forward.1} parent=11 // pred_region
        _
      $region28: #{forward.1} parent=11 // pred_fallthru
        _
      // Predicated region
      $region29: #{forward.1} parent=11 // pred_check
        %p328 = pneg %p149
      $region30: #{forward.1} parent=11 // pred_check_branch
        %330 = sbr.rel (%p328) target = $region32
      $region31: #{forward.1} parent=11 // pred_region
        _
      $region32: #{forward.1} parent=11 // pred_fallthru
        _
      // Predicated region
      $region33: #{forward.1} parent=11 // pred_check
        %p331 = pneg %p170
      $region34: #{forward.1} parent=11 // pred_check_branch
        %333 = sbr.rel (%p331) target = $region36
      $region35: #{forward.1} parent=11 // pred_region
        _
      $region36: #{forward.1} parent=11 // pred_fallthru
        _
      // Predicated region
      $region37: #{forward.1} parent=11 // pred_check
        %p334 = pneg %p191
      $region38: #{forward.1} parent=11 // pred_check_branch
        %336 = sbr.rel (%p334) target = $region40
      $region39: #{forward.1} parent=11 // pred_region
        _
      $region40: #{forward.1} parent=11 // pred_fallthru
        _
      // Predicated region
      $region41: #{forward.1} parent=11 // pred_check
        %p337 = pneg %p212
      $region42: #{forward.1} parent=11 // pred_check_branch
        %339 = sbr.rel (%p337) target = $region44
      $region43: #{forward.1} parent=11 // pred_region
        _
      $region44: #{forward.1} parent=11 // pred_fallthru
        _
      // Predicated region
      $region45: #{forward.1} parent=11 // pred_check
        %p340 = pneg %p233
      $region46: #{forward.1} parent=11 // pred_check_branch
        %342 = sbr.rel (%p340) target = $region48
      $region47: #{forward.1} parent=11 // pred_region
        _
      $region48: #{forward.1} parent=11 // pred_fallthru
        _
      // Predicated region
      $region49: #{forward.1} parent=11 // pred_check
        %p343 = pneg %p254
      $region50: #{forward.1} parent=11 // pred_check_branch
        %345 = sbr.rel (%p343) target = $region52
      $region51: #{forward.1} parent=11 // pred_region
        _
      $region52: #{forward.1} parent=11 // pred_fallthru
        _
      // Predicated region
      $region53: #{forward.1} parent=11 // pred_check
        %p346 = pneg %p275
      $region54: #{forward.1} parent=11 // pred_check_branch
        %348 = sbr.rel (%p346) target = $region56
      $region55: #{forward.1} parent=11 // pred_region
        _
      $region56: #{forward.1} parent=11 // pred_fallthru
        _
    $region12: #{forward.1} parent=5 // pred_fallthru
      _
    %p349 = scmp.lt.s32.totalorder %s18, 2
    // Predicated region
    $region57: #{forward.1} parent=5 // pred_check
      %p350 = pneg %p349
    $region58: #{forward.1} parent=5 // pred_check_branch
      %352 = sbr.rel (%p350) target = $region60
    $region59: #{forward.1} parent=5 // pred_region
      // Predicated region
      $region61: #{forward.1} parent=59 // pred_check
        %p353 = pneg %p38
      $region62: #{forward.1} parent=59 // pred_check_branch
        %355 = sbr.rel (%p353) target = $region64
      $region63: #{forward.1} parent=59 // pred_region
        %p356 = scmp.lt.s32.totalorder %s18, 1
        %s357 = scalar_select %p356, %s18, 1
        %s358 = smul.addr %s357, 5
        %s359 = smul.addr %s358, 8
        %s360 = scalar_lea.vmem %s0, %s359
      $region64: #{forward.1} parent=59 // pred_fallthru
        _
    $region60: #{forward.1} parent=5 // pred_fallthru
      _
    %p361 = scmp.le.s32.totalorder 1, %s18
    %p362 = scmp.lt.s32.totalorder %s18, 3
    %p363 = pnand %p361, %p362
    %p364 = pneg %p363
    // Predicated region
    $region65: #{forward.1} parent=5 // pred_check
      _
    $region66: #{forward.1} parent=5 // pred_check_branch
      %366 = sbr.rel (%p363) target = $region68
    $region67: #{forward.1} parent=5 // pred_region
      %s367 = ssub.s32 %s18, 1
      %p368 = scmp.lt.s32.totalorder %s23, 1
      %s369 = scalar_select %p368, %s23, 1
      %s370 = smul.addr %s369, 5
      %s371 = smul.addr %s370, 8
      %s372 = scalar_lea.vmem %s0, %s371
      %p373 = pneg %p44
      %p374 = pneg %p41
      %p375 = pneg %p65
      %p376 = pneg %p62
      %p377 = pneg %p86
      %p378 = pneg %p83
      %p379 = pneg %p107
      %p380 = pneg %p104
      %p381 = pneg %p128
      %p382 = pneg %p125
      %p383 = pneg %p149
      %p384 = pneg %p146
      %p385 = pneg %p170
      %p386 = pneg %p167
      %p387 = pneg %p191
      %p388 = pneg %p188
      %p389 = pneg %p212
      %p390 = pneg %p209
      %p391 = pneg %p233
      %p392 = pneg %p230
      %p393 = pneg %p254
      %p394 = pneg %p251
      %p395 = pneg %p275
      %p396 = pneg %p272
      %p397 = pneg %p301
      %p398 = pneg %p298
      %p399 = scmp.lt.s32.totalorder %s23, 1
      %s400 = scalar_select %p399, %s23, 1
      %s401 = smul.addr %s400, 3
      %s402 = smul.addr %s401, 8
      %s403 = scalar_lea.vmem %s12, %s402
      %p404 = scmp.lt.s32.totalorder %s23, 1
      %s405 = scalar_select %p404, %s23, 1
      %s406 = smul.addr %s405, 5
      %s407 = smul.addr %s406, 8
      %s408 = scalar_lea.vmem %s0, %s407
      %p409 = scmp.lt.s32.totalorder %s23, 1
      %s410 = scalar_select %p409, %s23, 1
      %s411 = smul.addr %s410, 3
      %s412 = smul.addr %s411, 8
      %s413 = scalar_lea.vmem %s12, %s412
      %414 = vst [vmem:[#allocation2] sm:$0xff] 0.0
      %415 = vst [vmem:[#allocation2 + $0x20] sm:$0xff] 0.0
      %416 = vst [vmem:[#allocation3] sm:$0xff] 0.0
      %417 = vst [vmem:[#allocation3 + $0x28] sm:$0xff] 0.0
      %418 = vst [vmem:[#allocation3 + $0x20] sm:$0xff] 0.0
      %419 = vst [vmem:[#allocation3 + $0x48] sm:$0xff] 0.0
      %420 = vst [vmem:[#allocation4] sm:$0xff] 0.0
      %421 = vst [vmem:[#allocation4 + $0x28] sm:$0xff] 0.0
      %422 = vst [vmem:[#allocation4 + $0x50] sm:$0xff] 0.0
      %423 = vst [vmem:[#allocation4 + $0x20] sm:$0xff] 0.0
      %424 = vst [vmem:[#allocation4 + $0x48] sm:$0xff] 0.0
      %425 = vst [vmem:[#allocation4 + $0x70] sm:$0xff] 0.0
      %426 = vst [vmem:[#allocation5] sm:$0xff] 0.0
      %427 = vst [vmem:[#allocation5 + $0x28] sm:$0xff] 0.0
      %428 = vst [vmem:[#allocation5 + $0x50] sm:$0xff] 0.0
      %429 = vst [vmem:[#allocation5 + $0x20] sm:$0xff] 0.0
      %430 = vst [vmem:[#allocation5 + $0x48] sm:$0xff] 0.0
      %431 = vst [vmem:[#allocation5 + $0x70] sm:$0xff] 0.0
      %v432 = vld [vmem:[%s1] sm:$0x7]
      %vm433 = vcmp.ne.f32.partialorder %v432, 0.0
      %v434 = vld [vmem:[%s2] sm:$0xff]
      %v435 = vld [vmem:[%s408] sm:$0xff]
      %v436 = vld [vmem:[%s408 + $0x8] sm:$0xff]
      %v437 = vld [vmem:[%s408 + $0x10] sm:$0xff]
      %v438 = vld [vmem:[%s408 + $0x18] sm:$0xff]
      %v439 = vld [vmem:[%s2 + $0x8] sm:$0xff]
      %444 = vrot.lane.b32.xlu0 %v435, 18
      %v445 = vpop.permute.xlu0 %444
      %446 = vrot.lane.b32.xlu0 %v436, 18
      %v447 = vpop.permute.xlu0 %446
      %448 = vrot.lane.b32.xlu0 %v437, 18
      %v449 = vpop.permute.xlu0 %448
      %450 = vrot.lane.b32.xlu0 %v438, 18
      %v451 = vpop.permute.xlu0 %450
      %vm452 = vcmask 146432
      %v453 = vsel %vm452, %v445, %v447
      %v454 = vsel %vm452, %v447, %v449
      %v455 = vsel %vm452, %v449, %v451
      %vm459 = vcmask 64512
      %v461 = vsel %vm459, %v439, 0
      %463 = vmatpush.msra.mxu0 0.0
      %464 = vmatpush.msra.mxu0 0.0
      %465 = vmatpush.msra.mxu0 0.0
      %466 = vmatpush.msra.mxu0 0.0
      %467 = vmatpush.msra.mxu0 0.0
      %468 = vmatpush.msra.mxu0 0.0
      %469 = vmatpush.msra.mxu0 0.0
      %470 = vmatpush.msra.mxu0 0.0
      %471 = vmatpush.msra.mxu0 0.0
      %472 = vmatpush.msra.mxu0 0.0
      %473 = vmatpush.msra.mxu0 0.0
      %474 = vmatpush.msra.mxu0 0.0
      %475 = vmatpush.msra.mxu0 0.0
      %476 = vmatpush.msra.mxu0 0.0
      %477 = vmatpush.msra.mxu0 0.0
      %478 = vmatpush.msra.mxu0 %v453
      %479 = vmatmul.f32.gmra.mxu0 %v461
      %v480 = vpop.f32.mrf.mxu0
      %v481 = vadd.f32 0.0, %v480
      %482 = vdwg.mxu0
      %483 = vmatpush.msra.mxu0 0.0
      %484 = vmatpush.msra.mxu0 0.0
      %485 = vmatpush.msra.mxu0 0.0
      %486 = vmatpush.msra.mxu0 0.0
      %487 = vmatpush.msra.mxu0 0.0
      %488 = vmatpush.msra.mxu0 0.0
      %489 = vmatpush.msra.mxu0 0.0
      %490 = vmatpush.msra.mxu0 0.0
      %491 = vmatpush.msra.mxu0 0.0
      %492 = vmatpush.msra.mxu0 0.0
      %493 = vmatpush.msra.mxu0 0.0
      %494 = vmatpush.msra.mxu0 0.0
      %495 = vmatpush.msra.mxu0 0.0
      %496 = vmatpush.msra.mxu0 0.0
      %497 = vmatpush.msra.mxu0 0.0
      %498 = vmatpush.msra.mxu0 %v454
      %499 = vmatmul.f32.gmra.mxu0 %v461
      %v500 = vpop.f32.mrf.mxu0
      %v501 = vadd.f32 0.0, %v500
      %502 = vdwg.mxu0
      %503 = vmatpush.msra.mxu0 0.0
      %504 = vmatpush.msra.mxu0 0.0
      %505 = vmatpush.msra.mxu0 0.0
      %506 = vmatpush.msra.mxu0 0.0
      %507 = vmatpush.msra.mxu0 0.0
      %508 = vmatpush.msra.mxu0 0.0
      %509 = vmatpush.msra.mxu0 0.0
      %510 = vmatpush.msra.mxu0 0.0
      %511 = vmatpush.msra.mxu0 0.0
      %512 = vmatpush.msra.mxu0 0.0
      %513 = vmatpush.msra.mxu0 0.0
      %514 = vmatpush.msra.mxu0 0.0
      %515 = vmatpush.msra.mxu0 0.0
      %516 = vmatpush.msra.mxu0 0.0
      %517 = vmatpush.msra.mxu0 0.0
      %518 = vmatpush.msra.mxu0 %v455
      %519 = vmatmul.f32.gmra.mxu0 %v461
      %v520 = vpop.f32.mrf.mxu0
      %v521 = vadd.f32 0.0, %v520
      %522 = vdwg.mxu0
      %523 = vrot.lane.b32.xlu0 %v435, 19
      %v524 = vpop.permute.xlu0 %523
      %525 = vrot.lane.b32.xlu0 %v436, 19
      %v526 = vpop.permute.xlu0 %525
      %527 = vrot.lane.b32.xlu0 %v437, 19
      %v528 = vpop.permute.xlu0 %527
      %529 = vrot.lane.b32.xlu0 %v438, 19
      %v530 = vpop.permute.xlu0 %529
      %vm531 = vcmask 154624
      %v532 = vsel %vm531, %v524, %v526
      %v533 = vsel %vm531, %v526, %v528
      %v534 = vsel %vm531, %v528, %v530
      %v539 = vsel %vm459, %v434, 0
      %541 = vmatpush.msra.mxu0 0.0
      %542 = vmatpush.msra.mxu0 0.0
      %543 = vmatpush.msra.mxu0 0.0
      %544 = vmatpush.msra.mxu0 0.0
      %545 = vmatpush.msra.mxu0 0.0
      %546 = vmatpush.msra.mxu0 0.0
      %547 = vmatpush.msra.mxu0 0.0
      %548 = vmatpush.msra.mxu0 0.0
      %549 = vmatpush.msra.mxu0 0.0
      %550 = vmatpush.msra.mxu0 0.0
      %551 = vmatpush.msra.mxu0 0.0
      %552 = vmatpush.msra.mxu0 0.0
      %553 = vmatpush.msra.mxu0 0.0
      %554 = vmatpush.msra.mxu0 0.0
      %555 = vmatpush.msra.mxu0 0.0
      %556 = vmatpush.msra.mxu0 %v532
      %557 = vmatmul.f32.gmra.mxu0 %v539
      %v558 = vpop.f32.mrf.mxu0
      %v559 = vadd.f32 %v481, %v558
      %560 = vdwg.mxu0
      %561 = vmatpush.msra.mxu0 0.0
      %562 = vmatpush.msra.mxu0 0.0
      %563 = vmatpush.msra.mxu0 0.0
      %564 = vmatpush.msra.mxu0 0.0
      %565 = vmatpush.msra.mxu0 0.0
      %566 = vmatpush.msra.mxu0 0.0
      %567 = vmatpush.msra.mxu0 0.0
      %568 = vmatpush.msra.mxu0 0.0
      %569 = vmatpush.msra.mxu0 0.0
      %570 = vmatpush.msra.mxu0 0.0
      %571 = vmatpush.msra.mxu0 0.0
      %572 = vmatpush.msra.mxu0 0.0
      %573 = vmatpush.msra.mxu0 0.0
      %574 = vmatpush.msra.mxu0 0.0
      %575 = vmatpush.msra.mxu0 0.0
      %576 = vmatpush.msra.mxu0 %v533
      %577 = vmatmul.f32.gmra.mxu0 %v539
      %v578 = vpop.f32.mrf.mxu0
      %v579 = vadd.f32 %v501, %v578
      %580 = vdwg.mxu0
      %581 = vmatpush.msra.mxu0 0.0
      %582 = vmatpush.msra.mxu0 0.0
      %583 = vmatpush.msra.mxu0 0.0
      %584 = vmatpush.msra.mxu0 0.0
      %585 = vmatpush.msra.mxu0 0.0
      %586 = vmatpush.msra.mxu0 0.0
      %587 = vmatpush.msra.mxu0 0.0
      %588 = vmatpush.msra.mxu0 0.0
      %589 = vmatpush.msra.mxu0 0.0
      %590 = vmatpush.msra.mxu0 0.0
      %591 = vmatpush.msra.mxu0 0.0
      %592 = vmatpush.msra.mxu0 0.0
      %593 = vmatpush.msra.mxu0 0.0
      %594 = vmatpush.msra.mxu0 0.0
      %595 = vmatpush.msra.mxu0 0.0
      %596 = vmatpush.msra.mxu0 %v534
      %597 = vmatmul.f32.gmra.mxu0 %v539
      %v598 = vpop.f32.mrf.mxu0
      %v599 = vadd.f32 %v521, %v598
      %600 = vdwg.mxu0
      %v601 = vld [vmem:[%s2 + $0x10] sm:$0xff]
      %602 = vrot.lane.b32.xlu0 %v435, 17
      %v603 = vpop.permute.xlu0 %602
      %604 = vrot.lane.b32.xlu0 %v436, 17
      %v605 = vpop.permute.xlu0 %604
      %606 = vrot.lane.b32.xlu0 %v437, 17
      %v607 = vpop.permute.xlu0 %606
      %608 = vrot.lane.b32.xlu0 %v438, 17
      %v609 = vpop.permute.xlu0 %608
      %vm610 = vcmask 138240
      %v611 = vsel %vm610, %v603, %v605
      %v612 = vsel %vm610, %v605, %v607
      %v613 = vsel %vm610, %v607, %v609
      %v618 = vsel %vm459, %v601, 0
      %620 = vmatpush.msra.mxu0 0.0
      %621 = vmatpush.msra.mxu0 0.0
      %622 = vmatpush.msra.mxu0 0.0
      %623 = vmatpush.msra.mxu0 0.0
      %624 = vmatpush.msra.mxu0 0.0
      %625 = vmatpush.msra.mxu0 0.0
      %626 = vmatpush.msra.mxu0 0.0
      %627 = vmatpush.msra.mxu0 0.0
      %628 = vmatpush.msra.mxu0 0.0
      %629 = vmatpush.msra.mxu0 0.0
      %630 = vmatpush.msra.mxu0 0.0
      %631 = vmatpush.msra.mxu0 0.0
      %632 = vmatpush.msra.mxu0 0.0
      %633 = vmatpush.msra.mxu0 0.0
      %634 = vmatpush.msra.mxu0 0.0
      %635 = vmatpush.msra.mxu0 %v611
      %636 = vmatmul.f32.gmra.mxu0 %v618
      %v637 = vpop.f32.mrf.mxu0
      %v638 = vadd.f32 0.0, %v637
      %639 = vdwg.mxu0
      %640 = vmatpush.msra.mxu0 0.0
      %641 = vmatpush.msra.mxu0 0.0
      %642 = vmatpush.msra.mxu0 0.0
      %643 = vmatpush.msra.mxu0 0.0
      %644 = vmatpush.msra.mxu0 0.0
      %645 = vmatpush.msra.mxu0 0.0
      %646 = vmatpush.msra.mxu0 0.0
      %647 = vmatpush.msra.mxu0 0.0
      %648 = vmatpush.msra.mxu0 0.0
      %649 = vmatpush.msra.mxu0 0.0
      %650 = vmatpush.msra.mxu0 0.0
      %651 = vmatpush.msra.mxu0 0.0
      %652 = vmatpush.msra.mxu0 0.0
      %653 = vmatpush.msra.mxu0 0.0
      %654 = vmatpush.msra.mxu0 0.0
      %655 = vmatpush.msra.mxu0 %v612
      %656 = vmatmul.f32.gmra.mxu0 %v618
      %v657 = vpop.f32.mrf.mxu0
      %v658 = vadd.f32 0.0, %v657
      %659 = vdwg.mxu0
      %660 = vmatpush.msra.mxu0 0.0
      %661 = vmatpush.msra.mxu0 0.0
      %662 = vmatpush.msra.mxu0 0.0
      %663 = vmatpush.msra.mxu0 0.0
      %664 = vmatpush.msra.mxu0 0.0
      %665 = vmatpush.msra.mxu0 0.0
      %666 = vmatpush.msra.mxu0 0.0
      %667 = vmatpush.msra.mxu0 0.0
      %668 = vmatpush.msra.mxu0 0.0
      %669 = vmatpush.msra.mxu0 0.0
      %670 = vmatpush.msra.mxu0 0.0
      %671 = vmatpush.msra.mxu0 0.0
      %672 = vmatpush.msra.mxu0 0.0
      %673 = vmatpush.msra.mxu0 0.0
      %674 = vmatpush.msra.mxu0 0.0
      %675 = vmatpush.msra.mxu0 %v613
      %676 = vmatmul.f32.gmra.mxu0 %v618
      %v677 = vpop.f32.mrf.mxu0
      %v678 = vadd.f32 0.0, %v677
      %679 = vdwg.mxu0
      %v680 = vadd.f32 %v559, %v638
      %v681 = vadd.f32 %v579, %v658
      %v682 = vadd.f32 %v599, %v678
      %v683 = vld [vmem:[%s2 + $0x18] sm:$0xff]
      %684 = vrot.lane.b32.xlu0 %v435, 1
      %v685 = vpop.permute.xlu0 %684
      %686 = vrot.lane.b32.xlu0 %v436, 1
      %v687 = vpop.permute.xlu0 %686
      %688 = vrot.lane.b32.xlu0 %v437, 1
      %v689 = vpop.permute.xlu0 %688
      %690 = vrot.lane.b32.xlu0 %v438, 1
      %v691 = vpop.permute.xlu0 %690
      %vm692 = vcmask 7168
      %v693 = vsel %vm692, %v685, %v687
      %v694 = vsel %vm692, %v687, %v689
      %v695 = vsel %vm692, %v689, %v691
      %v700 = vsel %vm459, %v683, 0
      %702 = vmatpush.msra.mxu0 0.0
      %703 = vmatpush.msra.mxu0 0.0
      %704 = vmatpush.msra.mxu0 0.0
      %705 = vmatpush.msra.mxu0 0.0
      %706 = vmatpush.msra.mxu0 0.0
      %707 = vmatpush.msra.mxu0 0.0
      %708 = vmatpush.msra.mxu0 0.0
      %709 = vmatpush.msra.mxu0 0.0
      %710 = vmatpush.msra.mxu0 0.0
      %711 = vmatpush.msra.mxu0 0.0
      %712 = vmatpush.msra.mxu0 0.0
      %713 = vmatpush.msra.mxu0 0.0
      %714 = vmatpush.msra.mxu0 0.0
      %715 = vmatpush.msra.mxu0 0.0
      %716 = vmatpush.msra.mxu0 0.0
      %717 = vmatpush.msra.mxu0 %v693
      %718 = vmatmul.f32.gmra.mxu0 %v700
      %v719 = vpop.f32.mrf.mxu0
      %v720 = vadd.f32 0.0, %v719
      %721 = vdwg.mxu0
      %722 = vmatpush.msra.mxu0 0.0
      %723 = vmatpush.msra.mxu0 0.0
      %724 = vmatpush.msra.mxu0 0.0
      %725 = vmatpush.msra.mxu0 0.0
      %726 = vmatpush.msra.mxu0 0.0
      %727 = vmatpush.msra.mxu0 0.0
      %728 = vmatpush.msra.mxu0 0.0
      %729 = vmatpush.msra.mxu0 0.0
      %730 = vmatpush.msra.mxu0 0.0
      %731 = vmatpush.msra.mxu0 0.0
      %732 = vmatpush.msra.mxu0 0.0
      %733 = vmatpush.msra.mxu0 0.0
      %734 = vmatpush.msra.mxu0 0.0
      %735 = vmatpush.msra.mxu0 0.0
      %736 = vmatpush.msra.mxu0 0.0
      %737 = vmatpush.msra.mxu0 %v694
      %738 = vmatmul.f32.gmra.mxu0 %v700
      %v739 = vpop.f32.mrf.mxu0
      %v740 = vadd.f32 0.0, %v739
      %741 = vdwg.mxu0
      %742 = vmatpush.msra.mxu0 0.0
      %743 = vmatpush.msra.mxu0 0.0
      %744 = vmatpush.msra.mxu0 0.0
      %745 = vmatpush.msra.mxu0 0.0
      %746 = vmatpush.msra.mxu0 0.0
      %747 = vmatpush.msra.mxu0 0.0
      %748 = vmatpush.msra.mxu0 0.0
      %749 = vmatpush.msra.mxu0 0.0
      %750 = vmatpush.msra.mxu0 0.0
      %751 = vmatpush.msra.mxu0 0.0
      %752 = vmatpush.msra.mxu0 0.0
      %753 = vmatpush.msra.mxu0 0.0
      %754 = vmatpush.msra.mxu0 0.0
      %755 = vmatpush.msra.mxu0 0.0
      %756 = vmatpush.msra.mxu0 0.0
      %757 = vmatpush.msra.mxu0 %v695
      %758 = vmatmul.f32.gmra.mxu0 %v700
      %v759 = vpop.f32.mrf.mxu0
      %v760 = vadd.f32 0.0, %v759
      %761 = vdwg.mxu0
      %v762 = vadd.f32 %v680, %v720
      %v763 = vadd.f32 %v681, %v740
      %v764 = vadd.f32 %v682, %v760
      %v765 = vld [vmem:[%s2 + $0x20] sm:$0xff]
      %v767 = vsel %vm459, %v765, 0
      %769 = vmatpush.msra.mxu0 0.0
      %770 = vmatpush.msra.mxu0 0.0
      %771 = vmatpush.msra.mxu0 0.0
      %772 = vmatpush.msra.mxu0 0.0
      %773 = vmatpush.msra.mxu0 0.0
      %774 = vmatpush.msra.mxu0 0.0
      %775 = vmatpush.msra.mxu0 0.0
      %776 = vmatpush.msra.mxu0 0.0
      %777 = vmatpush.msra.mxu0 0.0
      %778 = vmatpush.msra.mxu0 0.0
      %779 = vmatpush.msra.mxu0 0.0
      %780 = vmatpush.msra.mxu0 0.0
      %781 = vmatpush.msra.mxu0 0.0
      %782 = vmatpush.msra.mxu0 0.0
      %783 = vmatpush.msra.mxu0 0.0
      %784 = vmatpush.msra.mxu0 %v436
      %785 = vmatmul.f32.gmra.mxu0 %v767
      %v786 = vpop.f32.mrf.mxu0
      %v787 = vadd.f32 0.0, %v786
      %788 = vdwg.mxu0
      %789 = vmatpush.msra.mxu0 0.0
      %790 = vmatpush.msra.mxu0 0.0
      %791 = vmatpush.msra.mxu0 0.0
      %792 = vmatpush.msra.mxu0 0.0
      %793 = vmatpush.msra.mxu0 0.0
      %794 = vmatpush.msra.mxu0 0.0
      %795 = vmatpush.msra.mxu0 0.0
      %796 = vmatpush.msra.mxu0 0.0
      %797 = vmatpush.msra.mxu0 0.0
      %798 = vmatpush.msra.mxu0 0.0
      %799 = vmatpush.msra.mxu0 0.0
      %800 = vmatpush.msra.mxu0 0.0
      %801 = vmatpush.msra.mxu0 0.0
      %802 = vmatpush.msra.mxu0 0.0
      %803 = vmatpush.msra.mxu0 0.0
      %804 = vmatpush.msra.mxu0 %v437
      %805 = vmatmul.f32.gmra.mxu0 %v767
      %v806 = vpop.f32.mrf.mxu0
      %v807 = vadd.f32 0.0, %v806
      %808 = vdwg.mxu0
      %809 = vmatpush.msra.mxu0 0.0
      %810 = vmatpush.msra.mxu0 0.0
      %811 = vmatpush.msra.mxu0 0.0
      %812 = vmatpush.msra.mxu0 0.0
      %813 = vmatpush.msra.mxu0 0.0
      %814 = vmatpush.msra.mxu0 0.0
      %815 = vmatpush.msra.mxu0 0.0
      %816 = vmatpush.msra.mxu0 0.0
      %817 = vmatpush.msra.mxu0 0.0
      %818 = vmatpush.msra.mxu0 0.0
      %819 = vmatpush.msra.mxu0 0.0
      %820 = vmatpush.msra.mxu0 0.0
      %821 = vmatpush.msra.mxu0 0.0
      %822 = vmatpush.msra.mxu0 0.0
      %823 = vmatpush.msra.mxu0 0.0
      %824 = vmatpush.msra.mxu0 %v438
      %825 = vmatmul.f32.gmra.mxu0 %v767
      %v826 = vpop.f32.mrf.mxu0
      %v827 = vadd.f32 0.0, %v826
      %828 = vdwg.mxu0
      %v829 = vadd.f32 %v762, %v787
      %v830 = vadd.f32 %v763, %v807
      %v831 = vadd.f32 %v764, %v827
      %v832 = vld [vmem:[%s2 + $0x28] sm:$0xff]
      %v833 = vld [vmem:[%s408 + $0x8] sm:$0xff]
      %v834 = vld [vmem:[%s408 + $0x10] sm:$0xff]
      %v835 = vld [vmem:[%s408 + $0x18] sm:$0xff]
      %v836 = vld [vmem:[%s408 + $0x20] sm:$0xff]
      %841 = vrot.lane.b32.xlu0 %v833, 127
      %v842 = vpop.permute.xlu0 %841
      %843 = vrot.lane.b32.xlu0 %v834, 127
      %v844 = vpop.permute.xlu0 %843
      %845 = vrot.lane.b32.xlu0 %v835, 127
      %v846 = vpop.permute.xlu0 %845
      %847 = vrot.lane.b32.xlu0 %v836, 127
      %v848 = vpop.permute.xlu0 %847
      %vm849 = vcmask 1039360
      %v850 = vsel %vm849, %v842, %v844
      %v851 = vsel %vm849, %v844, %v846
      %v852 = vsel %vm849, %v846, %v848
      %v857 = vsel %vm459, %v832, 0
      %859 = vmatpush.msra.mxu0 0.0
      %860 = vmatpush.msra.mxu0 0.0
      %861 = vmatpush.msra.mxu0 0.0
      %862 = vmatpush.msra.mxu0 0.0
      %863 = vmatpush.msra.mxu0 0.0
      %864 = vmatpush.msra.mxu0 0.0
      %865 = vmatpush.msra.mxu0 0.0
      %866 = vmatpush.msra.mxu0 0.0
      %867 = vmatpush.msra.mxu0 0.0
      %868 = vmatpush.msra.mxu0 0.0
      %869 = vmatpush.msra.mxu0 0.0
      %870 = vmatpush.msra.mxu0 0.0
      %871 = vmatpush.msra.mxu0 0.0
      %872 = vmatpush.msra.mxu0 0.0
      %873 = vmatpush.msra.mxu0 0.0
      %874 = vmatpush.msra.mxu0 %v850
      %875 = vmatmul.f32.gmra.mxu0 %v857
      %v876 = vpop.f32.mrf.mxu0
      %v877 = vadd.f32 0.0, %v876
      %878 = vdwg.mxu0
      %879 = vmatpush.msra.mxu0 0.0
      %880 = vmatpush.msra.mxu0 0.0
      %881 = vmatpush.msra.mxu0 0.0
      %882 = vmatpush.msra.mxu0 0.0
      %883 = vmatpush.msra.mxu0 0.0
      %884 = vmatpush.msra.mxu0 0.0
      %885 = vmatpush.msra.mxu0 0.0
      %886 = vmatpush.msra.mxu0 0.0
      %887 = vmatpush.msra.mxu0 0.0
      %888 = vmatpush.msra.mxu0 0.0
      %889 = vmatpush.msra.mxu0 0.0
      %890 = vmatpush.msra.mxu0 0.0
      %891 = vmatpush.msra.mxu0 0.0
      %892 = vmatpush.msra.mxu0 0.0
      %893 = vmatpush.msra.mxu0 0.0
      %894 = vmatpush.msra.mxu0 %v851
      %895 = vmatmul.f32.gmra.mxu0 %v857
      %v896 = vpop.f32.mrf.mxu0
      %v897 = vadd.f32 0.0, %v896
      %898 = vdwg.mxu0
      %899 = vmatpush.msra.mxu0 0.0
      %900 = vmatpush.msra.mxu0 0.0
      %901 = vmatpush.msra.mxu0 0.0
      %902 = vmatpush.msra.mxu0 0.0
      %903 = vmatpush.msra.mxu0 0.0
      %904 = vmatpush.msra.mxu0 0.0
      %905 = vmatpush.msra.mxu0 0.0
      %906 = vmatpush.msra.mxu0 0.0
      %907 = vmatpush.msra.mxu0 0.0
      %908 = vmatpush.msra.mxu0 0.0
      %909 = vmatpush.msra.mxu0 0.0
      %910 = vmatpush.msra.mxu0 0.0
      %911 = vmatpush.msra.mxu0 0.0
      %912 = vmatpush.msra.mxu0 0.0
      %913 = vmatpush.msra.mxu0 0.0
      %914 = vmatpush.msra.mxu0 %v852
      %915 = vmatmul.f32.gmra.mxu0 %v857
      %v916 = vpop.f32.mrf.mxu0
      %v917 = vadd.f32 0.0, %v916
      %918 = vdwg.mxu0
      %v919 = vadd.f32 %v829, %v877
      %v920 = vadd.f32 %v830, %v897
      %v921 = vadd.f32 %v831, %v917
      %v922 = vld [vmem:[%s2 + $0x30] sm:$0xff]
      %923 = vrot.lane.b32.xlu0 %v833, 111
      %v924 = vpop.permute.xlu0 %923
      %925 = vrot.lane.b32.xlu0 %v834, 111
      %v926 = vpop.permute.xlu0 %925
      %927 = vrot.lane.b32.xlu0 %v835, 111
      %v928 = vpop.permute.xlu0 %927
      %929 = vrot.lane.b32.xlu0 %v836, 111
      %v930 = vpop.permute.xlu0 %929
      %vm931 = vcmask 908288
      %v932 = vsel %vm931, %v924, %v926
      %v933 = vsel %vm931, %v926, %v928
      %v934 = vsel %vm931, %v928, %v930
      %v939 = vsel %vm459, %v922, 0
      %941 = vmatpush.msra.mxu0 0.0
      %942 = vmatpush.msra.mxu0 0.0
      %943 = vmatpush.msra.mxu0 0.0
      %944 = vmatpush.msra.mxu0 0.0
      %945 = vmatpush.msra.mxu0 0.0
      %946 = vmatpush.msra.mxu0 0.0
      %947 = vmatpush.msra.mxu0 0.0
      %948 = vmatpush.msra.mxu0 0.0
      %949 = vmatpush.msra.mxu0 0.0
      %950 = vmatpush.msra.mxu0 0.0
      %951 = vmatpush.msra.mxu0 0.0
      %952 = vmatpush.msra.mxu0 0.0
      %953 = vmatpush.msra.mxu0 0.0
      %954 = vmatpush.msra.mxu0 0.0
      %955 = vmatpush.msra.mxu0 0.0
      %956 = vmatpush.msra.mxu0 %v932
      %957 = vmatmul.f32.gmra.mxu0 %v939
      %v958 = vpop.f32.mrf.mxu0
      %v959 = vadd.f32 0.0, %v958
      %960 = vdwg.mxu0
      %961 = vmatpush.msra.mxu0 0.0
      %962 = vmatpush.msra.mxu0 0.0
      %963 = vmatpush.msra.mxu0 0.0
      %964 = vmatpush.msra.mxu0 0.0
      %965 = vmatpush.msra.mxu0 0.0
      %966 = vmatpush.msra.mxu0 0.0
      %967 = vmatpush.msra.mxu0 0.0
      %968 = vmatpush.msra.mxu0 0.0
      %969 = vmatpush.msra.mxu0 0.0
      %970 = vmatpush.msra.mxu0 0.0
      %971 = vmatpush.msra.mxu0 0.0
      %972 = vmatpush.msra.mxu0 0.0
      %973 = vmatpush.msra.mxu0 0.0
      %974 = vmatpush.msra.mxu0 0.0
      %975 = vmatpush.msra.mxu0 0.0
      %976 = vmatpush.msra.mxu0 %v933
      %977 = vmatmul.f32.gmra.mxu0 %v939
      %v978 = vpop.f32.mrf.mxu0
      %v979 = vadd.f32 0.0, %v978
      %980 = vdwg.mxu0
      %981 = vmatpush.msra.mxu0 0.0
      %982 = vmatpush.msra.mxu0 0.0
      %983 = vmatpush.msra.mxu0 0.0
      %984 = vmatpush.msra.mxu0 0.0
      %985 = vmatpush.msra.mxu0 0.0
      %986 = vmatpush.msra.mxu0 0.0
      %987 = vmatpush.msra.mxu0 0.0
      %988 = vmatpush.msra.mxu0 0.0
      %989 = vmatpush.msra.mxu0 0.0
      %990 = vmatpush.msra.mxu0 0.0
      %991 = vmatpush.msra.mxu0 0.0
      %992 = vmatpush.msra.mxu0 0.0
      %993 = vmatpush.msra.mxu0 0.0
      %994 = vmatpush.msra.mxu0 0.0
      %995 = vmatpush.msra.mxu0 0.0
      %996 = vmatpush.msra.mxu0 %v934
      %997 = vmatmul.f32.gmra.mxu0 %v939
      %v998 = vpop.f32.mrf.mxu0
      %v999 = vadd.f32 0.0, %v998
      %1000 = vdwg.mxu0
      %v1001 = vadd.f32 %v919, %v959
      %v1002 = vadd.f32 %v920, %v979
      %v1003 = vadd.f32 %v921, %v999
      %v1004 = vld [vmem:[%s2 + $0x38] sm:$0xff]
      %1005 = vrot.lane.b32.xlu0 %v833, 110
      %v1006 = vpop.permute.xlu0 %1005
      %1007 = vrot.lane.b32.xlu0 %v834, 110
      %v1008 = vpop.permute.xlu0 %1007
      %1009 = vrot.lane.b32.xlu0 %v835, 110
      %v1010 = vpop.permute.xlu0 %1009
      %1011 = vrot.lane.b32.xlu0 %v836, 110
      %v1012 = vpop.permute.xlu0 %1011
      %vm1013 = vcmask 900096
      %v1014 = vsel %vm1013, %v1006, %v1008
      %v1015 = vsel %vm1013, %v1008, %v1010
      %v1016 = vsel %vm1013, %v1010, %v1012
      %v1021 = vsel %vm459, %v1004, 0
      %1023 = vmatpush.msra.mxu0 0.0
      %1024 = vmatpush.msra.mxu0 0.0
      %1025 = vmatpush.msra.mxu0 0.0
      %1026 = vmatpush.msra.mxu0 0.0
      %1027 = vmatpush.msra.mxu0 0.0
      %1028 = vmatpush.msra.mxu0 0.0
      %1029 = vmatpush.msra.mxu0 0.0
      %1030 = vmatpush.msra.mxu0 0.0
      %1031 = vmatpush.msra.mxu0 0.0
      %1032 = vmatpush.msra.mxu0 0.0
      %1033 = vmatpush.msra.mxu0 0.0
      %1034 = vmatpush.msra.mxu0 0.0
      %1035 = vmatpush.msra.mxu0 0.0
      %1036 = vmatpush.msra.mxu0 0.0
      %1037 = vmatpush.msra.mxu0 0.0
      %1038 = vmatpush.msra.mxu0 %v1014
      %1039 = vmatmul.f32.gmra.mxu0 %v1021
      %v1040 = vpop.f32.mrf.mxu0
      %v1041 = vadd.f32 0.0, %v1040
      %1042 = vdwg.mxu0
      %1043 = vmatpush.msra.mxu0 0.0
      %1044 = vmatpush.msra.mxu0 0.0
      %1045 = vmatpush.msra.mxu0 0.0
      %1046 = vmatpush.msra.mxu0 0.0
      %1047 = vmatpush.msra.mxu0 0.0
      %1048 = vmatpush.msra.mxu0 0.0
      %1049 = vmatpush.msra.mxu0 0.0
      %1050 = vmatpush.msra.mxu0 0.0
      %1051 = vmatpush.msra.mxu0 0.0
      %1052 = vmatpush.msra.mxu0 0.0
      %1053 = vmatpush.msra.mxu0 0.0
      %1054 = vmatpush.msra.mxu0 0.0
      %1055 = vmatpush.msra.mxu0 0.0
      %1056 = vmatpush.msra.mxu0 0.0
      %1057 = vmatpush.msra.mxu0 0.0
      %1058 = vmatpush.msra.mxu0 %v1015
      %1059 = vmatmul.f32.gmra.mxu0 %v1021
      %v1060 = vpop.f32.mrf.mxu0
      %v1061 = vadd.f32 0.0, %v1060
      %1062 = vdwg.mxu0
      %1063 = vmatpush.msra.mxu0 0.0
      %1064 = vmatpush.msra.mxu0 0.0
      %1065 = vmatpush.msra.mxu0 0.0
      %1066 = vmatpush.msra.mxu0 0.0
      %1067 = vmatpush.msra.mxu0 0.0
      %1068 = vmatpush.msra.mxu0 0.0
      %1069 = vmatpush.msra.mxu0 0.0
      %1070 = vmatpush.msra.mxu0 0.0
      %1071 = vmatpush.msra.mxu0 0.0
      %1072 = vmatpush.msra.mxu0 0.0
      %1073 = vmatpush.msra.mxu0 0.0
      %1074 = vmatpush.msra.mxu0 0.0
      %1075 = vmatpush.msra.mxu0 0.0
      %1076 = vmatpush.msra.mxu0 0.0
      %1077 = vmatpush.msra.mxu0 0.0
      %1078 = vmatpush.msra.mxu0 %v1016
      %1079 = vmatmul.f32.gmra.mxu0 %v1021
      %v1080 = vpop.f32.mrf.mxu0
      %v1081 = vadd.f32 0.0, %v1080
      %1082 = vdwg.mxu0
      %v1083 = vadd.f32 %v1001, %v1041
      %v1084 = vadd.f32 %v1002, %v1061
      %v1085 = vadd.f32 %v1003, %v1081
      %v1086 = vld [vmem:[%s2 + $0x40] sm:$0xff]
      %1087 = vrot.lane.b32.xlu0 %v833, 109
      %v1088 = vpop.permute.xlu0 %1087
      %1089 = vrot.lane.b32.xlu0 %v834, 109
      %v1090 = vpop.permute.xlu0 %1089
      %1091 = vrot.lane.b32.xlu0 %v835, 109
      %v1092 = vpop.permute.xlu0 %1091
      %1093 = vrot.lane.b32.xlu0 %v836, 109
      %v1094 = vpop.permute.xlu0 %1093
      %vm1095 = vcmask 891904
      %v1096 = vsel %vm1095, %v1088, %v1090
      %v1097 = vsel %vm1095, %v1090, %v1092
      %v1098 = vsel %vm1095, %v1092, %v1094
      %v1103 = vsel %vm459, %v1086, 0
      %1105 = vmatpush.msra.mxu0 0.0
      %1106 = vmatpush.msra.mxu0 0.0
      %1107 = vmatpush.msra.mxu0 0.0
      %1108 = vmatpush.msra.mxu0 0.0
      %1109 = vmatpush.msra.mxu0 0.0
      %1110 = vmatpush.msra.mxu0 0.0
      %1111 = vmatpush.msra.mxu0 0.0
      %1112 = vmatpush.msra.mxu0 0.0
      %1113 = vmatpush.msra.mxu0 0.0
      %1114 = vmatpush.msra.mxu0 0.0
      %1115 = vmatpush.msra.mxu0 0.0
      %1116 = vmatpush.msra.mxu0 0.0
      %1117 = vmatpush.msra.mxu0 0.0
      %1118 = vmatpush.msra.mxu0 0.0
      %1119 = vmatpush.msra.mxu0 0.0
      %1120 = vmatpush.msra.mxu0 %v1096
      %1121 = vmatmul.f32.gmra.mxu0 %v1103
      %v1122 = vpop.f32.mrf.mxu0
      %v1123 = vadd.f32 0.0, %v1122
      %1124 = vdwg.mxu0
      %1125 = vmatpush.msra.mxu0 0.0
      %1126 = vmatpush.msra.mxu0 0.0
      %1127 = vmatpush.msra.mxu0 0.0
      %1128 = vmatpush.msra.mxu0 0.0
      %1129 = vmatpush.msra.mxu0 0.0
      %1130 = vmatpush.msra.mxu0 0.0
      %1131 = vmatpush.msra.mxu0 0.0
      %1132 = vmatpush.msra.mxu0 0.0
      %1133 = vmatpush.msra.mxu0 0.0
      %1134 = vmatpush.msra.mxu0 0.0
      %1135 = vmatpush.msra.mxu0 0.0
      %1136 = vmatpush.msra.mxu0 0.0
      %1137 = vmatpush.msra.mxu0 0.0
      %1138 = vmatpush.msra.mxu0 0.0
      %1139 = vmatpush.msra.mxu0 0.0
      %1140 = vmatpush.msra.mxu0 %v1097
      %1141 = vmatmul.f32.gmra.mxu0 %v1103
      %v1142 = vpop.f32.mrf.mxu0
      %v1143 = vadd.f32 0.0, %v1142
      %1144 = vdwg.mxu0
      %1145 = vmatpush.msra.mxu0 0.0
      %1146 = vmatpush.msra.mxu0 0.0
      %1147 = vmatpush.msra.mxu0 0.0
      %1148 = vmatpush.msra.mxu0 0.0
      %1149 = vmatpush.msra.mxu0 0.0
      %1150 = vmatpush.msra.mxu0 0.0
      %1151 = vmatpush.msra.mxu0 0.0
      %1152 = vmatpush.msra.mxu0 0.0
      %1153 = vmatpush.msra.mxu0 0.0
      %1154 = vmatpush.msra.mxu0 0.0
      %1155 = vmatpush.msra.mxu0 0.0
      %1156 = vmatpush.msra.mxu0 0.0
      %1157 = vmatpush.msra.mxu0 0.0
      %1158 = vmatpush.msra.mxu0 0.0
      %1159 = vmatpush.msra.mxu0 0.0
      %1160 = vmatpush.msra.mxu0 %v1098
      %1161 = vmatmul.f32.gmra.mxu0 %v1103
      %v1162 = vpop.f32.mrf.mxu0
      %v1163 = vadd.f32 0.0, %v1162
      %1164 = vdwg.mxu0
      %v1165 = vadd.f32 %v1083, %v1123
      %v1166 = vadd.f32 %v1084, %v1143
      %v1167 = vadd.f32 %v1085, %v1163
      %v1168 = vld [vmem:[%s3] sm:$0xff]
      %1170 = vset.pattern.permute.xlu0 0
      %1171 = vperm.xlu0 %1170, %v1168
      %v1172 = vpop.permute.xlu0 %1171
      %v1174 = vadd.f32 %v1165, %v1172
      %v1175 = vadd.f32 %v1166, %v1172
      %v1176 = vadd.f32 %v1167, %v1172
      %v1177 = vmax.f32 %v1174, 0.0
      %v1178 = vmax.f32 %v1175, 0.0
      %v1179 = vmax.f32 %v1176, 0.0
      %v1180 = vsel %vm433, 1, 0
      %v1181 = vperm.slane %v1180, 0
      %v1182 = vperm.slane %v1180, 1
      %v1183 = vperm.slane %v1180, 2
      %vm1184 = vcmp.eq.s32.totalorder %v1181, 1
      %vm1185 = vcmp.eq.s32.totalorder %v1182, 1
      %vm1186 = vcmp.eq.s32.totalorder %v1183, 1
      %v1187 = vsel %vm1184, %v1177, 0.0
      %v1188 = vsel %vm1185, %v1178, 0.0
      %v1189 = vsel %vm1186, %v1179, 0.0
      %1190 = vst [vmem:[#allocation2 + $0x8] sm:$0xff] %v1187
      %1191 = vst [vmem:[#allocation2 + $0x10] sm:$0xff] %v1188
      %1192 = vst [vmem:[#allocation2 + $0x18] sm:$0xff] %v1189
      %v1193 = vld [vmem:[%s4] sm:$0xff]
      %v1194 = vld [vmem:[%s4 + $0x8] sm:$0xff]
      %v1195 = vld [vmem:[#allocation2] sm:$0xff]
      %v1196 = vld [vmem:[#allocation2 + $0x8] sm:$0xff]
      %v1197 = vld [vmem:[#allocation2 + $0x10] sm:$0xff]
      %v1198 = vld [vmem:[#allocation2 + $0x18] sm:$0xff]
      %v1199 = vld [vmem:[%s4 + $0x10] sm:$0xff]
      %v1200 = vld [vmem:[%s4 + $0x18] sm:$0xff]
      %1205 = vrot.lane.b32.xlu0 %v1195, 18
      %v1206 = vpop.permute.xlu0 %1205
      %1207 = vrot.lane.b32.xlu0 %v1196, 18
      %v1208 = vpop.permute.xlu0 %1207
      %1209 = vrot.lane.b32.xlu0 %v1197, 18
      %v1210 = vpop.permute.xlu0 %1209
      %1211 = vrot.lane.b32.xlu0 %v1198, 18
      %v1212 = vpop.permute.xlu0 %1211
      %v1213 = vsel %vm452, %v1206, %v1208
      %v1214 = vsel %vm452, %v1208, %v1210
      %v1215 = vsel %vm452, %v1210, %v1212
      %v1220 = vsel %vm459, %v1199, 0
      %v1223 = vsel %vm459, %v1200, 0
      %1225 = vmatpush.msra.mxu0 0.0
      %1226 = vmatpush.msra.mxu0 0.0
      %1227 = vmatpush.msra.mxu0 0.0
      %1228 = vmatpush.msra.mxu0 0.0
      %1229 = vmatpush.msra.mxu0 0.0
      %1230 = vmatpush.msra.mxu0 0.0
      %1231 = vmatpush.msra.mxu0 0.0
      %1232 = vmatpush.msra.mxu0 0.0
      %1233 = vmatpush.msra.mxu0 0.0
      %1234 = vmatpush.msra.mxu0 0.0
      %1235 = vmatpush.msra.mxu0 0.0
      %1236 = vmatpush.msra.mxu0 0.0
      %1237 = vmatpush.msra.mxu0 0.0
      %1238 = vmatpush.msra.mxu0 0.0
      %1239 = vmatpush.msra.mxu0 0.0
      %1240 = vmatpush.msra.mxu0 %v1213
      %1241 = vmatmul.f32.gmra.mxu0 %v1220
      %v1242 = vpop.f32.mrf.mxu0
      %v1243 = vadd.f32 0.0, %v1242
      %1244 = vmatmul.f32.gmra.mxu0 %v1223
      %v1245 = vpop.f32.mrf.mxu0
      %v1246 = vadd.f32 0.0, %v1245
      %1247 = vdwg.mxu0
      %1248 = vmatpush.msra.mxu0 0.0
      %1249 = vmatpush.msra.mxu0 0.0
      %1250 = vmatpush.msra.mxu0 0.0
      %1251 = vmatpush.msra.mxu0 0.0
      %1252 = vmatpush.msra.mxu0 0.0
      %1253 = vmatpush.msra.mxu0 0.0
      %1254 = vmatpush.msra.mxu0 0.0
      %1255 = vmatpush.msra.mxu0 0.0
      %1256 = vmatpush.msra.mxu0 0.0
      %1257 = vmatpush.msra.mxu0 0.0
      %1258 = vmatpush.msra.mxu0 0.0
      %1259 = vmatpush.msra.mxu0 0.0
      %1260 = vmatpush.msra.mxu0 0.0
      %1261 = vmatpush.msra.mxu0 0.0
      %1262 = vmatpush.msra.mxu0 0.0
      %1263 = vmatpush.msra.mxu0 %v1214
      %1264 = vmatmul.f32.gmra.mxu0 %v1220
      %v1265 = vpop.f32.mrf.mxu0
      %v1266 = vadd.f32 0.0, %v1265
      %1267 = vmatmul.f32.gmra.mxu0 %v1223
      %v1268 = vpop.f32.mrf.mxu0
      %v1269 = vadd.f32 0.0, %v1268
      %1270 = vdwg.mxu0
      %1271 = vmatpush.msra.mxu0 0.0
      %1272 = vmatpush.msra.mxu0 0.0
      %1273 = vmatpush.msra.mxu0 0.0
      %1274 = vmatpush.msra.mxu0 0.0
      %1275 = vmatpush.msra.mxu0 0.0
      %1276 = vmatpush.msra.mxu0 0.0
      %1277 = vmatpush.msra.mxu0 0.0
      %1278 = vmatpush.msra.mxu0 0.0
      %1279 = vmatpush.msra.mxu0 0.0
      %1280 = vmatpush.msra.mxu0 0.0
      %1281 = vmatpush.msra.mxu0 0.0
      %1282 = vmatpush.msra.mxu0 0.0
      %1283 = vmatpush.msra.mxu0 0.0
      %1284 = vmatpush.msra.mxu0 0.0
      %1285 = vmatpush.msra.mxu0 0.0
      %1286 = vmatpush.msra.mxu0 %v1215
      %1287 = vmatmul.f32.gmra.mxu0 %v1220
      %v1288 = vpop.f32.mrf.mxu0
      %v1289 = vadd.f32 0.0, %v1288
      %1290 = vmatmul.f32.gmra.mxu0 %v1223
      %v1291 = vpop.f32.mrf.mxu0
      %v1292 = vadd.f32 0.0, %v1291
      %1293 = vdwg.mxu0
      %1294 = vrot.lane.b32.xlu0 %v1195, 19
      %v1295 = vpop.permute.xlu0 %1294
      %1296 = vrot.lane.b32.xlu0 %v1196, 19
      %v1297 = vpop.permute.xlu0 %1296
      %1298 = vrot.lane.b32.xlu0 %v1197, 19
      %v1299 = vpop.permute.xlu0 %1298
      %1300 = vrot.lane.b32.xlu0 %v1198, 19
      %v1301 = vpop.permute.xlu0 %1300
      %v1302 = vsel %vm531, %v1295, %v1297
      %v1303 = vsel %vm531, %v1297, %v1299
      %v1304 = vsel %vm531, %v1299, %v1301
      %v1309 = vsel %vm459, %v1193, 0
      %v1312 = vsel %vm459, %v1194, 0
      %1314 = vmatpush.msra.mxu0 0.0
      %1315 = vmatpush.msra.mxu0 0.0
      %1316 = vmatpush.msra.mxu0 0.0
      %1317 = vmatpush.msra.mxu0 0.0
      %1318 = vmatpush.msra.mxu0 0.0
      %1319 = vmatpush.msra.mxu0 0.0
      %1320 = vmatpush.msra.mxu0 0.0
      %1321 = vmatpush.msra.mxu0 0.0
      %1322 = vmatpush.msra.mxu0 0.0
      %1323 = vmatpush.msra.mxu0 0.0
      %1324 = vmatpush.msra.mxu0 0.0
      %1325 = vmatpush.msra.mxu0 0.0
      %1326 = vmatpush.msra.mxu0 0.0
      %1327 = vmatpush.msra.mxu0 0.0
      %1328 = vmatpush.msra.mxu0 0.0
      %1329 = vmatpush.msra.mxu0 %v1302
      %1330 = vmatmul.f32.gmra.mxu0 %v1309
      %v1331 = vpop.f32.mrf.mxu0
      %v1332 = vadd.f32 %v1243, %v1331
      %1333 = vmatmul.f32.gmra.mxu0 %v1312
      %v1334 = vpop.f32.mrf.mxu0
      %v1335 = vadd.f32 %v1246, %v1334
      %1336 = vdwg.mxu0
      %1337 = vmatpush.msra.mxu0 0.0
      %1338 = vmatpush.msra.mxu0 0.0
      %1339 = vmatpush.msra.mxu0 0.0
      %1340 = vmatpush.msra.mxu0 0.0
      %1341 = vmatpush.msra.mxu0 0.0
      %1342 = vmatpush.msra.mxu0 0.0
      %1343 = vmatpush.msra.mxu0 0.0
      %1344 = vmatpush.msra.mxu0 0.0
      %1345 = vmatpush.msra.mxu0 0.0
      %1346 = vmatpush.msra.mxu0 0.0
      %1347 = vmatpush.msra.mxu0 0.0
      %1348 = vmatpush.msra.mxu0 0.0
      %1349 = vmatpush.msra.mxu0 0.0
      %1350 = vmatpush.msra.mxu0 0.0
      %1351 = vmatpush.msra.mxu0 0.0
      %1352 = vmatpush.msra.mxu0 %v1303
      %1353 = vmatmul.f32.gmra.mxu0 %v1309
      %v1354 = vpop.f32.mrf.mxu0
      %v1355 = vadd.f32 %v1266, %v1354
      %1356 = vmatmul.f32.gmra.mxu0 %v1312
      %v1357 = vpop.f32.mrf.mxu0
      %v1358 = vadd.f32 %v1269, %v1357
      %1359 = vdwg.mxu0
      %1360 = vmatpush.msra.mxu0 0.0
      %1361 = vmatpush.msra.mxu0 0.0
      %1362 = vmatpush.msra.mxu0 0.0
      %1363 = vmatpush.msra.mxu0 0.0
      %1364 = vmatpush.msra.mxu0 0.0
      %1365 = vmatpush.msra.mxu0 0.0
      %1366 = vmatpush.msra.mxu0 0.0
      %1367 = vmatpush.msra.mxu0 0.0
      %1368 = vmatpush.msra.mxu0 0.0
      %1369 = vmatpush.msra.mxu0 0.0
      %1370 = vmatpush.msra.mxu0 0.0
      %1371 = vmatpush.msra.mxu0 0.0
      %1372 = vmatpush.msra.mxu0 0.0
      %1373 = vmatpush.msra.mxu0 0.0
      %1374 = vmatpush.msra.mxu0 0.0
      %1375 = vmatpush.msra.mxu0 %v1304
      %1376 = vmatmul.f32.gmra.mxu0 %v1309
      %v1377 = vpop.f32.mrf.mxu0
      %v1378 = vadd.f32 %v1289, %v1377
      %1379 = vmatmul.f32.gmra.mxu0 %v1312
      %v1380 = vpop.f32.mrf.mxu0
      %v1381 = vadd.f32 %v1292, %v1380
      %1382 = vdwg.mxu0
      %v1383 = vld [vmem:[%s4 + $0x20] sm:$0xff]
      %v1384 = vld [vmem:[%s4 + $0x28] sm:$0xff]
      %1385 = vrot.lane.b32.xlu0 %v1195, 17
      %v1386 = vpop.permute.xlu0 %1385
      %1387 = vrot.lane.b32.xlu0 %v1196, 17
      %v1388 = vpop.permute.xlu0 %1387
      %1389 = vrot.lane.b32.xlu0 %v1197, 17
      %v1390 = vpop.permute.xlu0 %1389
      %1391 = vrot.lane.b32.xlu0 %v1198, 17
      %v1392 = vpop.permute.xlu0 %1391
      %v1393 = vsel %vm610, %v1386, %v1388
      %v1394 = vsel %vm610, %v1388, %v1390
      %v1395 = vsel %vm610, %v1390, %v1392
      %v1400 = vsel %vm459, %v1383, 0
      %v1403 = vsel %vm459, %v1384, 0
      %1405 = vmatpush.msra.mxu0 0.0
      %1406 = vmatpush.msra.mxu0 0.0
      %1407 = vmatpush.msra.mxu0 0.0
      %1408 = vmatpush.msra.mxu0 0.0
      %1409 = vmatpush.msra.mxu0 0.0
      %1410 = vmatpush.msra.mxu0 0.0
      %1411 = vmatpush.msra.mxu0 0.0
      %1412 = vmatpush.msra.mxu0 0.0
      %1413 = vmatpush.msra.mxu0 0.0
      %1414 = vmatpush.msra.mxu0 0.0
      %1415 = vmatpush.msra.mxu0 0.0
      %1416 = vmatpush.msra.mxu0 0.0
      %1417 = vmatpush.msra.mxu0 0.0
      %1418 = vmatpush.msra.mxu0 0.0
      %1419 = vmatpush.msra.mxu0 0.0
      %1420 = vmatpush.msra.mxu0 %v1393
      %1421 = vmatmul.f32.gmra.mxu0 %v1400
      %v1422 = vpop.f32.mrf.mxu0
      %v1423 = vadd.f32 0.0, %v1422
      %1424 = vmatmul.f32.gmra.mxu0 %v1403
      %v1425 = vpop.f32.mrf.mxu0
      %v1426 = vadd.f32 0.0, %v1425
      %1427 = vdwg.mxu0
      %1428 = vmatpush.msra.mxu0 0.0
      %1429 = vmatpush.msra.mxu0 0.0
      %1430 = vmatpush.msra.mxu0 0.0
      %1431 = vmatpush.msra.mxu0 0.0
      %1432 = vmatpush.msra.mxu0 0.0
      %1433 = vmatpush.msra.mxu0 0.0
      %1434 = vmatpush.msra.mxu0 0.0
      %1435 = vmatpush.msra.mxu0 0.0
      %1436 = vmatpush.msra.mxu0 0.0
      %1437 = vmatpush.msra.mxu0 0.0
      %1438 = vmatpush.msra.mxu0 0.0
      %1439 = vmatpush.msra.mxu0 0.0
      %1440 = vmatpush.msra.mxu0 0.0
      %1441 = vmatpush.msra.mxu0 0.0
      %1442 = vmatpush.msra.mxu0 0.0
      %1443 = vmatpush.msra.mxu0 %v1394
      %1444 = vmatmul.f32.gmra.mxu0 %v1400
      %v1445 = vpop.f32.mrf.mxu0
      %v1446 = vadd.f32 0.0, %v1445
      %1447 = vmatmul.f32.gmra.mxu0 %v1403
      %v1448 = vpop.f32.mrf.mxu0
      %v1449 = vadd.f32 0.0, %v1448
      %1450 = vdwg.mxu0
      %1451 = vmatpush.msra.mxu0 0.0
      %1452 = vmatpush.msra.mxu0 0.0
      %1453 = vmatpush.msra.mxu0 0.0
      %1454 = vmatpush.msra.mxu0 0.0
      %1455 = vmatpush.msra.mxu0 0.0
      %1456 = vmatpush.msra.mxu0 0.0
      %1457 = vmatpush.msra.mxu0 0.0
      %1458 = vmatpush.msra.mxu0 0.0
      %1459 = vmatpush.msra.mxu0 0.0
      %1460 = vmatpush.msra.mxu0 0.0
      %1461 = vmatpush.msra.mxu0 0.0
      %1462 = vmatpush.msra.mxu0 0.0
      %1463 = vmatpush.msra.mxu0 0.0
      %1464 = vmatpush.msra.mxu0 0.0
      %1465 = vmatpush.msra.mxu0 0.0
      %1466 = vmatpush.msra.mxu0 %v1395
      %1467 = vmatmul.f32.gmra.mxu0 %v1400
      %v1468 = vpop.f32.mrf.mxu0
      %v1469 = vadd.f32 0.0, %v1468
      %1470 = vmatmul.f32.gmra.mxu0 %v1403
      %v1471 = vpop.f32.mrf.mxu0
      %v1472 = vadd.f32 0.0, %v1471
      %1473 = vdwg.mxu0
      %v1474 = vadd.f32 %v1332, %v1423
      %v1475 = vadd.f32 %v1355, %v1446
      %v1476 = vadd.f32 %v1378, %v1469
      %v1477 = vadd.f32 %v1335, %v1426
      %v1478 = vadd.f32 %v1358, %v1449
      %v1479 = vadd.f32 %v1381, %v1472
      %v1480 = vld [vmem:[%s4 + $0x30] sm:$0xff]
      %v1481 = vld [vmem:[%s4 + $0x38] sm:$0xff]
      %1482 = vrot.lane.b32.xlu0 %v1195, 1
      %v1483 = vpop.permute.xlu0 %1482
      %1484 = vrot.lane.b32.xlu0 %v1196, 1
      %v1485 = vpop.permute.xlu0 %1484
      %1486 = vrot.lane.b32.xlu0 %v1197, 1
      %v1487 = vpop.permute.xlu0 %1486
      %1488 = vrot.lane.b32.xlu0 %v1198, 1
      %v1489 = vpop.permute.xlu0 %1488
      %v1490 = vsel %vm692, %v1483, %v1485
      %v1491 = vsel %vm692, %v1485, %v1487
      %v1492 = vsel %vm692, %v1487, %v1489
      %v1497 = vsel %vm459, %v1480, 0
      %v1500 = vsel %vm459, %v1481, 0
      %1502 = vmatpush.msra.mxu0 0.0
      %1503 = vmatpush.msra.mxu0 0.0
      %1504 = vmatpush.msra.mxu0 0.0
      %1505 = vmatpush.msra.mxu0 0.0
      %1506 = vmatpush.msra.mxu0 0.0
      %1507 = vmatpush.msra.mxu0 0.0
      %1508 = vmatpush.msra.mxu0 0.0
      %1509 = vmatpush.msra.mxu0 0.0
      %1510 = vmatpush.msra.mxu0 0.0
      %1511 = vmatpush.msra.mxu0 0.0
      %1512 = vmatpush.msra.mxu0 0.0
      %1513 = vmatpush.msra.mxu0 0.0
      %1514 = vmatpush.msra.mxu0 0.0
      %1515 = vmatpush.msra.mxu0 0.0
      %1516 = vmatpush.msra.mxu0 0.0
      %1517 = vmatpush.msra.mxu0 %v1490
      %1518 = vmatmul.f32.gmra.mxu0 %v1497
      %v1519 = vpop.f32.mrf.mxu0
      %v1520 = vadd.f32 0.0, %v1519
      %1521 = vmatmul.f32.gmra.mxu0 %v1500
      %v1522 = vpop.f32.mrf.mxu0
      %v1523 = vadd.f32 0.0, %v1522
      %1524 = vdwg.mxu0
      %1525 = vmatpush.msra.mxu0 0.0
      %1526 = vmatpush.msra.mxu0 0.0
      %1527 = vmatpush.msra.mxu0 0.0
      %1528 = vmatpush.msra.mxu0 0.0
      %1529 = vmatpush.msra.mxu0 0.0
      %1530 = vmatpush.msra.mxu0 0.0
      %1531 = vmatpush.msra.mxu0 0.0
      %1532 = vmatpush.msra.mxu0 0.0
      %1533 = vmatpush.msra.mxu0 0.0
      %1534 = vmatpush.msra.mxu0 0.0
      %1535 = vmatpush.msra.mxu0 0.0
      %1536 = vmatpush.msra.mxu0 0.0
      %1537 = vmatpush.msra.mxu0 0.0
      %1538 = vmatpush.msra.mxu0 0.0
      %1539 = vmatpush.msra.mxu0 0.0
      %1540 = vmatpush.msra.mxu0 %v1491
      %1541 = vmatmul.f32.gmra.mxu0 %v1497
      %v1542 = vpop.f32.mrf.mxu0
      %v1543 = vadd.f32 0.0, %v1542
      %1544 = vmatmul.f32.gmra.mxu0 %v1500
      %v1545 = vpop.f32.mrf.mxu0
      %v1546 = vadd.f32 0.0, %v1545
      %1547 = vdwg.mxu0
      %1548 = vmatpush.msra.mxu0 0.0
      %1549 = vmatpush.msra.mxu0 0.0
      %1550 = vmatpush.msra.mxu0 0.0
      %1551 = vmatpush.msra.mxu0 0.0
      %1552 = vmatpush.msra.mxu0 0.0
      %1553 = vmatpush.msra.mxu0 0.0
      %1554 = vmatpush.msra.mxu0 0.0
      %1555 = vmatpush.msra.mxu0 0.0
      %1556 = vmatpush.msra.mxu0 0.0
      %1557 = vmatpush.msra.mxu0 0.0
      %1558 = vmatpush.msra.mxu0 0.0
      %1559 = vmatpush.msra.mxu0 0.0
      %1560 = vmatpush.msra.mxu0 0.0
      %1561 = vmatpush.msra.mxu0 0.0
      %1562 = vmatpush.msra.mxu0 0.0
      %1563 = vmatpush.msra.mxu0 %v1492
      %1564 = vmatmul.f32.gmra.mxu0 %v1497
      %v1565 = vpop.f32.mrf.mxu0
      %v1566 = vadd.f32 0.0, %v1565
      %1567 = vmatmul.f32.gmra.mxu0 %v1500
      %v1568 = vpop.f32.mrf.mxu0
      %v1569 = vadd.f32 0.0, %v1568
      %1570 = vdwg.mxu0
      %v1571 = vadd.f32 %v1474, %v1520
      %v1572 = vadd.f32 %v1475, %v1543
      %v1573 = vadd.f32 %v1476, %v1566
      %v1574 = vadd.f32 %v1477, %v1523
      %v1575 = vadd.f32 %v1478, %v1546
      %v1576 = vadd.f32 %v1479, %v1569
      %v1577 = vld [vmem:[%s4 + $0x40] sm:$0xff]
      %v1578 = vld [vmem:[%s4 + $0x48] sm:$0xff]
      %v1580 = vsel %vm459, %v1577, 0
      %v1583 = vsel %vm459, %v1578, 0
      %1585 = vmatpush.msra.mxu0 0.0
      %1586 = vmatpush.msra.mxu0 0.0
      %1587 = vmatpush.msra.mxu0 0.0
      %1588 = vmatpush.msra.mxu0 0.0
      %1589 = vmatpush.msra.mxu0 0.0
      %1590 = vmatpush.msra.mxu0 0.0
      %1591 = vmatpush.msra.mxu0 0.0
      %1592 = vmatpush.msra.mxu0 0.0
      %1593 = vmatpush.msra.mxu0 0.0
      %1594 = vmatpush.msra.mxu0 0.0
      %1595 = vmatpush.msra.mxu0 0.0
      %1596 = vmatpush.msra.mxu0 0.0
      %1597 = vmatpush.msra.mxu0 0.0
      %1598 = vmatpush.msra.mxu0 0.0
      %1599 = vmatpush.msra.mxu0 0.0
      %1600 = vmatpush.msra.mxu0 %v1196
      %1601 = vmatmul.f32.gmra.mxu0 %v1580
      %v1602 = vpop.f32.mrf.mxu0
      %v1603 = vadd.f32 0.0, %v1602
      %1604 = vmatmul.f32.gmra.mxu0 %v1583
      %v1605 = vpop.f32.mrf.mxu0
      %v1606 = vadd.f32 0.0, %v1605
      %1607 = vdwg.mxu0
      %1608 = vmatpush.msra.mxu0 0.0
      %1609 = vmatpush.msra.mxu0 0.0
      %1610 = vmatpush.msra.mxu0 0.0
      %1611 = vmatpush.msra.mxu0 0.0
      %1612 = vmatpush.msra.mxu0 0.0
      %1613 = vmatpush.msra.mxu0 0.0
      %1614 = vmatpush.msra.mxu0 0.0
      %1615 = vmatpush.msra.mxu0 0.0
      %1616 = vmatpush.msra.mxu0 0.0
      %1617 = vmatpush.msra.mxu0 0.0
      %1618 = vmatpush.msra.mxu0 0.0
      %1619 = vmatpush.msra.mxu0 0.0
      %1620 = vmatpush.msra.mxu0 0.0
      %1621 = vmatpush.msra.mxu0 0.0
      %1622 = vmatpush.msra.mxu0 0.0
      %1623 = vmatpush.msra.mxu0 %v1197
      %1624 = vmatmul.f32.gmra.mxu0 %v1580
      %v1625 = vpop.f32.mrf.mxu0
      %v1626 = vadd.f32 0.0, %v1625
      %1627 = vmatmul.f32.gmra.mxu0 %v1583
      %v1628 = vpop.f32.mrf.mxu0
      %v1629 = vadd.f32 0.0, %v1628
      %1630 = vdwg.mxu0
      %1631 = vmatpush.msra.mxu0 0.0
      %1632 = vmatpush.msra.mxu0 0.0
      %1633 = vmatpush.msra.mxu0 0.0
      %1634 = vmatpush.msra.mxu0 0.0
      %1635 = vmatpush.msra.mxu0 0.0
      %1636 = vmatpush.msra.mxu0 0.0
      %1637 = vmatpush.msra.mxu0 0.0
      %1638 = vmatpush.msra.mxu0 0.0
      %1639 = vmatpush.msra.mxu0 0.0
      %1640 = vmatpush.msra.mxu0 0.0
      %1641 = vmatpush.msra.mxu0 0.0
      %1642 = vmatpush.msra.mxu0 0.0
      %1643 = vmatpush.msra.mxu0 0.0
      %1644 = vmatpush.msra.mxu0 0.0
      %1645 = vmatpush.msra.mxu0 0.0
      %1646 = vmatpush.msra.mxu0 %v1198
      %1647 = vmatmul.f32.gmra.mxu0 %v1580
      %v1648 = vpop.f32.mrf.mxu0
      %v1649 = vadd.f32 0.0, %v1648
      %1650 = vmatmul.f32.gmra.mxu0 %v1583
      %v1651 = vpop.f32.mrf.mxu0
      %v1652 = vadd.f32 0.0, %v1651
      %1653 = vdwg.mxu0
      %v1654 = vadd.f32 %v1571, %v1603
      %v1655 = vadd.f32 %v1572, %v1626
      %v1656 = vadd.f32 %v1573, %v1649
      %v1657 = vadd.f32 %v1574, %v1606
      %v1658 = vadd.f32 %v1575, %v1629
      %v1659 = vadd.f32 %v1576, %v1652
      %v1660 = vld [vmem:[%s4 + $0x50] sm:$0xff]
      %v1661 = vld [vmem:[%s4 + $0x58] sm:$0xff]
      %v1662 = vld [vmem:[#allocation2 + $0x8] sm:$0xff]
      %v1663 = vld [vmem:[#allocation2 + $0x10] sm:$0xff]
      %v1664 = vld [vmem:[#allocation2 + $0x18] sm:$0xff]
      %v1665 = vld [vmem:[#allocation2 + $0x20] sm:$0xff]
      %1670 = vrot.lane.b32.xlu0 %v1662, 127
      %v1671 = vpop.permute.xlu0 %1670
      %1672 = vrot.lane.b32.xlu0 %v1663, 127
      %v1673 = vpop.permute.xlu0 %1672
      %1674 = vrot.lane.b32.xlu0 %v1664, 127
      %v1675 = vpop.permute.xlu0 %1674
      %1676 = vrot.lane.b32.xlu0 %v1665, 127
      %v1677 = vpop.permute.xlu0 %1676
      %v1678 = vsel %vm849, %v1671, %v1673
      %v1679 = vsel %vm849, %v1673, %v1675
      %v1680 = vsel %vm849, %v1675, %v1677
      %v1685 = vsel %vm459, %v1660, 0
      %v1688 = vsel %vm459, %v1661, 0
      %1690 = vmatpush.msra.mxu0 0.0
      %1691 = vmatpush.msra.mxu0 0.0
      %1692 = vmatpush.msra.mxu0 0.0
      %1693 = vmatpush.msra.mxu0 0.0
      %1694 = vmatpush.msra.mxu0 0.0
      %1695 = vmatpush.msra.mxu0 0.0
      %1696 = vmatpush.msra.mxu0 0.0
      %1697 = vmatpush.msra.mxu0 0.0
      %1698 = vmatpush.msra.mxu0 0.0
      %1699 = vmatpush.msra.mxu0 0.0
      %1700 = vmatpush.msra.mxu0 0.0
      %1701 = vmatpush.msra.mxu0 0.0
      %1702 = vmatpush.msra.mxu0 0.0
      %1703 = vmatpush.msra.mxu0 0.0
      %1704 = vmatpush.msra.mxu0 0.0
      %1705 = vmatpush.msra.mxu0 %v1678
      %1706 = vmatmul.f32.gmra.mxu0 %v1685
      %v1707 = vpop.f32.mrf.mxu0
      %v1708 = vadd.f32 0.0, %v1707
      %1709 = vmatmul.f32.gmra.mxu0 %v1688
      %v1710 = vpop.f32.mrf.mxu0
      %v1711 = vadd.f32 0.0, %v1710
      %1712 = vdwg.mxu0
      %1713 = vmatpush.msra.mxu0 0.0
      %1714 = vmatpush.msra.mxu0 0.0
      %1715 = vmatpush.msra.mxu0 0.0
      %1716 = vmatpush.msra.mxu0 0.0
      %1717 = vmatpush.msra.mxu0 0.0
      %1718 = vmatpush.msra.mxu0 0.0
      %1719 = vmatpush.msra.mxu0 0.0
      %1720 = vmatpush.msra.mxu0 0.0
      %1721 = vmatpush.msra.mxu0 0.0
      %1722 = vmatpush.msra.mxu0 0.0
      %1723 = vmatpush.msra.mxu0 0.0
      %1724 = vmatpush.msra.mxu0 0.0
      %1725 = vmatpush.msra.mxu0 0.0
      %1726 = vmatpush.msra.mxu0 0.0
      %1727 = vmatpush.msra.mxu0 0.0
      %1728 = vmatpush.msra.mxu0 %v1679
      %1729 = vmatmul.f32.gmra.mxu0 %v1685
      %v1730 = vpop.f32.mrf.mxu0
      %v1731 = vadd.f32 0.0, %v1730
      %1732 = vmatmul.f32.gmra.mxu0 %v1688
      %v1733 = vpop.f32.mrf.mxu0
      %v1734 = vadd.f32 0.0, %v1733
      %1735 = vdwg.mxu0
      %1736 = vmatpush.msra.mxu0 0.0
      %1737 = vmatpush.msra.mxu0 0.0
      %1738 = vmatpush.msra.mxu0 0.0
      %1739 = vmatpush.msra.mxu0 0.0
      %1740 = vmatpush.msra.mxu0 0.0
      %1741 = vmatpush.msra.mxu0 0.0
      %1742 = vmatpush.msra.mxu0 0.0
      %1743 = vmatpush.msra.mxu0 0.0
      %1744 = vmatpush.msra.mxu0 0.0
      %1745 = vmatpush.msra.mxu0 0.0
      %1746 = vmatpush.msra.mxu0 0.0
      %1747 = vmatpush.msra.mxu0 0.0
      %1748 = vmatpush.msra.mxu0 0.0
      %1749 = vmatpush.msra.mxu0 0.0
      %1750 = vmatpush.msra.mxu0 0.0
      %1751 = vmatpush.msra.mxu0 %v1680
      %1752 = vmatmul.f32.gmra.mxu0 %v1685
      %v1753 = vpop.f32.mrf.mxu0
      %v1754 = vadd.f32 0.0, %v1753
      %1755 = vmatmul.f32.gmra.mxu0 %v1688
      %v1756 = vpop.f32.mrf.mxu0
      %v1757 = vadd.f32 0.0, %v1756
      %1758 = vdwg.mxu0
      %v1759 = vadd.f32 %v1654, %v1708
      %v1760 = vadd.f32 %v1655, %v1731
      %v1761 = vadd.f32 %v1656, %v1754
      %v1762 = vadd.f32 %v1657, %v1711
      %v1763 = vadd.f32 %v1658, %v1734
      %v1764 = vadd.f32 %v1659, %v1757
      %v1765 = vld [vmem:[%s4 + $0x60] sm:$0xff]
      %v1766 = vld [vmem:[%s4 + $0x68] sm:$0xff]
      %1767 = vrot.lane.b32.xlu0 %v1662, 111
      %v1768 = vpop.permute.xlu0 %1767
      %1769 = vrot.lane.b32.xlu0 %v1663, 111
      %v1770 = vpop.permute.xlu0 %1769
      %1771 = vrot.lane.b32.xlu0 %v1664, 111
      %v1772 = vpop.permute.xlu0 %1771
      %1773 = vrot.lane.b32.xlu0 %v1665, 111
      %v1774 = vpop.permute.xlu0 %1773
      %v1775 = vsel %vm931, %v1768, %v1770
      %v1776 = vsel %vm931, %v1770, %v1772
      %v1777 = vsel %vm931, %v1772, %v1774
      %v1782 = vsel %vm459, %v1765, 0
      %v1785 = vsel %vm459, %v1766, 0
      %1787 = vmatpush.msra.mxu0 0.0
      %1788 = vmatpush.msra.mxu0 0.0
      %1789 = vmatpush.msra.mxu0 0.0
      %1790 = vmatpush.msra.mxu0 0.0
      %1791 = vmatpush.msra.mxu0 0.0
      %1792 = vmatpush.msra.mxu0 0.0
      %1793 = vmatpush.msra.mxu0 0.0
      %1794 = vmatpush.msra.mxu0 0.0
      %1795 = vmatpush.msra.mxu0 0.0
      %1796 = vmatpush.msra.mxu0 0.0
      %1797 = vmatpush.msra.mxu0 0.0
      %1798 = vmatpush.msra.mxu0 0.0
      %1799 = vmatpush.msra.mxu0 0.0
      %1800 = vmatpush.msra.mxu0 0.0
      %1801 = vmatpush.msra.mxu0 0.0
      %1802 = vmatpush.msra.mxu0 %v1775
      %1803 = vmatmul.f32.gmra.mxu0 %v1782
      %v1804 = vpop.f32.mrf.mxu0
      %v1805 = vadd.f32 0.0, %v1804
      %1806 = vmatmul.f32.gmra.mxu0 %v1785
      %v1807 = vpop.f32.mrf.mxu0
      %v1808 = vadd.f32 0.0, %v1807
      %1809 = vdwg.mxu0
      %1810 = vmatpush.msra.mxu0 0.0
      %1811 = vmatpush.msra.mxu0 0.0
      %1812 = vmatpush.msra.mxu0 0.0
      %1813 = vmatpush.msra.mxu0 0.0
      %1814 = vmatpush.msra.mxu0 0.0
      %1815 = vmatpush.msra.mxu0 0.0
      %1816 = vmatpush.msra.mxu0 0.0
      %1817 = vmatpush.msra.mxu0 0.0
      %1818 = vmatpush.msra.mxu0 0.0
      %1819 = vmatpush.msra.mxu0 0.0
      %1820 = vmatpush.msra.mxu0 0.0
      %1821 = vmatpush.msra.mxu0 0.0
      %1822 = vmatpush.msra.mxu0 0.0
      %1823 = vmatpush.msra.mxu0 0.0
      %1824 = vmatpush.msra.mxu0 0.0
      %1825 = vmatpush.msra.mxu0 %v1776
      %1826 = vmatmul.f32.gmra.mxu0 %v1782
      %v1827 = vpop.f32.mrf.mxu0
      %v1828 = vadd.f32 0.0, %v1827
      %1829 = vmatmul.f32.gmra.mxu0 %v1785
      %v1830 = vpop.f32.mrf.mxu0
      %v1831 = vadd.f32 0.0, %v1830
      %1832 = vdwg.mxu0
      %1833 = vmatpush.msra.mxu0 0.0
      %1834 = vmatpush.msra.mxu0 0.0
      %1835 = vmatpush.msra.mxu0 0.0
      %1836 = vmatpush.msra.mxu0 0.0
      %1837 = vmatpush.msra.mxu0 0.0
      %1838 = vmatpush.msra.mxu0 0.0
      %1839 = vmatpush.msra.mxu0 0.0
      %1840 = vmatpush.msra.mxu0 0.0
      %1841 = vmatpush.msra.mxu0 0.0
      %1842 = vmatpush.msra.mxu0 0.0
      %1843 = vmatpush.msra.mxu0 0.0
      %1844 = vmatpush.msra.mxu0 0.0
      %1845 = vmatpush.msra.mxu0 0.0
      %1846 = vmatpush.msra.mxu0 0.0
      %1847 = vmatpush.msra.mxu0 0.0
      %1848 = vmatpush.msra.mxu0 %v1777
      %1849 = vmatmul.f32.gmra.mxu0 %v1782
      %v1850 = vpop.f32.mrf.mxu0
      %v1851 = vadd.f32 0.0, %v1850
      %1852 = vmatmul.f32.gmra.mxu0 %v1785
      %v1853 = vpop.f32.mrf.mxu0
      %v1854 = vadd.f32 0.0, %v1853
      %1855 = vdwg.mxu0
      %v1856 = vadd.f32 %v1759, %v1805
      %v1857 = vadd.f32 %v1760, %v1828
      %v1858 = vadd.f32 %v1761, %v1851
      %v1859 = vadd.f32 %v1762, %v1808
      %v1860 = vadd.f32 %v1763, %v1831
      %v1861 = vadd.f32 %v1764, %v1854
      %v1862 = vld [vmem:[%s4 + $0x70] sm:$0xff]
      %v1863 = vld [vmem:[%s4 + $0x78] sm:$0xff]
      %1864 = vrot.lane.b32.xlu0 %v1662, 110
      %v1865 = vpop.permute.xlu0 %1864
      %1866 = vrot.lane.b32.xlu0 %v1663, 110
      %v1867 = vpop.permute.xlu0 %1866
      %1868 = vrot.lane.b32.xlu0 %v1664, 110
      %v1869 = vpop.permute.xlu0 %1868
      %1870 = vrot.lane.b32.xlu0 %v1665, 110
      %v1871 = vpop.permute.xlu0 %1870
      %v1872 = vsel %vm1013, %v1865, %v1867
      %v1873 = vsel %vm1013, %v1867, %v1869
      %v1874 = vsel %vm1013, %v1869, %v1871
      %v1879 = vsel %vm459, %v1862, 0
      %v1882 = vsel %vm459, %v1863, 0
      %1884 = vmatpush.msra.mxu0 0.0
      %1885 = vmatpush.msra.mxu0 0.0
      %1886 = vmatpush.msra.mxu0 0.0
      %1887 = vmatpush.msra.mxu0 0.0
      %1888 = vmatpush.msra.mxu0 0.0
      %1889 = vmatpush.msra.mxu0 0.0
      %1890 = vmatpush.msra.mxu0 0.0
      %1891 = vmatpush.msra.mxu0 0.0
      %1892 = vmatpush.msra.mxu0 0.0
      %1893 = vmatpush.msra.mxu0 0.0
      %1894 = vmatpush.msra.mxu0 0.0
      %1895 = vmatpush.msra.mxu0 0.0
      %1896 = vmatpush.msra.mxu0 0.0
      %1897 = vmatpush.msra.mxu0 0.0
      %1898 = vmatpush.msra.mxu0 0.0
      %1899 = vmatpush.msra.mxu0 %v1872
      %1900 = vmatmul.f32.gmra.mxu0 %v1879
      %v1901 = vpop.f32.mrf.mxu0
      %v1902 = vadd.f32 0.0, %v1901
      %1903 = vmatmul.f32.gmra.mxu0 %v1882
      %v1904 = vpop.f32.mrf.mxu0
      %v1905 = vadd.f32 0.0, %v1904
      %1906 = vdwg.mxu0
      %1907 = vmatpush.msra.mxu0 0.0
      %1908 = vmatpush.msra.mxu0 0.0
      %1909 = vmatpush.msra.mxu0 0.0
      %1910 = vmatpush.msra.mxu0 0.0
      %1911 = vmatpush.msra.mxu0 0.0
      %1912 = vmatpush.msra.mxu0 0.0
      %1913 = vmatpush.msra.mxu0 0.0
      %1914 = vmatpush.msra.mxu0 0.0
      %1915 = vmatpush.msra.mxu0 0.0
      %1916 = vmatpush.msra.mxu0 0.0
      %1917 = vmatpush.msra.mxu0 0.0
      %1918 = vmatpush.msra.mxu0 0.0
      %1919 = vmatpush.msra.mxu0 0.0
      %1920 = vmatpush.msra.mxu0 0.0
      %1921 = vmatpush.msra.mxu0 0.0
      %1922 = vmatpush.msra.mxu0 %v1873
      %1923 = vmatmul.f32.gmra.mxu0 %v1879
      %v1924 = vpop.f32.mrf.mxu0
      %v1925 = vadd.f32 0.0, %v1924
      %1926 = vmatmul.f32.gmra.mxu0 %v1882
      %v1927 = vpop.f32.mrf.mxu0
      %v1928 = vadd.f32 0.0, %v1927
      %1929 = vdwg.mxu0
      %1930 = vmatpush.msra.mxu0 0.0
      %1931 = vmatpush.msra.mxu0 0.0
      %1932 = vmatpush.msra.mxu0 0.0
      %1933 = vmatpush.msra.mxu0 0.0
      %1934 = vmatpush.msra.mxu0 0.0
      %1935 = vmatpush.msra.mxu0 0.0
      %1936 = vmatpush.msra.mxu0 0.0
      %1937 = vmatpush.msra.mxu0 0.0
      %1938 = vmatpush.msra.mxu0 0.0
      %1939 = vmatpush.msra.mxu0 0.0
      %1940 = vmatpush.msra.mxu0 0.0
      %1941 = vmatpush.msra.mxu0 0.0
      %1942 = vmatpush.msra.mxu0 0.0
      %1943 = vmatpush.msra.mxu0 0.0
      %1944 = vmatpush.msra.mxu0 0.0
      %1945 = vmatpush.msra.mxu0 %v1874
      %1946 = vmatmul.f32.gmra.mxu0 %v1879
      %v1947 = vpop.f32.mrf.mxu0
      %v1948 = vadd.f32 0.0, %v1947
      %1949 = vmatmul.f32.gmra.mxu0 %v1882
      %v1950 = vpop.f32.mrf.mxu0
      %v1951 = vadd.f32 0.0, %v1950
      %1952 = vdwg.mxu0
      %v1953 = vadd.f32 %v1856, %v1902
      %v1954 = vadd.f32 %v1857, %v1925
      %v1955 = vadd.f32 %v1858, %v1948
      %v1956 = vadd.f32 %v1859, %v1905
      %v1957 = vadd.f32 %v1860, %v1928
      %v1958 = vadd.f32 %v1861, %v1951
      %v1959 = vld [vmem:[%s4 + $0x80] sm:$0xff]
      %v1960 = vld [vmem:[%s4 + $0x88] sm:$0xff]
      %1961 = vrot.lane.b32.xlu0 %v1662, 109
      %v1962 = vpop.permute.xlu0 %1961
      %1963 = vrot.lane.b32.xlu0 %v1663, 109
      %v1964 = vpop.permute.xlu0 %1963
      %1965 = vrot.lane.b32.xlu0 %v1664, 109
      %v1966 = vpop.permute.xlu0 %1965
      %1967 = vrot.lane.b32.xlu0 %v1665, 109
      %v1968 = vpop.permute.xlu0 %1967
      %v1969 = vsel %vm1095, %v1962, %v1964
      %v1970 = vsel %vm1095, %v1964, %v1966
      %v1971 = vsel %vm1095, %v1966, %v1968
      %v1976 = vsel %vm459, %v1959, 0
      %v1979 = vsel %vm459, %v1960, 0
      %1981 = vmatpush.msra.mxu0 0.0
      %1982 = vmatpush.msra.mxu0 0.0
      %1983 = vmatpush.msra.mxu0 0.0
      %1984 = vmatpush.msra.mxu0 0.0
      %1985 = vmatpush.msra.mxu0 0.0
      %1986 = vmatpush.msra.mxu0 0.0
      %1987 = vmatpush.msra.mxu0 0.0
      %1988 = vmatpush.msra.mxu0 0.0
      %1989 = vmatpush.msra.mxu0 0.0
      %1990 = vmatpush.msra.mxu0 0.0
      %1991 = vmatpush.msra.mxu0 0.0
      %1992 = vmatpush.msra.mxu0 0.0
      %1993 = vmatpush.msra.mxu0 0.0
      %1994 = vmatpush.msra.mxu0 0.0
      %1995 = vmatpush.msra.mxu0 0.0
      %1996 = vmatpush.msra.mxu0 %v1969
      %1997 = vmatmul.f32.gmra.mxu0 %v1976
      %v1998 = vpop.f32.mrf.mxu0
      %v1999 = vadd.f32 0.0, %v1998
      %2000 = vmatmul.f32.gmra.mxu0 %v1979
      %v2001 = vpop.f32.mrf.mxu0
      %v2002 = vadd.f32 0.0, %v2001
      %2003 = vdwg.mxu0
      %2004 = vmatpush.msra.mxu0 0.0
      %2005 = vmatpush.msra.mxu0 0.0
      %2006 = vmatpush.msra.mxu0 0.0
      %2007 = vmatpush.msra.mxu0 0.0
      %2008 = vmatpush.msra.mxu0 0.0
      %2009 = vmatpush.msra.mxu0 0.0
      %2010 = vmatpush.msra.mxu0 0.0
      %2011 = vmatpush.msra.mxu0 0.0
      %2012 = vmatpush.msra.mxu0 0.0
      %2013 = vmatpush.msra.mxu0 0.0
      %2014 = vmatpush.msra.mxu0 0.0
      %2015 = vmatpush.msra.mxu0 0.0
      %2016 = vmatpush.msra.mxu0 0.0
      %2017 = vmatpush.msra.mxu0 0.0
      %2018 = vmatpush.msra.mxu0 0.0
      %2019 = vmatpush.msra.mxu0 %v1970
      %2020 = vmatmul.f32.gmra.mxu0 %v1976
      %v2021 = vpop.f32.mrf.mxu0
      %v2022 = vadd.f32 0.0, %v2021
      %2023 = vmatmul.f32.gmra.mxu0 %v1979
      %v2024 = vpop.f32.mrf.mxu0
      %v2025 = vadd.f32 0.0, %v2024
      %2026 = vdwg.mxu0
      %2027 = vmatpush.msra.mxu0 0.0
      %2028 = vmatpush.msra.mxu0 0.0
      %2029 = vmatpush.msra.mxu0 0.0
      %2030 = vmatpush.msra.mxu0 0.0
      %2031 = vmatpush.msra.mxu0 0.0
      %2032 = vmatpush.msra.mxu0 0.0
      %2033 = vmatpush.msra.mxu0 0.0
      %2034 = vmatpush.msra.mxu0 0.0
      %2035 = vmatpush.msra.mxu0 0.0
      %2036 = vmatpush.msra.mxu0 0.0
      %2037 = vmatpush.msra.mxu0 0.0
      %2038 = vmatpush.msra.mxu0 0.0
      %2039 = vmatpush.msra.mxu0 0.0
      %2040 = vmatpush.msra.mxu0 0.0
      %2041 = vmatpush.msra.mxu0 0.0
      %2042 = vmatpush.msra.mxu0 %v1971
      %2043 = vmatmul.f32.gmra.mxu0 %v1976
      %v2044 = vpop.f32.mrf.mxu0
      %v2045 = vadd.f32 0.0, %v2044
      %2046 = vmatmul.f32.gmra.mxu0 %v1979
      %v2047 = vpop.f32.mrf.mxu0
      %v2048 = vadd.f32 0.0, %v2047
      %2049 = vdwg.mxu0
      %v2050 = vadd.f32 %v1953, %v1999
      %v2051 = vadd.f32 %v1954, %v2022
      %v2052 = vadd.f32 %v1955, %v2045
      %v2053 = vadd.f32 %v1956, %v2002
      %v2054 = vadd.f32 %v1957, %v2025
      %v2055 = vadd.f32 %v1958, %v2048
      %v2056 = vld [vmem:[%s5] sm:$0xff]
      %v2057 = vld [vmem:[%s5 + $0x8] sm:$0xff]
      %2059 = vset.pattern.permute.xlu0 0
      %2060 = vperm.xlu0 %2059, %v2056
      %v2061 = vpop.permute.xlu0 %2060
      %2064 = vset.pattern.permute.xlu0 0
      %2065 = vperm.xlu0 %2064, %v2057
      %v2066 = vpop.permute.xlu0 %2065
      %v2068 = vadd.f32 %v2050, %v2061
      %v2069 = vadd.f32 %v2051, %v2061
      %v2070 = vadd.f32 %v2052, %v2061
      %v2071 = vadd.f32 %v2053, %v2066
      %v2072 = vadd.f32 %v2054, %v2066
      %v2073 = vadd.f32 %v2055, %v2066
      %v2074 = vmax.f32 %v2068, 0.0
      %v2075 = vmax.f32 %v2069, 0.0
      %v2076 = vmax.f32 %v2070, 0.0
      %v2077 = vmax.f32 %v2071, 0.0
      %v2078 = vmax.f32 %v2072, 0.0
      %v2079 = vmax.f32 %v2073, 0.0
      %v2080 = vsel %vm1184, %v2074, 0.0
      %v2081 = vsel %vm1185, %v2075, 0.0
      %v2082 = vsel %vm1186, %v2076, 0.0
      %v2083 = vsel %vm1184, %v2077, 0.0
      %v2084 = vsel %vm1185, %v2078, 0.0
      %v2085 = vsel %vm1186, %v2079, 0.0
      %2086 = vst [vmem:[#allocation3 + $0x8] sm:$0xff] %v2080
      %2087 = vst [vmem:[#allocation3 + $0x10] sm:$0xff] %v2081
      %2088 = vst [vmem:[#allocation3 + $0x18] sm:$0xff] %v2082
      %2089 = vst [vmem:[#allocation3 + $0x30] sm:$0xff] %v2083
      %2090 = vst [vmem:[#allocation3 + $0x38] sm:$0xff] %v2084
      %2091 = vst [vmem:[#allocation3 + $0x40] sm:$0xff] %v2085
      %v2092 = vld [vmem:[%s6] sm:$0xff]
      %v2093 = vld [vmem:[%s6 + $0x8] sm:$0xff]
      %v2094 = vld [vmem:[%s6 + $0x10] sm:$0xff]
      %v2095 = vld [vmem:[#allocation3] sm:$0xff]
      %v2096 = vld [vmem:[#allocation3 + $0x8] sm:$0xff]
      %v2097 = vld [vmem:[#allocation3 + $0x10] sm:$0xff]
      %v2098 = vld [vmem:[#allocation3 + $0x18] sm:$0xff]
      %v2099 = vld [vmem:[#allocation3 + $0x28] sm:$0xff]
      %v2100 = vld [vmem:[#allocation3 + $0x30] sm:$0xff]
      %v2101 = vld [vmem:[#allocation3 + $0x38] sm:$0xff]
      %v2102 = vld [vmem:[#allocation3 + $0x40] sm:$0xff]
      %v2103 = vld [vmem:[%s6 + $0x18] sm:$0xff]
      %v2104 = vld [vmem:[%s6 + $0x20] sm:$0xff]
      %v2105 = vld [vmem:[%s6 + $0x28] sm:$0xff]
      %2114 = vrot.lane.b32.xlu0 %v2095, 18
      %v2115 = vpop.permute.xlu0 %2114
      %2116 = vrot.lane.b32.xlu0 %v2096, 18
      %v2117 = vpop.permute.xlu0 %2116
      %2118 = vrot.lane.b32.xlu0 %v2097, 18
      %v2119 = vpop.permute.xlu0 %2118
      %2120 = vrot.lane.b32.xlu0 %v2098, 18
      %v2121 = vpop.permute.xlu0 %2120
      %2122 = vrot.lane.b32.xlu0 %v2099, 18
      %v2123 = vpop.permute.xlu0 %2122
      %2124 = vrot.lane.b32.xlu0 %v2100, 18
      %v2125 = vpop.permute.xlu0 %2124
      %2126 = vrot.lane.b32.xlu0 %v2101, 18
      %v2127 = vpop.permute.xlu0 %2126
      %2128 = vrot.lane.b32.xlu0 %v2102, 18
      %v2129 = vpop.permute.xlu0 %2128
      %v2130 = vsel %vm452, %v2115, %v2117
      %v2131 = vsel %vm452, %v2117, %v2119
      %v2132 = vsel %vm452, %v2119, %v2121
      %v2133 = vsel %vm452, %v2123, %v2125
      %v2134 = vsel %vm452, %v2125, %v2127
      %v2135 = vsel %vm452, %v2127, %v2129
      %vm2142 = vcmask 130048
      %v2144 = vsel %vm2142, %v2103, 0
      %v2147 = vsel %vm2142, %v2104, 0
      %v2150 = vsel %vm2142, %v2105, 0
      %2152 = vmatpush.msra.mxu0 0.0
      %2153 = vmatpush.msra.mxu0 0.0
      %2154 = vmatpush.msra.mxu0 0.0
      %2155 = vmatpush.msra.mxu0 0.0
      %2156 = vmatpush.msra.mxu0 0.0
      %2157 = vmatpush.msra.mxu0 0.0
      %2158 = vmatpush.msra.mxu0 0.0
      %2159 = vmatpush.msra.mxu0 0.0
      %2160 = vmatpush.msra.mxu0 0.0
      %2161 = vmatpush.msra.mxu0 0.0
      %2162 = vmatpush.msra.mxu0 0.0
      %2163 = vmatpush.msra.mxu0 0.0
      %2164 = vmatpush.msra.mxu0 0.0
      %2165 = vmatpush.msra.mxu0 0.0
      %2166 = vmatpush.msra.mxu0 %v2133
      %2167 = vmatpush.msra.mxu0 %v2130
      %2168 = vmatmul.f32.gmra.mxu0 %v2144
      %v2169 = vpop.f32.mrf.mxu0
      %v2170 = vadd.f32 0.0, %v2169
      %2171 = vmatmul.f32.gmra.mxu0 %v2147
      %v2172 = vpop.f32.mrf.mxu0
      %v2173 = vadd.f32 0.0, %v2172
      %2174 = vmatmul.f32.gmra.mxu0 %v2150
      %v2175 = vpop.f32.mrf.mxu0
      %v2176 = vadd.f32 0.0, %v2175
      %2177 = vdwg.mxu0
      %2178 = vmatpush.msra.mxu0 0.0
      %2179 = vmatpush.msra.mxu0 0.0
      %2180 = vmatpush.msra.mxu0 0.0
      %2181 = vmatpush.msra.mxu0 0.0
      %2182 = vmatpush.msra.mxu0 0.0
      %2183 = vmatpush.msra.mxu0 0.0
      %2184 = vmatpush.msra.mxu0 0.0
      %2185 = vmatpush.msra.mxu0 0.0
      %2186 = vmatpush.msra.mxu0 0.0
      %2187 = vmatpush.msra.mxu0 0.0
      %2188 = vmatpush.msra.mxu0 0.0
      %2189 = vmatpush.msra.mxu0 0.0
      %2190 = vmatpush.msra.mxu0 0.0
      %2191 = vmatpush.msra.mxu0 0.0
      %2192 = vmatpush.msra.mxu0 %v2134
      %2193 = vmatpush.msra.mxu0 %v2131
      %2194 = vmatmul.f32.gmra.mxu0 %v2144
      %v2195 = vpop.f32.mrf.mxu0
      %v2196 = vadd.f32 0.0, %v2195
      %2197 = vmatmul.f32.gmra.mxu0 %v2147
      %v2198 = vpop.f32.mrf.mxu0
      %v2199 = vadd.f32 0.0, %v2198
      %2200 = vmatmul.f32.gmra.mxu0 %v2150
      %v2201 = vpop.f32.mrf.mxu0
      %v2202 = vadd.f32 0.0, %v2201
      %2203 = vdwg.mxu0
      %2204 = vmatpush.msra.mxu0 0.0
      %2205 = vmatpush.msra.mxu0 0.0
      %2206 = vmatpush.msra.mxu0 0.0
      %2207 = vmatpush.msra.mxu0 0.0
      %2208 = vmatpush.msra.mxu0 0.0
      %2209 = vmatpush.msra.mxu0 0.0
      %2210 = vmatpush.msra.mxu0 0.0
      %2211 = vmatpush.msra.mxu0 0.0
      %2212 = vmatpush.msra.mxu0 0.0
      %2213 = vmatpush.msra.mxu0 0.0
      %2214 = vmatpush.msra.mxu0 0.0
      %2215 = vmatpush.msra.mxu0 0.0
      %2216 = vmatpush.msra.mxu0 0.0
      %2217 = vmatpush.msra.mxu0 0.0
      %2218 = vmatpush.msra.mxu0 %v2135
      %2219 = vmatpush.msra.mxu0 %v2132
      %2220 = vmatmul.f32.gmra.mxu0 %v2144
      %v2221 = vpop.f32.mrf.mxu0
      %v2222 = vadd.f32 0.0, %v2221
      %2223 = vmatmul.f32.gmra.mxu0 %v2147
      %v2224 = vpop.f32.mrf.mxu0
      %v2225 = vadd.f32 0.0, %v2224
      %2226 = vmatmul.f32.gmra.mxu0 %v2150
      %v2227 = vpop.f32.mrf.mxu0
      %v2228 = vadd.f32 0.0, %v2227
      %2229 = vdwg.mxu0
      %2230 = vrot.lane.b32.xlu0 %v2095, 19
      %v2231 = vpop.permute.xlu0 %2230
      %2232 = vrot.lane.b32.xlu0 %v2096, 19
      %v2233 = vpop.permute.xlu0 %2232
      %2234 = vrot.lane.b32.xlu0 %v2097, 19
      %v2235 = vpop.permute.xlu0 %2234
      %2236 = vrot.lane.b32.xlu0 %v2098, 19
      %v2237 = vpop.permute.xlu0 %2236
      %2238 = vrot.lane.b32.xlu0 %v2099, 19
      %v2239 = vpop.permute.xlu0 %2238
      %2240 = vrot.lane.b32.xlu0 %v2100, 19
      %v2241 = vpop.permute.xlu0 %2240
      %2242 = vrot.lane.b32.xlu0 %v2101, 19
      %v2243 = vpop.permute.xlu0 %2242
      %2244 = vrot.lane.b32.xlu0 %v2102, 19
      %v2245 = vpop.permute.xlu0 %2244
      %v2246 = vsel %vm531, %v2231, %v2233
      %v2247 = vsel %vm531, %v2233, %v2235
      %v2248 = vsel %vm531, %v2235, %v2237
      %v2249 = vsel %vm531, %v2239, %v2241
      %v2250 = vsel %vm531, %v2241, %v2243
      %v2251 = vsel %vm531, %v2243, %v2245
      %v2259 = vsel %vm2142, %v2092, 0
      %v2262 = vsel %vm2142, %v2093, 0
      %v2265 = vsel %vm2142, %v2094, 0
      %2267 = vmatpush.msra.mxu0 0.0
      %2268 = vmatpush.msra.mxu0 0.0
      %2269 = vmatpush.msra.mxu0 0.0
      %2270 = vmatpush.msra.mxu0 0.0
      %2271 = vmatpush.msra.mxu0 0.0
      %2272 = vmatpush.msra.mxu0 0.0
      %2273 = vmatpush.msra.mxu0 0.0
      %2274 = vmatpush.msra.mxu0 0.0
      %2275 = vmatpush.msra.mxu0 0.0
      %2276 = vmatpush.msra.mxu0 0.0
      %2277 = vmatpush.msra.mxu0 0.0
      %2278 = vmatpush.msra.mxu0 0.0
      %2279 = vmatpush.msra.mxu0 0.0
      %2280 = vmatpush.msra.mxu0 0.0
      %2281 = vmatpush.msra.mxu0 %v2249
      %2282 = vmatpush.msra.mxu0 %v2246
      %2283 = vmatmul.f32.gmra.mxu0 %v2259
      %v2284 = vpop.f32.mrf.mxu0
      %v2285 = vadd.f32 %v2170, %v2284
      %2286 = vmatmul.f32.gmra.mxu0 %v2262
      %v2287 = vpop.f32.mrf.mxu0
      %v2288 = vadd.f32 %v2173, %v2287
      %2289 = vmatmul.f32.gmra.mxu0 %v2265
      %v2290 = vpop.f32.mrf.mxu0
      %v2291 = vadd.f32 %v2176, %v2290
      %2292 = vdwg.mxu0
      %2293 = vmatpush.msra.mxu0 0.0
      %2294 = vmatpush.msra.mxu0 0.0
      %2295 = vmatpush.msra.mxu0 0.0
      %2296 = vmatpush.msra.mxu0 0.0
      %2297 = vmatpush.msra.mxu0 0.0
      %2298 = vmatpush.msra.mxu0 0.0
      %2299 = vmatpush.msra.mxu0 0.0
      %2300 = vmatpush.msra.mxu0 0.0
      %2301 = vmatpush.msra.mxu0 0.0
      %2302 = vmatpush.msra.mxu0 0.0
      %2303 = vmatpush.msra.mxu0 0.0
      %2304 = vmatpush.msra.mxu0 0.0
      %2305 = vmatpush.msra.mxu0 0.0
      %2306 = vmatpush.msra.mxu0 0.0
      %2307 = vmatpush.msra.mxu0 %v2250
      %2308 = vmatpush.msra.mxu0 %v2247
      %2309 = vmatmul.f32.gmra.mxu0 %v2259
      %v2310 = vpop.f32.mrf.mxu0
      %v2311 = vadd.f32 %v2196, %v2310
      %2312 = vmatmul.f32.gmra.mxu0 %v2262
      %v2313 = vpop.f32.mrf.mxu0
      %v2314 = vadd.f32 %v2199, %v2313
      %2315 = vmatmul.f32.gmra.mxu0 %v2265
      %v2316 = vpop.f32.mrf.mxu0
      %v2317 = vadd.f32 %v2202, %v2316
      %2318 = vdwg.mxu0
      %2319 = vmatpush.msra.mxu0 0.0
      %2320 = vmatpush.msra.mxu0 0.0
      %2321 = vmatpush.msra.mxu0 0.0
      %2322 = vmatpush.msra.mxu0 0.0
      %2323 = vmatpush.msra.mxu0 0.0
      %2324 = vmatpush.msra.mxu0 0.0
      %2325 = vmatpush.msra.mxu0 0.0
      %2326 = vmatpush.msra.mxu0 0.0
      %2327 = vmatpush.msra.mxu0 0.0
      %2328 = vmatpush.msra.mxu0 0.0
      %2329 = vmatpush.msra.mxu0 0.0
      %2330 = vmatpush.msra.mxu0 0.0
      %2331 = vmatpush.msra.mxu0 0.0
      %2332 = vmatpush.msra.mxu0 0.0
      %2333 = vmatpush.msra.mxu0 %v2251
      %2334 = vmatpush.msra.mxu0 %v2248
      %2335 = vmatmul.f32.gmra.mxu0 %v2259
      %v2336 = vpop.f32.mrf.mxu0
      %v2337 = vadd.f32 %v2222, %v2336
      %2338 = vmatmul.f32.gmra.mxu0 %v2262
      %v2339 = vpop.f32.mrf.mxu0
      %v2340 = vadd.f32 %v2225, %v2339
      %2341 = vmatmul.f32.gmra.mxu0 %v2265
      %v2342 = vpop.f32.mrf.mxu0
      %v2343 = vadd.f32 %v2228, %v2342
      %2344 = vdwg.mxu0
      %v2345 = vld [vmem:[%s6 + $0x30] sm:$0xff]
      %v2346 = vld [vmem:[%s6 + $0x38] sm:$0xff]
      %v2347 = vld [vmem:[%s6 + $0x40] sm:$0xff]
      %2348 = vrot.lane.b32.xlu0 %v2095, 17
      %v2349 = vpop.permute.xlu0 %2348
      %2350 = vrot.lane.b32.xlu0 %v2096, 17
      %v2351 = vpop.permute.xlu0 %2350
      %2352 = vrot.lane.b32.xlu0 %v2097, 17
      %v2353 = vpop.permute.xlu0 %2352
      %2354 = vrot.lane.b32.xlu0 %v2098, 17
      %v2355 = vpop.permute.xlu0 %2354
      %2356 = vrot.lane.b32.xlu0 %v2099, 17
      %v2357 = vpop.permute.xlu0 %2356
      %2358 = vrot.lane.b32.xlu0 %v2100, 17
      %v2359 = vpop.permute.xlu0 %2358
      %2360 = vrot.lane.b32.xlu0 %v2101, 17
      %v2361 = vpop.permute.xlu0 %2360
      %2362 = vrot.lane.b32.xlu0 %v2102, 17
      %v2363 = vpop.permute.xlu0 %2362
      %v2364 = vsel %vm610, %v2349, %v2351
      %v2365 = vsel %vm610, %v2351, %v2353
      %v2366 = vsel %vm610, %v2353, %v2355
      %v2367 = vsel %vm610, %v2357, %v2359
      %v2368 = vsel %vm610, %v2359, %v2361
      %v2369 = vsel %vm610, %v2361, %v2363
      %v2377 = vsel %vm2142, %v2345, 0
      %v2380 = vsel %vm2142, %v2346, 0
      %v2383 = vsel %vm2142, %v2347, 0
      %2385 = vmatpush.msra.mxu0 0.0
      %2386 = vmatpush.msra.mxu0 0.0
      %2387 = vmatpush.msra.mxu0 0.0
      %2388 = vmatpush.msra.mxu0 0.0
      %2389 = vmatpush.msra.mxu0 0.0
      %2390 = vmatpush.msra.mxu0 0.0
      %2391 = vmatpush.msra.mxu0 0.0
      %2392 = vmatpush.msra.mxu0 0.0
      %2393 = vmatpush.msra.mxu0 0.0
      %2394 = vmatpush.msra.mxu0 0.0
      %2395 = vmatpush.msra.mxu0 0.0
      %2396 = vmatpush.msra.mxu0 0.0
      %2397 = vmatpush.msra.mxu0 0.0
      %2398 = vmatpush.msra.mxu0 0.0
      %2399 = vmatpush.msra.mxu0 %v2367
      %2400 = vmatpush.msra.mxu0 %v2364
      %2401 = vmatmul.f32.gmra.mxu0 %v2377
      %v2402 = vpop.f32.mrf.mxu0
      %v2403 = vadd.f32 0.0, %v2402
      %2404 = vmatmul.f32.gmra.mxu0 %v2380
      %v2405 = vpop.f32.mrf.mxu0
      %v2406 = vadd.f32 0.0, %v2405
      %2407 = vmatmul.f32.gmra.mxu0 %v2383
      %v2408 = vpop.f32.mrf.mxu0
      %v2409 = vadd.f32 0.0, %v2408
      %2410 = vdwg.mxu0
      %2411 = vmatpush.msra.mxu0 0.0
      %2412 = vmatpush.msra.mxu0 0.0
      %2413 = vmatpush.msra.mxu0 0.0
      %2414 = vmatpush.msra.mxu0 0.0
      %2415 = vmatpush.msra.mxu0 0.0
      %2416 = vmatpush.msra.mxu0 0.0
      %2417 = vmatpush.msra.mxu0 0.0
      %2418 = vmatpush.msra.mxu0 0.0
      %2419 = vmatpush.msra.mxu0 0.0
      %2420 = vmatpush.msra.mxu0 0.0
      %2421 = vmatpush.msra.mxu0 0.0
      %2422 = vmatpush.msra.mxu0 0.0
      %2423 = vmatpush.msra.mxu0 0.0
      %2424 = vmatpush.msra.mxu0 0.0
      %2425 = vmatpush.msra.mxu0 %v2368
      %2426 = vmatpush.msra.mxu0 %v2365
      %2427 = vmatmul.f32.gmra.mxu0 %v2377
      %v2428 = vpop.f32.mrf.mxu0
      %v2429 = vadd.f32 0.0, %v2428
      %2430 = vmatmul.f32.gmra.mxu0 %v2380
      %v2431 = vpop.f32.mrf.mxu0
      %v2432 = vadd.f32 0.0, %v2431
      %2433 = vmatmul.f32.gmra.mxu0 %v2383
      %v2434 = vpop.f32.mrf.mxu0
      %v2435 = vadd.f32 0.0, %v2434
      %2436 = vdwg.mxu0
      %2437 = vmatpush.msra.mxu0 0.0
      %2438 = vmatpush.msra.mxu0 0.0
      %2439 = vmatpush.msra.mxu0 0.0
      %2440 = vmatpush.msra.mxu0 0.0
      %2441 = vmatpush.msra.mxu0 0.0
      %2442 = vmatpush.msra.mxu0 0.0
      %2443 = vmatpush.msra.mxu0 0.0
      %2444 = vmatpush.msra.mxu0 0.0
      %2445 = vmatpush.msra.mxu0 0.0
      %2446 = vmatpush.msra.mxu0 0.0
      %2447 = vmatpush.msra.mxu0 0.0
      %2448 = vmatpush.msra.mxu0 0.0
      %2449 = vmatpush.msra.mxu0 0.0
      %2450 = vmatpush.msra.mxu0 0.0
      %2451 = vmatpush.msra.mxu0 %v2369
      %2452 = vmatpush.msra.mxu0 %v2366
      %2453 = vmatmul.f32.gmra.mxu0 %v2377
      %v2454 = vpop.f32.mrf.mxu0
      %v2455 = vadd.f32 0.0, %v2454
      %2456 = vmatmul.f32.gmra.mxu0 %v2380
      %v2457 = vpop.f32.mrf.mxu0
      %v2458 = vadd.f32 0.0, %v2457
      %2459 = vmatmul.f32.gmra.mxu0 %v2383
      %v2460 = vpop.f32.mrf.mxu0
      %v2461 = vadd.f32 0.0, %v2460
      %2462 = vdwg.mxu0
      %v2463 = vadd.f32 %v2285, %v2403
      %v2464 = vadd.f32 %v2311, %v2429
      %v2465 = vadd.f32 %v2337, %v2455
      %v2466 = vadd.f32 %v2288, %v2406
      %v2467 = vadd.f32 %v2314, %v2432
      %v2468 = vadd.f32 %v2340, %v2458
      %v2469 = vadd.f32 %v2291, %v2409
      %v2470 = vadd.f32 %v2317, %v2435
      %v2471 = vadd.f32 %v2343, %v2461
      %v2472 = vld [vmem:[%s6 + $0x48] sm:$0xff]
      %v2473 = vld [vmem:[%s6 + $0x50] sm:$0xff]
      %v2474 = vld [vmem:[%s6 + $0x58] sm:$0xff]
      %2475 = vrot.lane.b32.xlu0 %v2095, 1
      %v2476 = vpop.permute.xlu0 %2475
      %2477 = vrot.lane.b32.xlu0 %v2096, 1
      %v2478 = vpop.permute.xlu0 %2477
      %2479 = vrot.lane.b32.xlu0 %v2097, 1
      %v2480 = vpop.permute.xlu0 %2479
      %2481 = vrot.lane.b32.xlu0 %v2098, 1
      %v2482 = vpop.permute.xlu0 %2481
      %2483 = vrot.lane.b32.xlu0 %v2099, 1
      %v2484 = vpop.permute.xlu0 %2483
      %2485 = vrot.lane.b32.xlu0 %v2100, 1
      %v2486 = vpop.permute.xlu0 %2485
      %2487 = vrot.lane.b32.xlu0 %v2101, 1
      %v2488 = vpop.permute.xlu0 %2487
      %2489 = vrot.lane.b32.xlu0 %v2102, 1
      %v2490 = vpop.permute.xlu0 %2489
      %v2491 = vsel %vm692, %v2476, %v2478
      %v2492 = vsel %vm692, %v2478, %v2480
      %v2493 = vsel %vm692, %v2480, %v2482
      %v2494 = vsel %vm692, %v2484, %v2486
      %v2495 = vsel %vm692, %v2486, %v2488
      %v2496 = vsel %vm692, %v2488, %v2490
      %v2504 = vsel %vm2142, %v2472, 0
      %v2507 = vsel %vm2142, %v2473, 0
      %v2510 = vsel %vm2142, %v2474, 0
      %2512 = vmatpush.msra.mxu0 0.0
      %2513 = vmatpush.msra.mxu0 0.0
      %2514 = vmatpush.msra.mxu0 0.0
      %2515 = vmatpush.msra.mxu0 0.0
      %2516 = vmatpush.msra.mxu0 0.0
      %2517 = vmatpush.msra.mxu0 0.0
      %2518 = vmatpush.msra.mxu0 0.0
      %2519 = vmatpush.msra.mxu0 0.0
      %2520 = vmatpush.msra.mxu0 0.0
      %2521 = vmatpush.msra.mxu0 0.0
      %2522 = vmatpush.msra.mxu0 0.0
      %2523 = vmatpush.msra.mxu0 0.0
      %2524 = vmatpush.msra.mxu0 0.0
      %2525 = vmatpush.msra.mxu0 0.0
      %2526 = vmatpush.msra.mxu0 %v2494
      %2527 = vmatpush.msra.mxu0 %v2491
      %2528 = vmatmul.f32.gmra.mxu0 %v2504
      %v2529 = vpop.f32.mrf.mxu0
      %v2530 = vadd.f32 0.0, %v2529
      %2531 = vmatmul.f32.gmra.mxu0 %v2507
      %v2532 = vpop.f32.mrf.mxu0
      %v2533 = vadd.f32 0.0, %v2532
      %2534 = vmatmul.f32.gmra.mxu0 %v2510
      %v2535 = vpop.f32.mrf.mxu0
      %v2536 = vadd.f32 0.0, %v2535
      %2537 = vdwg.mxu0
      %2538 = vmatpush.msra.mxu0 0.0
      %2539 = vmatpush.msra.mxu0 0.0
      %2540 = vmatpush.msra.mxu0 0.0
      %2541 = vmatpush.msra.mxu0 0.0
      %2542 = vmatpush.msra.mxu0 0.0
      %2543 = vmatpush.msra.mxu0 0.0
      %2544 = vmatpush.msra.mxu0 0.0
      %2545 = vmatpush.msra.mxu0 0.0
      %2546 = vmatpush.msra.mxu0 0.0
      %2547 = vmatpush.msra.mxu0 0.0
      %2548 = vmatpush.msra.mxu0 0.0
      %2549 = vmatpush.msra.mxu0 0.0
      %2550 = vmatpush.msra.mxu0 0.0
      %2551 = vmatpush.msra.mxu0 0.0
      %2552 = vmatpush.msra.mxu0 %v2495
      %2553 = vmatpush.msra.mxu0 %v2492
      %2554 = vmatmul.f32.gmra.mxu0 %v2504
      %v2555 = vpop.f32.mrf.mxu0
      %v2556 = vadd.f32 0.0, %v2555
      %2557 = vmatmul.f32.gmra.mxu0 %v2507
      %v2558 = vpop.f32.mrf.mxu0
      %v2559 = vadd.f32 0.0, %v2558
      %2560 = vmatmul.f32.gmra.mxu0 %v2510
      %v2561 = vpop.f32.mrf.mxu0
      %v2562 = vadd.f32 0.0, %v2561
      %2563 = vdwg.mxu0
      %2564 = vmatpush.msra.mxu0 0.0
      %2565 = vmatpush.msra.mxu0 0.0
      %2566 = vmatpush.msra.mxu0 0.0
      %2567 = vmatpush.msra.mxu0 0.0
      %2568 = vmatpush.msra.mxu0 0.0
      %2569 = vmatpush.msra.mxu0 0.0
      %2570 = vmatpush.msra.mxu0 0.0
      %2571 = vmatpush.msra.mxu0 0.0
      %2572 = vmatpush.msra.mxu0 0.0
      %2573 = vmatpush.msra.mxu0 0.0
      %2574 = vmatpush.msra.mxu0 0.0
      %2575 = vmatpush.msra.mxu0 0.0
      %2576 = vmatpush.msra.mxu0 0.0
      %2577 = vmatpush.msra.mxu0 0.0
      %2578 = vmatpush.msra.mxu0 %v2496
      %2579 = vmatpush.msra.mxu0 %v2493
      %2580 = vmatmul.f32.gmra.mxu0 %v2504
      %v2581 = vpop.f32.mrf.mxu0
      %v2582 = vadd.f32 0.0, %v2581
      %2583 = vmatmul.f32.gmra.mxu0 %v2507
      %v2584 = vpop.f32.mrf.mxu0
      %v2585 = vadd.f32 0.0, %v2584
      %2586 = vmatmul.f32.gmra.mxu0 %v2510
      %v2587 = vpop.f32.mrf.mxu0
      %v2588 = vadd.f32 0.0, %v2587
      %2589 = vdwg.mxu0
      %v2590 = vadd.f32 %v2463, %v2530
      %v2591 = vadd.f32 %v2464, %v2556
      %v2592 = vadd.f32 %v2465, %v2582
      %v2593 = vadd.f32 %v2466, %v2533
      %v2594 = vadd.f32 %v2467, %v2559
      %v2595 = vadd.f32 %v2468, %v2585
      %v2596 = vadd.f32 %v2469, %v2536
      %v2597 = vadd.f32 %v2470, %v2562
      %v2598 = vadd.f32 %v2471, %v2588
      %v2599 = vld [vmem:[%s6 + $0x60] sm:$0xff]
      %v2600 = vld [vmem:[%s6 + $0x68] sm:$0xff]
      %v2601 = vld [vmem:[%s6 + $0x70] sm:$0xff]
      %v2603 = vsel %vm2142, %v2599, 0
      %v2606 = vsel %vm2142, %v2600, 0
      %v2609 = vsel %vm2142, %v2601, 0
      %2611 = vmatpush.msra.mxu0 0.0
      %2612 = vmatpush.msra.mxu0 0.0
      %2613 = vmatpush.msra.mxu0 0.0
      %2614 = vmatpush.msra.mxu0 0.0
      %2615 = vmatpush.msra.mxu0 0.0
      %2616 = vmatpush.msra.mxu0 0.0
      %2617 = vmatpush.msra.mxu0 0.0
      %2618 = vmatpush.msra.mxu0 0.0
      %2619 = vmatpush.msra.mxu0 0.0
      %2620 = vmatpush.msra.mxu0 0.0
      %2621 = vmatpush.msra.mxu0 0.0
      %2622 = vmatpush.msra.mxu0 0.0
      %2623 = vmatpush.msra.mxu0 0.0
      %2624 = vmatpush.msra.mxu0 0.0
      %2625 = vmatpush.msra.mxu0 %v2100
      %2626 = vmatpush.msra.mxu0 %v2096
      %2627 = vmatmul.f32.gmra.mxu0 %v2603
      %v2628 = vpop.f32.mrf.mxu0
      %v2629 = vadd.f32 0.0, %v2628
      %2630 = vmatmul.f32.gmra.mxu0 %v2606
      %v2631 = vpop.f32.mrf.mxu0
      %v2632 = vadd.f32 0.0, %v2631
      %2633 = vmatmul.f32.gmra.mxu0 %v2609
      %v2634 = vpop.f32.mrf.mxu0
      %v2635 = vadd.f32 0.0, %v2634
      %2636 = vdwg.mxu0
      %2637 = vmatpush.msra.mxu0 0.0
      %2638 = vmatpush.msra.mxu0 0.0
      %2639 = vmatpush.msra.mxu0 0.0
      %2640 = vmatpush.msra.mxu0 0.0
      %2641 = vmatpush.msra.mxu0 0.0
      %2642 = vmatpush.msra.mxu0 0.0
      %2643 = vmatpush.msra.mxu0 0.0
      %2644 = vmatpush.msra.mxu0 0.0
      %2645 = vmatpush.msra.mxu0 0.0
      %2646 = vmatpush.msra.mxu0 0.0
      %2647 = vmatpush.msra.mxu0 0.0
      %2648 = vmatpush.msra.mxu0 0.0
      %2649 = vmatpush.msra.mxu0 0.0
      %2650 = vmatpush.msra.mxu0 0.0
      %2651 = vmatpush.msra.mxu0 %v2101
      %2652 = vmatpush.msra.mxu0 %v2097
      %2653 = vmatmul.f32.gmra.mxu0 %v2603
      %v2654 = vpop.f32.mrf.mxu0
      %v2655 = vadd.f32 0.0, %v2654
      %2656 = vmatmul.f32.gmra.mxu0 %v2606
      %v2657 = vpop.f32.mrf.mxu0
      %v2658 = vadd.f32 0.0, %v2657
      %2659 = vmatmul.f32.gmra.mxu0 %v2609
      %v2660 = vpop.f32.mrf.mxu0
      %v2661 = vadd.f32 0.0, %v2660
      %2662 = vdwg.mxu0
      %2663 = vmatpush.msra.mxu0 0.0
      %2664 = vmatpush.msra.mxu0 0.0
      %2665 = vmatpush.msra.mxu0 0.0
      %2666 = vmatpush.msra.mxu0 0.0
      %2667 = vmatpush.msra.mxu0 0.0
      %2668 = vmatpush.msra.mxu0 0.0
      %2669 = vmatpush.msra.mxu0 0.0
      %2670 = vmatpush.msra.mxu0 0.0
      %2671 = vmatpush.msra.mxu0 0.0
      %2672 = vmatpush.msra.mxu0 0.0
      %2673 = vmatpush.msra.mxu0 0.0
      %2674 = vmatpush.msra.mxu0 0.0
      %2675 = vmatpush.msra.mxu0 0.0
      %2676 = vmatpush.msra.mxu0 0.0
      %2677 = vmatpush.msra.mxu0 %v2102
      %2678 = vmatpush.msra.mxu0 %v2098
      %2679 = vmatmul.f32.gmra.mxu0 %v2603
      %v2680 = vpop.f32.mrf.mxu0
      %v2681 = vadd.f32 0.0, %v2680
      %2682 = vmatmul.f32.gmra.mxu0 %v2606
      %v2683 = vpop.f32.mrf.mxu0
      %v2684 = vadd.f32 0.0, %v2683
      %2685 = vmatmul.f32.gmra.mxu0 %v2609
      %v2686 = vpop.f32.mrf.mxu0
      %v2687 = vadd.f32 0.0, %v2686
      %2688 = vdwg.mxu0
      %v2689 = vadd.f32 %v2590, %v2629
      %v2690 = vadd.f32 %v2591, %v2655
      %v2691 = vadd.f32 %v2592, %v2681
      %v2692 = vadd.f32 %v2593, %v2632
      %v2693 = vadd.f32 %v2594, %v2658
      %v2694 = vadd.f32 %v2595, %v2684
      %v2695 = vadd.f32 %v2596, %v2635
      %v2696 = vadd.f32 %v2597, %v2661
      %v2697 = vadd.f32 %v2598, %v2687
      %v2698 = vld [vmem:[%s6 + $0x78] sm:$0xff]
      %v2699 = vld [vmem:[%s6 + $0x80] sm:$0xff]
      %v2700 = vld [vmem:[%s6 + $0x88] sm:$0xff]
      %v2701 = vld [vmem:[#allocation3 + $0x8] sm:$0xff]
      %v2702 = vld [vmem:[#allocation3 + $0x10] sm:$0xff]
      %v2703 = vld [vmem:[#allocation3 + $0x18] sm:$0xff]
      %v2704 = vld [vmem:[#allocation3 + $0x20] sm:$0xff]
      %v2705 = vld [vmem:[#allocation3 + $0x30] sm:$0xff]
      %v2706 = vld [vmem:[#allocation3 + $0x38] sm:$0xff]
      %v2707 = vld [vmem:[#allocation3 + $0x40] sm:$0xff]
      %v2708 = vld [vmem:[#allocation3 + $0x48] sm:$0xff]
      %2717 = vrot.lane.b32.xlu0 %v2701, 127
      %v2718 = vpop.permute.xlu0 %2717
      %2719 = vrot.lane.b32.xlu0 %v2702, 127
      %v2720 = vpop.permute.xlu0 %2719
      %2721 = vrot.lane.b32.xlu0 %v2703, 127
      %v2722 = vpop.permute.xlu0 %2721
      %2723 = vrot.lane.b32.xlu0 %v2704, 127
      %v2724 = vpop.permute.xlu0 %2723
      %2725 = vrot.lane.b32.xlu0 %v2705, 127
      %v2726 = vpop.permute.xlu0 %2725
      %2727 = vrot.lane.b32.xlu0 %v2706, 127
      %v2728 = vpop.permute.xlu0 %2727
      %2729 = vrot.lane.b32.xlu0 %v2707, 127
      %v2730 = vpop.permute.xlu0 %2729
      %2731 = vrot.lane.b32.xlu0 %v2708, 127
      %v2732 = vpop.permute.xlu0 %2731
      %v2733 = vsel %vm849, %v2718, %v2720
      %v2734 = vsel %vm849, %v2720, %v2722
      %v2735 = vsel %vm849, %v2722, %v2724
      %v2736 = vsel %vm849, %v2726, %v2728
      %v2737 = vsel %vm849, %v2728, %v2730
      %v2738 = vsel %vm849, %v2730, %v2732
      %v2746 = vsel %vm2142, %v2698, 0
      %v2749 = vsel %vm2142, %v2699, 0
      %v2752 = vsel %vm2142, %v2700, 0
      %2754 = vmatpush.msra.mxu0 0.0
      %2755 = vmatpush.msra.mxu0 0.0
      %2756 = vmatpush.msra.mxu0 0.0
      %2757 = vmatpush.msra.mxu0 0.0
      %2758 = vmatpush.msra.mxu0 0.0
      %2759 = vmatpush.msra.mxu0 0.0
      %2760 = vmatpush.msra.mxu0 0.0
      %2761 = vmatpush.msra.mxu0 0.0
      %2762 = vmatpush.msra.mxu0 0.0
      %2763 = vmatpush.msra.mxu0 0.0
      %2764 = vmatpush.msra.mxu0 0.0
      %2765 = vmatpush.msra.mxu0 0.0
      %2766 = vmatpush.msra.mxu0 0.0
      %2767 = vmatpush.msra.mxu0 0.0
      %2768 = vmatpush.msra.mxu0 %v2736
      %2769 = vmatpush.msra.mxu0 %v2733
      %2770 = vmatmul.f32.gmra.mxu0 %v2746
      %v2771 = vpop.f32.mrf.mxu0
      %v2772 = vadd.f32 0.0, %v2771
      %2773 = vmatmul.f32.gmra.mxu0 %v2749
      %v2774 = vpop.f32.mrf.mxu0
      %v2775 = vadd.f32 0.0, %v2774
      %2776 = vmatmul.f32.gmra.mxu0 %v2752
      %v2777 = vpop.f32.mrf.mxu0
      %v2778 = vadd.f32 0.0, %v2777
      %2779 = vdwg.mxu0
      %2780 = vmatpush.msra.mxu0 0.0
      %2781 = vmatpush.msra.mxu0 0.0
      %2782 = vmatpush.msra.mxu0 0.0
      %2783 = vmatpush.msra.mxu0 0.0
      %2784 = vmatpush.msra.mxu0 0.0
      %2785 = vmatpush.msra.mxu0 0.0
      %2786 = vmatpush.msra.mxu0 0.0
      %2787 = vmatpush.msra.mxu0 0.0
      %2788 = vmatpush.msra.mxu0 0.0
      %2789 = vmatpush.msra.mxu0 0.0
      %2790 = vmatpush.msra.mxu0 0.0
      %2791 = vmatpush.msra.mxu0 0.0
      %2792 = vmatpush.msra.mxu0 0.0
      %2793 = vmatpush.msra.mxu0 0.0
      %2794 = vmatpush.msra.mxu0 %v2737
      %2795 = vmatpush.msra.mxu0 %v2734
      %2796 = vmatmul.f32.gmra.mxu0 %v2746
      %v2797 = vpop.f32.mrf.mxu0
      %v2798 = vadd.f32 0.0, %v2797
      %2799 = vmatmul.f32.gmra.mxu0 %v2749
      %v2800 = vpop.f32.mrf.mxu0
      %v2801 = vadd.f32 0.0, %v2800
      %2802 = vmatmul.f32.gmra.mxu0 %v2752
      %v2803 = vpop.f32.mrf.mxu0
      %v2804 = vadd.f32 0.0, %v2803
      %2805 = vdwg.mxu0
      %2806 = vmatpush.msra.mxu0 0.0
      %2807 = vmatpush.msra.mxu0 0.0
      %2808 = vmatpush.msra.mxu0 0.0
      %2809 = vmatpush.msra.mxu0 0.0
      %2810 = vmatpush.msra.mxu0 0.0
      %2811 = vmatpush.msra.mxu0 0.0
      %2812 = vmatpush.msra.mxu0 0.0
      %2813 = vmatpush.msra.mxu0 0.0
      %2814 = vmatpush.msra.mxu0 0.0
      %2815 = vmatpush.msra.mxu0 0.0
      %2816 = vmatpush.msra.mxu0 0.0
      %2817 = vmatpush.msra.mxu0 0.0
      %2818 = vmatpush.msra.mxu0 0.0
      %2819 = vmatpush.msra.mxu0 0.0
      %2820 = vmatpush.msra.mxu0 %v2738
      %2821 = vmatpush.msra.mxu0 %v2735
      %2822 = vmatmul.f32.gmra.mxu0 %v2746
      %v2823 = vpop.f32.mrf.mxu0
      %v2824 = vadd.f32 0.0, %v2823
      %2825 = vmatmul.f32.gmra.mxu0 %v2749
      %v2826 = vpop.f32.mrf.mxu0
      %v2827 = vadd.f32 0.0, %v2826
      %2828 = vmatmul.f32.gmra.mxu0 %v2752
      %v2829 = vpop.f32.mrf.mxu0
      %v2830 = vadd.f32 0.0, %v2829
      %2831 = vdwg.mxu0
      %v2832 = vadd.f32 %v2689, %v2772
      %v2833 = vadd.f32 %v2690, %v2798
      %v2834 = vadd.f32 %v2691, %v2824
      %v2835 = vadd.f32 %v2692, %v2775
      %v2836 = vadd.f32 %v2693, %v2801
      %v2837 = vadd.f32 %v2694, %v2827
      %v2838 = vadd.f32 %v2695, %v2778
      %v2839 = vadd.f32 %v2696, %v2804
      %v2840 = vadd.f32 %v2697, %v2830
      %v2841 = vld [vmem:[%s6 + $0x90] sm:$0xff]
      %v2842 = vld [vmem:[%s6 + $0x98] sm:$0xff]
      %v2843 = vld [vmem:[%s6 + $0xa0] sm:$0xff]
      %2844 = vrot.lane.b32.xlu0 %v2701, 111
      %v2845 = vpop.permute.xlu0 %2844
      %2846 = vrot.lane.b32.xlu0 %v2702, 111
      %v2847 = vpop.permute.xlu0 %2846
      %2848 = vrot.lane.b32.xlu0 %v2703, 111
      %v2849 = vpop.permute.xlu0 %2848
      %2850 = vrot.lane.b32.xlu0 %v2704, 111
      %v2851 = vpop.permute.xlu0 %2850
      %2852 = vrot.lane.b32.xlu0 %v2705, 111
      %v2853 = vpop.permute.xlu0 %2852
      %2854 = vrot.lane.b32.xlu0 %v2706, 111
      %v2855 = vpop.permute.xlu0 %2854
      %2856 = vrot.lane.b32.xlu0 %v2707, 111
      %v2857 = vpop.permute.xlu0 %2856
      %2858 = vrot.lane.b32.xlu0 %v2708, 111
      %v2859 = vpop.permute.xlu0 %2858
      %v2860 = vsel %vm931, %v2845, %v2847
      %v2861 = vsel %vm931, %v2847, %v2849
      %v2862 = vsel %vm931, %v2849, %v2851
      %v2863 = vsel %vm931, %v2853, %v2855
      %v2864 = vsel %vm931, %v2855, %v2857
      %v2865 = vsel %vm931, %v2857, %v2859
      %v2873 = vsel %vm2142, %v2841, 0
      %v2876 = vsel %vm2142, %v2842, 0
      %v2879 = vsel %vm2142, %v2843, 0
      %2881 = vmatpush.msra.mxu0 0.0
      %2882 = vmatpush.msra.mxu0 0.0
      %2883 = vmatpush.msra.mxu0 0.0
      %2884 = vmatpush.msra.mxu0 0.0
      %2885 = vmatpush.msra.mxu0 0.0
      %2886 = vmatpush.msra.mxu0 0.0
      %2887 = vmatpush.msra.mxu0 0.0
      %2888 = vmatpush.msra.mxu0 0.0
      %2889 = vmatpush.msra.mxu0 0.0
      %2890 = vmatpush.msra.mxu0 0.0
      %2891 = vmatpush.msra.mxu0 0.0
      %2892 = vmatpush.msra.mxu0 0.0
      %2893 = vmatpush.msra.mxu0 0.0
      %2894 = vmatpush.msra.mxu0 0.0
      %2895 = vmatpush.msra.mxu0 %v2863
      %2896 = vmatpush.msra.mxu0 %v2860
      %2897 = vmatmul.f32.gmra.mxu0 %v2873
      %v2898 = vpop.f32.mrf.mxu0
      %v2899 = vadd.f32 0.0, %v2898
      %2900 = vmatmul.f32.gmra.mxu0 %v2876
      %v2901 = vpop.f32.mrf.mxu0
      %v2902 = vadd.f32 0.0, %v2901
      %2903 = vmatmul.f32.gmra.mxu0 %v2879
      %v2904 = vpop.f32.mrf.mxu0
      %v2905 = vadd.f32 0.0, %v2904
      %2906 = vdwg.mxu0
      %2907 = vmatpush.msra.mxu0 0.0
      %2908 = vmatpush.msra.mxu0 0.0
      %2909 = vmatpush.msra.mxu0 0.0
      %2910 = vmatpush.msra.mxu0 0.0
      %2911 = vmatpush.msra.mxu0 0.0
      %2912 = vmatpush.msra.mxu0 0.0
      %2913 = vmatpush.msra.mxu0 0.0
      %2914 = vmatpush.msra.mxu0 0.0
      %2915 = vmatpush.msra.mxu0 0.0
      %2916 = vmatpush.msra.mxu0 0.0
      %2917 = vmatpush.msra.mxu0 0.0
      %2918 = vmatpush.msra.mxu0 0.0
      %2919 = vmatpush.msra.mxu0 0.0
      %2920 = vmatpush.msra.mxu0 0.0
      %2921 = vmatpush.msra.mxu0 %v2864
      %2922 = vmatpush.msra.mxu0 %v2861
      %2923 = vmatmul.f32.gmra.mxu0 %v2873
      %v2924 = vpop.f32.mrf.mxu0
      %v2925 = vadd.f32 0.0, %v2924
      %2926 = vmatmul.f32.gmra.mxu0 %v2876
      %v2927 = vpop.f32.mrf.mxu0
      %v2928 = vadd.f32 0.0, %v2927
      %2929 = vmatmul.f32.gmra.mxu0 %v2879
      %v2930 = vpop.f32.mrf.mxu0
      %v2931 = vadd.f32 0.0, %v2930
      %2932 = vdwg.mxu0
      %2933 = vmatpush.msra.mxu0 0.0
      %2934 = vmatpush.msra.mxu0 0.0
      %2935 = vmatpush.msra.mxu0 0.0
      %2936 = vmatpush.msra.mxu0 0.0
      %2937 = vmatpush.msra.mxu0 0.0
      %2938 = vmatpush.msra.mxu0 0.0
      %2939 = vmatpush.msra.mxu0 0.0
      %2940 = vmatpush.msra.mxu0 0.0
      %2941 = vmatpush.msra.mxu0 0.0
      %2942 = vmatpush.msra.mxu0 0.0
      %2943 = vmatpush.msra.mxu0 0.0
      %2944 = vmatpush.msra.mxu0 0.0
      %2945 = vmatpush.msra.mxu0 0.0
      %2946 = vmatpush.msra.mxu0 0.0
      %2947 = vmatpush.msra.mxu0 %v2865
      %2948 = vmatpush.msra.mxu0 %v2862
      %2949 = vmatmul.f32.gmra.mxu0 %v2873
      %v2950 = vpop.f32.mrf.mxu0
      %v2951 = vadd.f32 0.0, %v2950
      %2952 = vmatmul.f32.gmra.mxu0 %v2876
      %v2953 = vpop.f32.mrf.mxu0
      %v2954 = vadd.f32 0.0, %v2953
      %2955 = vmatmul.f32.gmra.mxu0 %v2879
      %v2956 = vpop.f32.mrf.mxu0
      %v2957 = vadd.f32 0.0, %v2956
      %2958 = vdwg.mxu0
      %v2959 = vadd.f32 %v2832, %v2899
      %v2960 = vadd.f32 %v2833, %v2925
      %v2961 = vadd.f32 %v2834, %v2951
      %v2962 = vadd.f32 %v2835, %v2902
      %v2963 = vadd.f32 %v2836, %v2928
      %v2964 = vadd.f32 %v2837, %v2954
      %v2965 = vadd.f32 %v2838, %v2905
      %v2966 = vadd.f32 %v2839, %v2931
      %v2967 = vadd.f32 %v2840, %v2957
      %v2968 = vld [vmem:[%s6 + $0xa8] sm:$0xff]
      %v2969 = vld [vmem:[%s6 + $0xb0] sm:$0xff]
      %v2970 = vld [vmem:[%s6 + $0xb8] sm:$0xff]
      %2971 = vrot.lane.b32.xlu0 %v2701, 110
      %v2972 = vpop.permute.xlu0 %2971
      %2973 = vrot.lane.b32.xlu0 %v2702, 110
      %v2974 = vpop.permute.xlu0 %2973
      %2975 = vrot.lane.b32.xlu0 %v2703, 110
      %v2976 = vpop.permute.xlu0 %2975
      %2977 = vrot.lane.b32.xlu0 %v2704, 110
      %v2978 = vpop.permute.xlu0 %2977
      %2979 = vrot.lane.b32.xlu0 %v2705, 110
      %v2980 = vpop.permute.xlu0 %2979
      %2981 = vrot.lane.b32.xlu0 %v2706, 110
      %v2982 = vpop.permute.xlu0 %2981
      %2983 = vrot.lane.b32.xlu0 %v2707, 110
      %v2984 = vpop.permute.xlu0 %2983
      %2985 = vrot.lane.b32.xlu0 %v2708, 110
      %v2986 = vpop.permute.xlu0 %2985
      %v2987 = vsel %vm1013, %v2972, %v2974
      %v2988 = vsel %vm1013, %v2974, %v2976
      %v2989 = vsel %vm1013, %v2976, %v2978
      %v2990 = vsel %vm1013, %v2980, %v2982
      %v2991 = vsel %vm1013, %v2982, %v2984
      %v2992 = vsel %vm1013, %v2984, %v2986
      %v3000 = vsel %vm2142, %v2968, 0
      %v3003 = vsel %vm2142, %v2969, 0
      %v3006 = vsel %vm2142, %v2970, 0
      %3008 = vmatpush.msra.mxu0 0.0
      %3009 = vmatpush.msra.mxu0 0.0
      %3010 = vmatpush.msra.mxu0 0.0
      %3011 = vmatpush.msra.mxu0 0.0
      %3012 = vmatpush.msra.mxu0 0.0
      %3013 = vmatpush.msra.mxu0 0.0
      %3014 = vmatpush.msra.mxu0 0.0
      %3015 = vmatpush.msra.mxu0 0.0
      %3016 = vmatpush.msra.mxu0 0.0
      %3017 = vmatpush.msra.mxu0 0.0
      %3018 = vmatpush.msra.mxu0 0.0
      %3019 = vmatpush.msra.mxu0 0.0
      %3020 = vmatpush.msra.mxu0 0.0
      %3021 = vmatpush.msra.mxu0 0.0
      %3022 = vmatpush.msra.mxu0 %v2990
      %3023 = vmatpush.msra.mxu0 %v2987
      %3024 = vmatmul.f32.gmra.mxu0 %v3000
      %v3025 = vpop.f32.mrf.mxu0
      %v3026 = vadd.f32 0.0, %v3025
      %3027 = vmatmul.f32.gmra.mxu0 %v3003
      %v3028 = vpop.f32.mrf.mxu0
      %v3029 = vadd.f32 0.0, %v3028
      %3030 = vmatmul.f32.gmra.mxu0 %v3006
      %v3031 = vpop.f32.mrf.mxu0
      %v3032 = vadd.f32 0.0, %v3031
      %3033 = vdwg.mxu0
      %3034 = vmatpush.msra.mxu0 0.0
      %3035 = vmatpush.msra.mxu0 0.0
      %3036 = vmatpush.msra.mxu0 0.0
      %3037 = vmatpush.msra.mxu0 0.0
      %3038 = vmatpush.msra.mxu0 0.0
      %3039 = vmatpush.msra.mxu0 0.0
      %3040 = vmatpush.msra.mxu0 0.0
      %3041 = vmatpush.msra.mxu0 0.0
      %3042 = vmatpush.msra.mxu0 0.0
      %3043 = vmatpush.msra.mxu0 0.0
      %3044 = vmatpush.msra.mxu0 0.0
      %3045 = vmatpush.msra.mxu0 0.0
      %3046 = vmatpush.msra.mxu0 0.0
      %3047 = vmatpush.msra.mxu0 0.0
      %3048 = vmatpush.msra.mxu0 %v2991
      %3049 = vmatpush.msra.mxu0 %v2988
      %3050 = vmatmul.f32.gmra.mxu0 %v3000
      %v3051 = vpop.f32.mrf.mxu0
      %v3052 = vadd.f32 0.0, %v3051
      %3053 = vmatmul.f32.gmra.mxu0 %v3003
      %v3054 = vpop.f32.mrf.mxu0
      %v3055 = vadd.f32 0.0, %v3054
      %3056 = vmatmul.f32.gmra.mxu0 %v3006
      %v3057 = vpop.f32.mrf.mxu0
      %v3058 = vadd.f32 0.0, %v3057
      %3059 = vdwg.mxu0
      %3060 = vmatpush.msra.mxu0 0.0
      %3061 = vmatpush.msra.mxu0 0.0
      %3062 = vmatpush.msra.mxu0 0.0
      %3063 = vmatpush.msra.mxu0 0.0
      %3064 = vmatpush.msra.mxu0 0.0
      %3065 = vmatpush.msra.mxu0 0.0
      %3066 = vmatpush.msra.mxu0 0.0
      %3067 = vmatpush.msra.mxu0 0.0
      %3068 = vmatpush.msra.mxu0 0.0
      %3069 = vmatpush.msra.mxu0 0.0
      %3070 = vmatpush.msra.mxu0 0.0
      %3071 = vmatpush.msra.mxu0 0.0
      %3072 = vmatpush.msra.mxu0 0.0
      %3073 = vmatpush.msra.mxu0 0.0
      %3074 = vmatpush.msra.mxu0 %v2992
      %3075 = vmatpush.msra.mxu0 %v2989
      %3076 = vmatmul.f32.gmra.mxu0 %v3000
      %v3077 = vpop.f32.mrf.mxu0
      %v3078 = vadd.f32 0.0, %v3077
      %3079 = vmatmul.f32.gmra.mxu0 %v3003
      %v3080 = vpop.f32.mrf.mxu0
      %v3081 = vadd.f32 0.0, %v3080
      %3082 = vmatmul.f32.gmra.mxu0 %v3006
      %v3083 = vpop.f32.mrf.mxu0
      %v3084 = vadd.f32 0.0, %v3083
      %3085 = vdwg.mxu0
      %v3086 = vadd.f32 %v2959, %v3026
      %v3087 = vadd.f32 %v2960, %v3052
      %v3088 = vadd.f32 %v2961, %v3078
      %v3089 = vadd.f32 %v2962, %v3029
      %v3090 = vadd.f32 %v2963, %v3055
      %v3091 = vadd.f32 %v2964, %v3081
      %v3092 = vadd.f32 %v2965, %v3032
      %v3093 = vadd.f32 %v2966, %v3058
      %v3094 = vadd.f32 %v2967, %v3084
      %v3095 = vld [vmem:[%s6 + $0xc0] sm:$0xff]
      %v3096 = vld [vmem:[%s6 + $0xc8] sm:$0xff]
      %v3097 = vld [vmem:[%s6 + $0xd0] sm:$0xff]
      %3098 = vrot.lane.b32.xlu0 %v2701, 109
      %v3099 = vpop.permute.xlu0 %3098
      %3100 = vrot.lane.b32.xlu0 %v2702, 109
      %v3101 = vpop.permute.xlu0 %3100
      %3102 = vrot.lane.b32.xlu0 %v2703, 109
      %v3103 = vpop.permute.xlu0 %3102
      %3104 = vrot.lane.b32.xlu0 %v2704, 109
      %v3105 = vpop.permute.xlu0 %3104
      %3106 = vrot.lane.b32.xlu0 %v2705, 109
      %v3107 = vpop.permute.xlu0 %3106
      %3108 = vrot.lane.b32.xlu0 %v2706, 109
      %v3109 = vpop.permute.xlu0 %3108
      %3110 = vrot.lane.b32.xlu0 %v2707, 109
      %v3111 = vpop.permute.xlu0 %3110
      %3112 = vrot.lane.b32.xlu0 %v2708, 109
      %v3113 = vpop.permute.xlu0 %3112
      %v3114 = vsel %vm1095, %v3099, %v3101
      %v3115 = vsel %vm1095, %v3101, %v3103
      %v3116 = vsel %vm1095, %v3103, %v3105
      %v3117 = vsel %vm1095, %v3107, %v3109
      %v3118 = vsel %vm1095, %v3109, %v3111
      %v3119 = vsel %vm1095, %v3111, %v3113
      %v3127 = vsel %vm2142, %v3095, 0
      %v3130 = vsel %vm2142, %v3096, 0
      %v3133 = vsel %vm2142, %v3097, 0
      %3135 = vmatpush.msra.mxu0 0.0
      %3136 = vmatpush.msra.mxu0 0.0
      %3137 = vmatpush.msra.mxu0 0.0
      %3138 = vmatpush.msra.mxu0 0.0
      %3139 = vmatpush.msra.mxu0 0.0
      %3140 = vmatpush.msra.mxu0 0.0
      %3141 = vmatpush.msra.mxu0 0.0
      %3142 = vmatpush.msra.mxu0 0.0
      %3143 = vmatpush.msra.mxu0 0.0
      %3144 = vmatpush.msra.mxu0 0.0
      %3145 = vmatpush.msra.mxu0 0.0
      %3146 = vmatpush.msra.mxu0 0.0
      %3147 = vmatpush.msra.mxu0 0.0
      %3148 = vmatpush.msra.mxu0 0.0
      %3149 = vmatpush.msra.mxu0 %v3117
      %3150 = vmatpush.msra.mxu0 %v3114
      %3151 = vmatmul.f32.gmra.mxu0 %v3127
      %v3152 = vpop.f32.mrf.mxu0
      %v3153 = vadd.f32 0.0, %v3152
      %3154 = vmatmul.f32.gmra.mxu0 %v3130
      %v3155 = vpop.f32.mrf.mxu0
      %v3156 = vadd.f32 0.0, %v3155
      %3157 = vmatmul.f32.gmra.mxu0 %v3133
      %v3158 = vpop.f32.mrf.mxu0
      %v3159 = vadd.f32 0.0, %v3158
      %3160 = vdwg.mxu0
      %3161 = vmatpush.msra.mxu0 0.0
      %3162 = vmatpush.msra.mxu0 0.0
      %3163 = vmatpush.msra.mxu0 0.0
      %3164 = vmatpush.msra.mxu0 0.0
      %3165 = vmatpush.msra.mxu0 0.0
      %3166 = vmatpush.msra.mxu0 0.0
      %3167 = vmatpush.msra.mxu0 0.0
      %3168 = vmatpush.msra.mxu0 0.0
      %3169 = vmatpush.msra.mxu0 0.0
      %3170 = vmatpush.msra.mxu0 0.0
      %3171 = vmatpush.msra.mxu0 0.0
      %3172 = vmatpush.msra.mxu0 0.0
      %3173 = vmatpush.msra.mxu0 0.0
      %3174 = vmatpush.msra.mxu0 0.0
      %3175 = vmatpush.msra.mxu0 %v3118
      %3176 = vmatpush.msra.mxu0 %v3115
      %3177 = vmatmul.f32.gmra.mxu0 %v3127
      %v3178 = vpop.f32.mrf.mxu0
      %v3179 = vadd.f32 0.0, %v3178
      %3180 = vmatmul.f32.gmra.mxu0 %v3130
      %v3181 = vpop.f32.mrf.mxu0
      %v3182 = vadd.f32 0.0, %v3181
      %3183 = vmatmul.f32.gmra.mxu0 %v3133
      %v3184 = vpop.f32.mrf.mxu0
      %v3185 = vadd.f32 0.0, %v3184
      %3186 = vdwg.mxu0
      %3187 = vmatpush.msra.mxu0 0.0
      %3188 = vmatpush.msra.mxu0 0.0
      %3189 = vmatpush.msra.mxu0 0.0
      %3190 = vmatpush.msra.mxu0 0.0
      %3191 = vmatpush.msra.mxu0 0.0
      %3192 = vmatpush.msra.mxu0 0.0
      %3193 = vmatpush.msra.mxu0 0.0
      %3194 = vmatpush.msra.mxu0 0.0
      %3195 = vmatpush.msra.mxu0 0.0
      %3196 = vmatpush.msra.mxu0 0.0
      %3197 = vmatpush.msra.mxu0 0.0
      %3198 = vmatpush.msra.mxu0 0.0
      %3199 = vmatpush.msra.mxu0 0.0
      %3200 = vmatpush.msra.mxu0 0.0
      %3201 = vmatpush.msra.mxu0 %v3119
      %3202 = vmatpush.msra.mxu0 %v3116
      %3203 = vmatmul.f32.gmra.mxu0 %v3127
      %v3204 = vpop.f32.mrf.mxu0
      %v3205 = vadd.f32 0.0, %v3204
      %3206 = vmatmul.f32.gmra.mxu0 %v3130
      %v3207 = vpop.f32.mrf.mxu0
      %v3208 = vadd.f32 0.0, %v3207
      %3209 = vmatmul.f32.gmra.mxu0 %v3133
      %v3210 = vpop.f32.mrf.mxu0
      %v3211 = vadd.f32 0.0, %v3210
      %3212 = vdwg.mxu0
      %v3213 = vadd.f32 %v3086, %v3153
      %v3214 = vadd.f32 %v3087, %v3179
      %v3215 = vadd.f32 %v3088, %v3205
      %v3216 = vadd.f32 %v3089, %v3156
      %v3217 = vadd.f32 %v3090, %v3182
      %v3218 = vadd.f32 %v3091, %v3208
      %v3219 = vadd.f32 %v3092, %v3159
      %v3220 = vadd.f32 %v3093, %v3185
      %v3221 = vadd.f32 %v3094, %v3211
      %v3222 = vld [vmem:[%s7] sm:$0xff]
      %v3223 = vld [vmem:[%s7 + $0x8] sm:$0xff]
      %v3224 = vld [vmem:[%s7 + $0x10] sm:$0xff]
      %3226 = vset.pattern.permute.xlu0 0
      %3227 = vperm.xlu0 %3226, %v3222
      %v3228 = vpop.permute.xlu0 %3227
      %3231 = vset.pattern.permute.xlu0 0
      %3232 = vperm.xlu0 %3231, %v3223
      %v3233 = vpop.permute.xlu0 %3232
      %3236 = vset.pattern.permute.xlu0 0
      %3237 = vperm.xlu0 %3236, %v3224
      %v3238 = vpop.permute.xlu0 %3237
      %v3240 = vadd.f32 %v3213, %v3228
      %v3241 = vadd.f32 %v3214, %v3228
      %v3242 = vadd.f32 %v3215, %v3228
      %v3243 = vadd.f32 %v3216, %v3233
      %v3244 = vadd.f32 %v3217, %v3233
      %v3245 = vadd.f32 %v3218, %v3233
      %v3246 = vadd.f32 %v3219, %v3238
      %v3247 = vadd.f32 %v3220, %v3238
      %v3248 = vadd.f32 %v3221, %v3238
      %v3249 = vmax.f32 %v3240, 0.0
      %v3250 = vmax.f32 %v3241, 0.0
      %v3251 = vmax.f32 %v3242, 0.0
      %v3252 = vmax.f32 %v3243, 0.0
      %v3253 = vmax.f32 %v3244, 0.0
      %v3254 = vmax.f32 %v3245, 0.0
      %v3255 = vmax.f32 %v3246, 0.0
      %v3256 = vmax.f32 %v3247, 0.0
      %v3257 = vmax.f32 %v3248, 0.0
      %v3258 = vsel %vm1184, %v3249, 0.0
      %v3259 = vsel %vm1185, %v3250, 0.0
      %v3260 = vsel %vm1186, %v3251, 0.0
      %v3261 = vsel %vm1184, %v3252, 0.0
      %v3262 = vsel %vm1185, %v3253, 0.0
      %v3263 = vsel %vm1186, %v3254, 0.0
      %v3264 = vsel %vm1184, %v3255, 0.0
      %v3265 = vsel %vm1185, %v3256, 0.0
      %v3266 = vsel %vm1186, %v3257, 0.0
      %3267 = vst [vmem:[#allocation4 + $0x8] sm:$0xff] %v3258
      %3268 = vst [vmem:[#allocation4 + $0x10] sm:$0xff] %v3259
      %3269 = vst [vmem:[#allocation4 + $0x18] sm:$0xff] %v3260
      %3270 = vst [vmem:[#allocation4 + $0x30] sm:$0xff] %v3261
      %3271 = vst [vmem:[#allocation4 + $0x38] sm:$0xff] %v3262
      %3272 = vst [vmem:[#allocation4 + $0x40] sm:$0xff] %v3263
      %3273 = vst [vmem:[#allocation4 + $0x58] sm:$0xff] %v3264
      %3274 = vst [vmem:[#allocation4 + $0x60] sm:$0xff] %v3265
      %3275 = vst [vmem:[#allocation4 + $0x68] sm:$0xff] %v3266
      %v3276 = vld [vmem:[%s8] sm:$0xff]
      %v3277 = vld [vmem:[%s8 + $0x8] sm:$0xff]
      %v3278 = vld [vmem:[%s8 + $0x10] sm:$0xff]
      %v3279 = vld [vmem:[#allocation4] sm:$0xff]
      %v3280 = vld [vmem:[#allocation4 + $0x8] sm:$0xff]
      %v3281 = vld [vmem:[#allocation4 + $0x10] sm:$0xff]
      %v3282 = vld [vmem:[#allocation4 + $0x18] sm:$0xff]
      %v3283 = vld [vmem:[#allocation4 + $0x28] sm:$0xff]
      %v3284 = vld [vmem:[#allocation4 + $0x30] sm:$0xff]
      %v3285 = vld [vmem:[#allocation4 + $0x38] sm:$0xff]
      %v3286 = vld [vmem:[#allocation4 + $0x40] sm:$0xff]
      %v3287 = vld [vmem:[#allocation4 + $0x50] sm:$0xff]
      %v3288 = vld [vmem:[#allocation4 + $0x58] sm:$0xff]
      %v3289 = vld [vmem:[#allocation4 + $0x60] sm:$0xff]
      %v3290 = vld [vmem:[#allocation4 + $0x68] sm:$0xff]
      %v3291 = vld [vmem:[%s8 + $0x18] sm:$0xff]
      %v3292 = vld [vmem:[%s8 + $0x20] sm:$0xff]
      %v3293 = vld [vmem:[%s8 + $0x28] sm:$0xff]
      %3306 = vrot.lane.b32.xlu0 %v3279, 18
      %v3307 = vpop.permute.xlu0 %3306
      %3308 = vrot.lane.b32.xlu0 %v3280, 18
      %v3309 = vpop.permute.xlu0 %3308
      %3310 = vrot.lane.b32.xlu0 %v3281, 18
      %v3311 = vpop.permute.xlu0 %3310
      %3312 = vrot.lane.b32.xlu0 %v3282, 18
      %v3313 = vpop.permute.xlu0 %3312
      %3314 = vrot.lane.b32.xlu0 %v3283, 18
      %v3315 = vpop.permute.xlu0 %3314
      %3316 = vrot.lane.b32.xlu0 %v3284, 18
      %v3317 = vpop.permute.xlu0 %3316
      %3318 = vrot.lane.b32.xlu0 %v3285, 18
      %v3319 = vpop.permute.xlu0 %3318
      %3320 = vrot.lane.b32.xlu0 %v3286, 18
      %v3321 = vpop.permute.xlu0 %3320
      %3322 = vrot.lane.b32.xlu0 %v3287, 18
      %v3323 = vpop.permute.xlu0 %3322
      %3324 = vrot.lane.b32.xlu0 %v3288, 18
      %v3325 = vpop.permute.xlu0 %3324
      %3326 = vrot.lane.b32.xlu0 %v3289, 18
      %v3327 = vpop.permute.xlu0 %3326
      %3328 = vrot.lane.b32.xlu0 %v3290, 18
      %v3329 = vpop.permute.xlu0 %3328
      %v3330 = vsel %vm452, %v3307, %v3309
      %v3331 = vsel %vm452, %v3309, %v3311
      %v3332 = vsel %vm452, %v3311, %v3313
      %v3333 = vsel %vm452, %v3315, %v3317
      %v3334 = vsel %vm452, %v3317, %v3319
      %v3335 = vsel %vm452, %v3319, %v3321
      %v3336 = vsel %vm452, %v3323, %v3325
      %v3337 = vsel %vm452, %v3325, %v3327
      %v3338 = vsel %vm452, %v3327, %v3329
      %vm3348 = vcmask 195584
      %v3350 = vsel %vm3348, %v3291, 0
      %v3353 = vsel %vm3348, %v3292, 0
      %v3356 = vsel %vm3348, %v3293, 0
      %3358 = vmatpush.msra.mxu0 0.0
      %3359 = vmatpush.msra.mxu0 0.0
      %3360 = vmatpush.msra.mxu0 0.0
      %3361 = vmatpush.msra.mxu0 0.0
      %3362 = vmatpush.msra.mxu0 0.0
      %3363 = vmatpush.msra.mxu0 0.0
      %3364 = vmatpush.msra.mxu0 0.0
      %3365 = vmatpush.msra.mxu0 0.0
      %3366 = vmatpush.msra.mxu0 0.0
      %3367 = vmatpush.msra.mxu0 0.0
      %3368 = vmatpush.msra.mxu0 0.0
      %3369 = vmatpush.msra.mxu0 0.0
      %3370 = vmatpush.msra.mxu0 0.0
      %3371 = vmatpush.msra.mxu0 %v3336
      %3372 = vmatpush.msra.mxu0 %v3333
      %3373 = vmatpush.msra.mxu0 %v3330
      %3374 = vmatmul.f32.gmra.mxu0 %v3350
      %v3375 = vpop.f32.mrf.mxu0
      %v3376 = vadd.f32 0.0, %v3375
      %3377 = vmatmul.f32.gmra.mxu0 %v3353
      %v3378 = vpop.f32.mrf.mxu0
      %v3379 = vadd.f32 0.0, %v3378
      %3380 = vmatmul.f32.gmra.mxu0 %v3356
      %v3381 = vpop.f32.mrf.mxu0
      %v3382 = vadd.f32 0.0, %v3381
      %3383 = vdwg.mxu0
      %3384 = vmatpush.msra.mxu0 0.0
      %3385 = vmatpush.msra.mxu0 0.0
      %3386 = vmatpush.msra.mxu0 0.0
      %3387 = vmatpush.msra.mxu0 0.0
      %3388 = vmatpush.msra.mxu0 0.0
      %3389 = vmatpush.msra.mxu0 0.0
      %3390 = vmatpush.msra.mxu0 0.0
      %3391 = vmatpush.msra.mxu0 0.0
      %3392 = vmatpush.msra.mxu0 0.0
      %3393 = vmatpush.msra.mxu0 0.0
      %3394 = vmatpush.msra.mxu0 0.0
      %3395 = vmatpush.msra.mxu0 0.0
      %3396 = vmatpush.msra.mxu0 0.0
      %3397 = vmatpush.msra.mxu0 %v3337
      %3398 = vmatpush.msra.mxu0 %v3334
      %3399 = vmatpush.msra.mxu0 %v3331
      %3400 = vmatmul.f32.gmra.mxu0 %v3350
      %v3401 = vpop.f32.mrf.mxu0
      %v3402 = vadd.f32 0.0, %v3401
      %3403 = vmatmul.f32.gmra.mxu0 %v3353
      %v3404 = vpop.f32.mrf.mxu0
      %v3405 = vadd.f32 0.0, %v3404
      %3406 = vmatmul.f32.gmra.mxu0 %v3356
      %v3407 = vpop.f32.mrf.mxu0
      %v3408 = vadd.f32 0.0, %v3407
      %3409 = vdwg.mxu0
      %3410 = vmatpush.msra.mxu0 0.0
      %3411 = vmatpush.msra.mxu0 0.0
      %3412 = vmatpush.msra.mxu0 0.0
      %3413 = vmatpush.msra.mxu0 0.0
      %3414 = vmatpush.msra.mxu0 0.0
      %3415 = vmatpush.msra.mxu0 0.0
      %3416 = vmatpush.msra.mxu0 0.0
      %3417 = vmatpush.msra.mxu0 0.0
      %3418 = vmatpush.msra.mxu0 0.0
      %3419 = vmatpush.msra.mxu0 0.0
      %3420 = vmatpush.msra.mxu0 0.0
      %3421 = vmatpush.msra.mxu0 0.0
      %3422 = vmatpush.msra.mxu0 0.0
      %3423 = vmatpush.msra.mxu0 %v3338
      %3424 = vmatpush.msra.mxu0 %v3335
      %3425 = vmatpush.msra.mxu0 %v3332
      %3426 = vmatmul.f32.gmra.mxu0 %v3350
      %v3427 = vpop.f32.mrf.mxu0
      %v3428 = vadd.f32 0.0, %v3427
      %3429 = vmatmul.f32.gmra.mxu0 %v3353
      %v3430 = vpop.f32.mrf.mxu0
      %v3431 = vadd.f32 0.0, %v3430
      %3432 = vmatmul.f32.gmra.mxu0 %v3356
      %v3433 = vpop.f32.mrf.mxu0
      %v3434 = vadd.f32 0.0, %v3433
      %3435 = vdwg.mxu0
      %3436 = vrot.lane.b32.xlu0 %v3279, 19
      %v3437 = vpop.permute.xlu0 %3436
      %3438 = vrot.lane.b32.xlu0 %v3280, 19
      %v3439 = vpop.permute.xlu0 %3438
      %3440 = vrot.lane.b32.xlu0 %v3281, 19
      %v3441 = vpop.permute.xlu0 %3440
      %3442 = vrot.lane.b32.xlu0 %v3282, 19
      %v3443 = vpop.permute.xlu0 %3442
      %3444 = vrot.lane.b32.xlu0 %v3283, 19
      %v3445 = vpop.permute.xlu0 %3444
      %3446 = vrot.lane.b32.xlu0 %v3284, 19
      %v3447 = vpop.permute.xlu0 %3446
      %3448 = vrot.lane.b32.xlu0 %v3285, 19
      %v3449 = vpop.permute.xlu0 %3448
      %3450 = vrot.lane.b32.xlu0 %v3286, 19
      %v3451 = vpop.permute.xlu0 %3450
      %3452 = vrot.lane.b32.xlu0 %v3287, 19
      %v3453 = vpop.permute.xlu0 %3452
      %3454 = vrot.lane.b32.xlu0 %v3288, 19
      %v3455 = vpop.permute.xlu0 %3454
      %3456 = vrot.lane.b32.xlu0 %v3289, 19
      %v3457 = vpop.permute.xlu0 %3456
      %3458 = vrot.lane.b32.xlu0 %v3290, 19
      %v3459 = vpop.permute.xlu0 %3458
      %v3460 = vsel %vm531, %v3437, %v3439
      %v3461 = vsel %vm531, %v3439, %v3441
      %v3462 = vsel %vm531, %v3441, %v3443
      %v3463 = vsel %vm531, %v3445, %v3447
      %v3464 = vsel %vm531, %v3447, %v3449
      %v3465 = vsel %vm531, %v3449, %v3451
      %v3466 = vsel %vm531, %v3453, %v3455
      %v3467 = vsel %vm531, %v3455, %v3457
      %v3468 = vsel %vm531, %v3457, %v3459
      %v3479 = vsel %vm3348, %v3276, 0
      %v3482 = vsel %vm3348, %v3277, 0
      %v3485 = vsel %vm3348, %v3278, 0
      %3487 = vmatpush.msra.mxu0 0.0
      %3488 = vmatpush.msra.mxu0 0.0
      %3489 = vmatpush.msra.mxu0 0.0
      %3490 = vmatpush.msra.mxu0 0.0
      %3491 = vmatpush.msra.mxu0 0.0
      %3492 = vmatpush.msra.mxu0 0.0
      %3493 = vmatpush.msra.mxu0 0.0
      %3494 = vmatpush.msra.mxu0 0.0
      %3495 = vmatpush.msra.mxu0 0.0
      %3496 = vmatpush.msra.mxu0 0.0
      %3497 = vmatpush.msra.mxu0 0.0
      %3498 = vmatpush.msra.mxu0 0.0
      %3499 = vmatpush.msra.mxu0 0.0
      %3500 = vmatpush.msra.mxu0 %v3466
      %3501 = vmatpush.msra.mxu0 %v3463
      %3502 = vmatpush.msra.mxu0 %v3460
      %3503 = vmatmul.f32.gmra.mxu0 %v3479
      %v3504 = vpop.f32.mrf.mxu0
      %v3505 = vadd.f32 %v3376, %v3504
      %3506 = vmatmul.f32.gmra.mxu0 %v3482
      %v3507 = vpop.f32.mrf.mxu0
      %v3508 = vadd.f32 %v3379, %v3507
      %3509 = vmatmul.f32.gmra.mxu0 %v3485
      %v3510 = vpop.f32.mrf.mxu0
      %v3511 = vadd.f32 %v3382, %v3510
      %3512 = vdwg.mxu0
      %3513 = vmatpush.msra.mxu0 0.0
      %3514 = vmatpush.msra.mxu0 0.0
      %3515 = vmatpush.msra.mxu0 0.0
      %3516 = vmatpush.msra.mxu0 0.0
      %3517 = vmatpush.msra.mxu0 0.0
      %3518 = vmatpush.msra.mxu0 0.0
      %3519 = vmatpush.msra.mxu0 0.0
      %3520 = vmatpush.msra.mxu0 0.0
      %3521 = vmatpush.msra.mxu0 0.0
      %3522 = vmatpush.msra.mxu0 0.0
      %3523 = vmatpush.msra.mxu0 0.0
      %3524 = vmatpush.msra.mxu0 0.0
      %3525 = vmatpush.msra.mxu0 0.0
      %3526 = vmatpush.msra.mxu0 %v3467
      %3527 = vmatpush.msra.mxu0 %v3464
      %3528 = vmatpush.msra.mxu0 %v3461
      %3529 = vmatmul.f32.gmra.mxu0 %v3479
      %v3530 = vpop.f32.mrf.mxu0
      %v3531 = vadd.f32 %v3402, %v3530
      %3532 = vmatmul.f32.gmra.mxu0 %v3482
      %v3533 = vpop.f32.mrf.mxu0
      %v3534 = vadd.f32 %v3405, %v3533
      %3535 = vmatmul.f32.gmra.mxu0 %v3485
      %v3536 = vpop.f32.mrf.mxu0
      %v3537 = vadd.f32 %v3408, %v3536
      %3538 = vdwg.mxu0
      %3539 = vmatpush.msra.mxu0 0.0
      %3540 = vmatpush.msra.mxu0 0.0
      %3541 = vmatpush.msra.mxu0 0.0
      %3542 = vmatpush.msra.mxu0 0.0
      %3543 = vmatpush.msra.mxu0 0.0
      %3544 = vmatpush.msra.mxu0 0.0
      %3545 = vmatpush.msra.mxu0 0.0
      %3546 = vmatpush.msra.mxu0 0.0
      %3547 = vmatpush.msra.mxu0 0.0
      %3548 = vmatpush.msra.mxu0 0.0
      %3549 = vmatpush.msra.mxu0 0.0
      %3550 = vmatpush.msra.mxu0 0.0
      %3551 = vmatpush.msra.mxu0 0.0
      %3552 = vmatpush.msra.mxu0 %v3468
      %3553 = vmatpush.msra.mxu0 %v3465
      %3554 = vmatpush.msra.mxu0 %v3462
      %3555 = vmatmul.f32.gmra.mxu0 %v3479
      %v3556 = vpop.f32.mrf.mxu0
      %v3557 = vadd.f32 %v3428, %v3556
      %3558 = vmatmul.f32.gmra.mxu0 %v3482
      %v3559 = vpop.f32.mrf.mxu0
      %v3560 = vadd.f32 %v3431, %v3559
      %3561 = vmatmul.f32.gmra.mxu0 %v3485
      %v3562 = vpop.f32.mrf.mxu0
      %v3563 = vadd.f32 %v3434, %v3562
      %3564 = vdwg.mxu0
      %v3565 = vld [vmem:[%s8 + $0x30] sm:$0xff]
      %v3566 = vld [vmem:[%s8 + $0x38] sm:$0xff]
      %v3567 = vld [vmem:[%s8 + $0x40] sm:$0xff]
      %3568 = vrot.lane.b32.xlu0 %v3279, 17
      %v3569 = vpop.permute.xlu0 %3568
      %3570 = vrot.lane.b32.xlu0 %v3280, 17
      %v3571 = vpop.permute.xlu0 %3570
      %3572 = vrot.lane.b32.xlu0 %v3281, 17
      %v3573 = vpop.permute.xlu0 %3572
      %3574 = vrot.lane.b32.xlu0 %v3282, 17
      %v3575 = vpop.permute.xlu0 %3574
      %3576 = vrot.lane.b32.xlu0 %v3283, 17
      %v3577 = vpop.permute.xlu0 %3576
      %3578 = vrot.lane.b32.xlu0 %v3284, 17
      %v3579 = vpop.permute.xlu0 %3578
      %3580 = vrot.lane.b32.xlu0 %v3285, 17
      %v3581 = vpop.permute.xlu0 %3580
      %3582 = vrot.lane.b32.xlu0 %v3286, 17
      %v3583 = vpop.permute.xlu0 %3582
      %3584 = vrot.lane.b32.xlu0 %v3287, 17
      %v3585 = vpop.permute.xlu0 %3584
      %3586 = vrot.lane.b32.xlu0 %v3288, 17
      %v3587 = vpop.permute.xlu0 %3586
      %3588 = vrot.lane.b32.xlu0 %v3289, 17
      %v3589 = vpop.permute.xlu0 %3588
      %3590 = vrot.lane.b32.xlu0 %v3290, 17
      %v3591 = vpop.permute.xlu0 %3590
      %v3592 = vsel %vm610, %v3569, %v3571
      %v3593 = vsel %vm610, %v3571, %v3573
      %v3594 = vsel %vm610, %v3573, %v3575
      %v3595 = vsel %vm610, %v3577, %v3579
      %v3596 = vsel %vm610, %v3579, %v3581
      %v3597 = vsel %vm610, %v3581, %v3583
      %v3598 = vsel %vm610, %v3585, %v3587
      %v3599 = vsel %vm610, %v3587, %v3589
      %v3600 = vsel %vm610, %v3589, %v3591
      %v3611 = vsel %vm3348, %v3565, 0
      %v3614 = vsel %vm3348, %v3566, 0
      %v3617 = vsel %vm3348, %v3567, 0
      %3619 = vmatpush.msra.mxu0 0.0
      %3620 = vmatpush.msra.mxu0 0.0
      %3621 = vmatpush.msra.mxu0 0.0
      %3622 = vmatpush.msra.mxu0 0.0
      %3623 = vmatpush.msra.mxu0 0.0
      %3624 = vmatpush.msra.mxu0 0.0
      %3625 = vmatpush.msra.mxu0 0.0
      %3626 = vmatpush.msra.mxu0 0.0
      %3627 = vmatpush.msra.mxu0 0.0
      %3628 = vmatpush.msra.mxu0 0.0
      %3629 = vmatpush.msra.mxu0 0.0
      %3630 = vmatpush.msra.mxu0 0.0
      %3631 = vmatpush.msra.mxu0 0.0
      %3632 = vmatpush.msra.mxu0 %v3598
      %3633 = vmatpush.msra.mxu0 %v3595
      %3634 = vmatpush.msra.mxu0 %v3592
      %3635 = vmatmul.f32.gmra.mxu0 %v3611
      %v3636 = vpop.f32.mrf.mxu0
      %v3637 = vadd.f32 0.0, %v3636
      %3638 = vmatmul.f32.gmra.mxu0 %v3614
      %v3639 = vpop.f32.mrf.mxu0
      %v3640 = vadd.f32 0.0, %v3639
      %3641 = vmatmul.f32.gmra.mxu0 %v3617
      %v3642 = vpop.f32.mrf.mxu0
      %v3643 = vadd.f32 0.0, %v3642
      %3644 = vdwg.mxu0
      %3645 = vmatpush.msra.mxu0 0.0
      %3646 = vmatpush.msra.mxu0 0.0
      %3647 = vmatpush.msra.mxu0 0.0
      %3648 = vmatpush.msra.mxu0 0.0
      %3649 = vmatpush.msra.mxu0 0.0
      %3650 = vmatpush.msra.mxu0 0.0
      %3651 = vmatpush.msra.mxu0 0.0
      %3652 = vmatpush.msra.mxu0 0.0
      %3653 = vmatpush.msra.mxu0 0.0
      %3654 = vmatpush.msra.mxu0 0.0
      %3655 = vmatpush.msra.mxu0 0.0
      %3656 = vmatpush.msra.mxu0 0.0
      %3657 = vmatpush.msra.mxu0 0.0
      %3658 = vmatpush.msra.mxu0 %v3599
      %3659 = vmatpush.msra.mxu0 %v3596
      %3660 = vmatpush.msra.mxu0 %v3593
      %3661 = vmatmul.f32.gmra.mxu0 %v3611
      %v3662 = vpop.f32.mrf.mxu0
      %v3663 = vadd.f32 0.0, %v3662
      %3664 = vmatmul.f32.gmra.mxu0 %v3614
      %v3665 = vpop.f32.mrf.mxu0
      %v3666 = vadd.f32 0.0, %v3665
      %3667 = vmatmul.f32.gmra.mxu0 %v3617
      %v3668 = vpop.f32.mrf.mxu0
      %v3669 = vadd.f32 0.0, %v3668
      %3670 = vdwg.mxu0
      %3671 = vmatpush.msra.mxu0 0.0
      %3672 = vmatpush.msra.mxu0 0.0
      %3673 = vmatpush.msra.mxu0 0.0
      %3674 = vmatpush.msra.mxu0 0.0
      %3675 = vmatpush.msra.mxu0 0.0
      %3676 = vmatpush.msra.mxu0 0.0
      %3677 = vmatpush.msra.mxu0 0.0
      %3678 = vmatpush.msra.mxu0 0.0
      %3679 = vmatpush.msra.mxu0 0.0
      %3680 = vmatpush.msra.mxu0 0.0
      %3681 = vmatpush.msra.mxu0 0.0
      %3682 = vmatpush.msra.mxu0 0.0
      %3683 = vmatpush.msra.mxu0 0.0
      %3684 = vmatpush.msra.mxu0 %v3600
      %3685 = vmatpush.msra.mxu0 %v3597
      %3686 = vmatpush.msra.mxu0 %v3594
      %3687 = vmatmul.f32.gmra.mxu0 %v3611
      %v3688 = vpop.f32.mrf.mxu0
      %v3689 = vadd.f32 0.0, %v3688
      %3690 = vmatmul.f32.gmra.mxu0 %v3614
      %v3691 = vpop.f32.mrf.mxu0
      %v3692 = vadd.f32 0.0, %v3691
      %3693 = vmatmul.f32.gmra.mxu0 %v3617
      %v3694 = vpop.f32.mrf.mxu0
      %v3695 = vadd.f32 0.0, %v3694
      %3696 = vdwg.mxu0
      %v3697 = vadd.f32 %v3505, %v3637
      %v3698 = vadd.f32 %v3531, %v3663
      %v3699 = vadd.f32 %v3557, %v3689
      %v3700 = vadd.f32 %v3508, %v3640
      %v3701 = vadd.f32 %v3534, %v3666
      %v3702 = vadd.f32 %v3560, %v3692
      %v3703 = vadd.f32 %v3511, %v3643
      %v3704 = vadd.f32 %v3537, %v3669
      %v3705 = vadd.f32 %v3563, %v3695
      %v3706 = vld [vmem:[%s8 + $0x48] sm:$0xff]
      %v3707 = vld [vmem:[%s8 + $0x50] sm:$0xff]
      %v3708 = vld [vmem:[%s8 + $0x58] sm:$0xff]
      %3709 = vrot.lane.b32.xlu0 %v3279, 1
      %v3710 = vpop.permute.xlu0 %3709
      %3711 = vrot.lane.b32.xlu0 %v3280, 1
      %v3712 = vpop.permute.xlu0 %3711
      %3713 = vrot.lane.b32.xlu0 %v3281, 1
      %v3714 = vpop.permute.xlu0 %3713
      %3715 = vrot.lane.b32.xlu0 %v3282, 1
      %v3716 = vpop.permute.xlu0 %3715
      %3717 = vrot.lane.b32.xlu0 %v3283, 1
      %v3718 = vpop.permute.xlu0 %3717
      %3719 = vrot.lane.b32.xlu0 %v3284, 1
      %v3720 = vpop.permute.xlu0 %3719
      %3721 = vrot.lane.b32.xlu0 %v3285, 1
      %v3722 = vpop.permute.xlu0 %3721
      %3723 = vrot.lane.b32.xlu0 %v3286, 1
      %v3724 = vpop.permute.xlu0 %3723
      %3725 = vrot.lane.b32.xlu0 %v3287, 1
      %v3726 = vpop.permute.xlu0 %3725
      %3727 = vrot.lane.b32.xlu0 %v3288, 1
      %v3728 = vpop.permute.xlu0 %3727
      %3729 = vrot.lane.b32.xlu0 %v3289, 1
      %v3730 = vpop.permute.xlu0 %3729
      %3731 = vrot.lane.b32.xlu0 %v3290, 1
      %v3732 = vpop.permute.xlu0 %3731
      %v3733 = vsel %vm692, %v3710, %v3712
      %v3734 = vsel %vm692, %v3712, %v3714
      %v3735 = vsel %vm692, %v3714, %v3716
      %v3736 = vsel %vm692, %v3718, %v3720
      %v3737 = vsel %vm692, %v3720, %v3722
      %v3738 = vsel %vm692, %v3722, %v3724
      %v3739 = vsel %vm692, %v3726, %v3728
      %v3740 = vsel %vm692, %v3728, %v3730
      %v3741 = vsel %vm692, %v3730, %v3732
      %v3752 = vsel %vm3348, %v3706, 0
      %v3755 = vsel %vm3348, %v3707, 0
      %v3758 = vsel %vm3348, %v3708, 0
      %3760 = vmatpush.msra.mxu0 0.0
      %3761 = vmatpush.msra.mxu0 0.0
      %3762 = vmatpush.msra.mxu0 0.0
      %3763 = vmatpush.msra.mxu0 0.0
      %3764 = vmatpush.msra.mxu0 0.0
      %3765 = vmatpush.msra.mxu0 0.0
      %3766 = vmatpush.msra.mxu0 0.0
      %3767 = vmatpush.msra.mxu0 0.0
      %3768 = vmatpush.msra.mxu0 0.0
      %3769 = vmatpush.msra.mxu0 0.0
      %3770 = vmatpush.msra.mxu0 0.0
      %3771 = vmatpush.msra.mxu0 0.0
      %3772 = vmatpush.msra.mxu0 0.0
      %3773 = vmatpush.msra.mxu0 %v3739
      %3774 = vmatpush.msra.mxu0 %v3736
      %3775 = vmatpush.msra.mxu0 %v3733
      %3776 = vmatmul.f32.gmra.mxu0 %v3752
      %v3777 = vpop.f32.mrf.mxu0
      %v3778 = vadd.f32 0.0, %v3777
      %3779 = vmatmul.f32.gmra.mxu0 %v3755
      %v3780 = vpop.f32.mrf.mxu0
      %v3781 = vadd.f32 0.0, %v3780
      %3782 = vmatmul.f32.gmra.mxu0 %v3758
      %v3783 = vpop.f32.mrf.mxu0
      %v3784 = vadd.f32 0.0, %v3783
      %3785 = vdwg.mxu0
      %3786 = vmatpush.msra.mxu0 0.0
      %3787 = vmatpush.msra.mxu0 0.0
      %3788 = vmatpush.msra.mxu0 0.0
      %3789 = vmatpush.msra.mxu0 0.0
      %3790 = vmatpush.msra.mxu0 0.0
      %3791 = vmatpush.msra.mxu0 0.0
      %3792 = vmatpush.msra.mxu0 0.0
      %3793 = vmatpush.msra.mxu0 0.0
      %3794 = vmatpush.msra.mxu0 0.0
      %3795 = vmatpush.msra.mxu0 0.0
      %3796 = vmatpush.msra.mxu0 0.0
      %3797 = vmatpush.msra.mxu0 0.0
      %3798 = vmatpush.msra.mxu0 0.0
      %3799 = vmatpush.msra.mxu0 %v3740
      %3800 = vmatpush.msra.mxu0 %v3737
      %3801 = vmatpush.msra.mxu0 %v3734
      %3802 = vmatmul.f32.gmra.mxu0 %v3752
      %v3803 = vpop.f32.mrf.mxu0
      %v3804 = vadd.f32 0.0, %v3803
      %3805 = vmatmul.f32.gmra.mxu0 %v3755
      %v3806 = vpop.f32.mrf.mxu0
      %v3807 = vadd.f32 0.0, %v3806
      %3808 = vmatmul.f32.gmra.mxu0 %v3758
      %v3809 = vpop.f32.mrf.mxu0
      %v3810 = vadd.f32 0.0, %v3809
      %3811 = vdwg.mxu0
      %3812 = vmatpush.msra.mxu0 0.0
      %3813 = vmatpush.msra.mxu0 0.0
      %3814 = vmatpush.msra.mxu0 0.0
      %3815 = vmatpush.msra.mxu0 0.0
      %3816 = vmatpush.msra.mxu0 0.0
      %3817 = vmatpush.msra.mxu0 0.0
      %3818 = vmatpush.msra.mxu0 0.0
      %3819 = vmatpush.msra.mxu0 0.0
      %3820 = vmatpush.msra.mxu0 0.0
      %3821 = vmatpush.msra.mxu0 0.0
      %3822 = vmatpush.msra.mxu0 0.0
      %3823 = vmatpush.msra.mxu0 0.0
      %3824 = vmatpush.msra.mxu0 0.0
      %3825 = vmatpush.msra.mxu0 %v3741
      %3826 = vmatpush.msra.mxu0 %v3738
      %3827 = vmatpush.msra.mxu0 %v3735
      %3828 = vmatmul.f32.gmra.mxu0 %v3752
      %v3829 = vpop.f32.mrf.mxu0
      %v3830 = vadd.f32 0.0, %v3829
      %3831 = vmatmul.f32.gmra.mxu0 %v3755
      %v3832 = vpop.f32.mrf.mxu0
      %v3833 = vadd.f32 0.0, %v3832
      %3834 = vmatmul.f32.gmra.mxu0 %v3758
      %v3835 = vpop.f32.mrf.mxu0
      %v3836 = vadd.f32 0.0, %v3835
      %3837 = vdwg.mxu0
      %v3838 = vadd.f32 %v3697, %v3778
      %v3839 = vadd.f32 %v3698, %v3804
      %v3840 = vadd.f32 %v3699, %v3830
      %v3841 = vadd.f32 %v3700, %v3781
      %v3842 = vadd.f32 %v3701, %v3807
      %v3843 = vadd.f32 %v3702, %v3833
      %v3844 = vadd.f32 %v3703, %v3784
      %v3845 = vadd.f32 %v3704, %v3810
      %v3846 = vadd.f32 %v3705, %v3836
      %v3847 = vld [vmem:[%s8 + $0x60] sm:$0xff]
      %v3848 = vld [vmem:[%s8 + $0x68] sm:$0xff]
      %v3849 = vld [vmem:[%s8 + $0x70] sm:$0xff]
      %v3851 = vsel %vm3348, %v3847, 0
      %v3854 = vsel %vm3348, %v3848, 0
      %v3857 = vsel %vm3348, %v3849, 0
      %3859 = vmatpush.msra.mxu0 0.0
      %3860 = vmatpush.msra.mxu0 0.0
      %3861 = vmatpush.msra.mxu0 0.0
      %3862 = vmatpush.msra.mxu0 0.0
      %3863 = vmatpush.msra.mxu0 0.0
      %3864 = vmatpush.msra.mxu0 0.0
      %3865 = vmatpush.msra.mxu0 0.0
      %3866 = vmatpush.msra.mxu0 0.0
      %3867 = vmatpush.msra.mxu0 0.0
      %3868 = vmatpush.msra.mxu0 0.0
      %3869 = vmatpush.msra.mxu0 0.0
      %3870 = vmatpush.msra.mxu0 0.0
      %3871 = vmatpush.msra.mxu0 0.0
      %3872 = vmatpush.msra.mxu0 %v3288
      %3873 = vmatpush.msra.mxu0 %v3284
      %3874 = vmatpush.msra.mxu0 %v3280
      %3875 = vmatmul.f32.gmra.mxu0 %v3851
      %v3876 = vpop.f32.mrf.mxu0
      %v3877 = vadd.f32 0.0, %v3876
      %3878 = vmatmul.f32.gmra.mxu0 %v3854
      %v3879 = vpop.f32.mrf.mxu0
      %v3880 = vadd.f32 0.0, %v3879
      %3881 = vmatmul.f32.gmra.mxu0 %v3857
      %v3882 = vpop.f32.mrf.mxu0
      %v3883 = vadd.f32 0.0, %v3882
      %3884 = vdwg.mxu0
      %3885 = vmatpush.msra.mxu0 0.0
      %3886 = vmatpush.msra.mxu0 0.0
      %3887 = vmatpush.msra.mxu0 0.0
      %3888 = vmatpush.msra.mxu0 0.0
      %3889 = vmatpush.msra.mxu0 0.0
      %3890 = vmatpush.msra.mxu0 0.0
      %3891 = vmatpush.msra.mxu0 0.0
      %3892 = vmatpush.msra.mxu0 0.0
      %3893 = vmatpush.msra.mxu0 0.0
      %3894 = vmatpush.msra.mxu0 0.0
      %3895 = vmatpush.msra.mxu0 0.0
      %3896 = vmatpush.msra.mxu0 0.0
      %3897 = vmatpush.msra.mxu0 0.0
      %3898 = vmatpush.msra.mxu0 %v3289
      %3899 = vmatpush.msra.mxu0 %v3285
      %3900 = vmatpush.msra.mxu0 %v3281
      %3901 = vmatmul.f32.gmra.mxu0 %v3851
      %v3902 = vpop.f32.mrf.mxu0
      %v3903 = vadd.f32 0.0, %v3902
      %3904 = vmatmul.f32.gmra.mxu0 %v3854
      %v3905 = vpop.f32.mrf.mxu0
      %v3906 = vadd.f32 0.0, %v3905
      %3907 = vmatmul.f32.gmra.mxu0 %v3857
      %v3908 = vpop.f32.mrf.mxu0
      %v3909 = vadd.f32 0.0, %v3908
      %3910 = vdwg.mxu0
      %3911 = vmatpush.msra.mxu0 0.0
      %3912 = vmatpush.msra.mxu0 0.0
      %3913 = vmatpush.msra.mxu0 0.0
      %3914 = vmatpush.msra.mxu0 0.0
      %3915 = vmatpush.msra.mxu0 0.0
      %3916 = vmatpush.msra.mxu0 0.0
      %3917 = vmatpush.msra.mxu0 0.0
      %3918 = vmatpush.msra.mxu0 0.0
      %3919 = vmatpush.msra.mxu0 0.0
      %3920 = vmatpush.msra.mxu0 0.0
      %3921 = vmatpush.msra.mxu0 0.0
      %3922 = vmatpush.msra.mxu0 0.0
      %3923 = vmatpush.msra.mxu0 0.0
      %3924 = vmatpush.msra.mxu0 %v3290
      %3925 = vmatpush.msra.mxu0 %v3286
      %3926 = vmatpush.msra.mxu0 %v3282
      %3927 = vmatmul.f32.gmra.mxu0 %v3851
      %v3928 = vpop.f32.mrf.mxu0
      %v3929 = vadd.f32 0.0, %v3928
      %3930 = vmatmul.f32.gmra.mxu0 %v3854
      %v3931 = vpop.f32.mrf.mxu0
      %v3932 = vadd.f32 0.0, %v3931
      %3933 = vmatmul.f32.gmra.mxu0 %v3857
      %v3934 = vpop.f32.mrf.mxu0
      %v3935 = vadd.f32 0.0, %v3934
      %3936 = vdwg.mxu0
      %v3937 = vadd.f32 %v3838, %v3877
      %v3938 = vadd.f32 %v3839, %v3903
      %v3939 = vadd.f32 %v3840, %v3929
      %v3940 = vadd.f32 %v3841, %v3880
      %v3941 = vadd.f32 %v3842, %v3906
      %v3942 = vadd.f32 %v3843, %v3932
      %v3943 = vadd.f32 %v3844, %v3883
      %v3944 = vadd.f32 %v3845, %v3909
      %v3945 = vadd.f32 %v3846, %v3935
      %v3946 = vld [vmem:[%s8 + $0x78] sm:$0xff]
      %v3947 = vld [vmem:[%s8 + $0x80] sm:$0xff]
      %v3948 = vld [vmem:[%s8 + $0x88] sm:$0xff]
      %v3949 = vld [vmem:[#allocation4 + $0x8] sm:$0xff]
      %v3950 = vld [vmem:[#allocation4 + $0x10] sm:$0xff]
      %v3951 = vld [vmem:[#allocation4 + $0x18] sm:$0xff]
      %v3952 = vld [vmem:[#allocation4 + $0x20] sm:$0xff]
      %v3953 = vld [vmem:[#allocation4 + $0x30] sm:$0xff]
      %v3954 = vld [vmem:[#allocation4 + $0x38] sm:$0xff]
      %v3955 = vld [vmem:[#allocation4 + $0x40] sm:$0xff]
      %v3956 = vld [vmem:[#allocation4 + $0x48] sm:$0xff]
      %v3957 = vld [vmem:[#allocation4 + $0x58] sm:$0xff]
      %v3958 = vld [vmem:[#allocation4 + $0x60] sm:$0xff]
      %v3959 = vld [vmem:[#allocation4 + $0x68] sm:$0xff]
      %v3960 = vld [vmem:[#allocation4 + $0x70] sm:$0xff]
      %3973 = vrot.lane.b32.xlu0 %v3949, 127
      %v3974 = vpop.permute.xlu0 %3973
      %3975 = vrot.lane.b32.xlu0 %v3950, 127
      %v3976 = vpop.permute.xlu0 %3975
      %3977 = vrot.lane.b32.xlu0 %v3951, 127
      %v3978 = vpop.permute.xlu0 %3977
      %3979 = vrot.lane.b32.xlu0 %v3952, 127
      %v3980 = vpop.permute.xlu0 %3979
      %3981 = vrot.lane.b32.xlu0 %v3953, 127
      %v3982 = vpop.permute.xlu0 %3981
      %3983 = vrot.lane.b32.xlu0 %v3954, 127
      %v3984 = vpop.permute.xlu0 %3983
      %3985 = vrot.lane.b32.xlu0 %v3955, 127
      %v3986 = vpop.permute.xlu0 %3985
      %3987 = vrot.lane.b32.xlu0 %v3956, 127
      %v3988 = vpop.permute.xlu0 %3987
      %3989 = vrot.lane.b32.xlu0 %v3957, 127
      %v3990 = vpop.permute.xlu0 %3989
      %3991 = vrot.lane.b32.xlu0 %v3958, 127
      %v3992 = vpop.permute.xlu0 %3991
      %3993 = vrot.lane.b32.xlu0 %v3959, 127
      %v3994 = vpop.permute.xlu0 %3993
      %3995 = vrot.lane.b32.xlu0 %v3960, 127
      %v3996 = vpop.permute.xlu0 %3995
      %v3997 = vsel %vm849, %v3974, %v3976
      %v3998 = vsel %vm849, %v3976, %v3978
      %v3999 = vsel %vm849, %v3978, %v3980
      %v4000 = vsel %vm849, %v3982, %v3984
      %v4001 = vsel %vm849, %v3984, %v3986
      %v4002 = vsel %vm849, %v3986, %v3988
      %v4003 = vsel %vm849, %v3990, %v3992
      %v4004 = vsel %vm849, %v3992, %v3994
      %v4005 = vsel %vm849, %v3994, %v3996
      %v4016 = vsel %vm3348, %v3946, 0
      %v4019 = vsel %vm3348, %v3947, 0
      %v4022 = vsel %vm3348, %v3948, 0
      %4024 = vmatpush.msra.mxu0 0.0
      %4025 = vmatpush.msra.mxu0 0.0
      %4026 = vmatpush.msra.mxu0 0.0
      %4027 = vmatpush.msra.mxu0 0.0
      %4028 = vmatpush.msra.mxu0 0.0
      %4029 = vmatpush.msra.mxu0 0.0
      %4030 = vmatpush.msra.mxu0 0.0
      %4031 = vmatpush.msra.mxu0 0.0
      %4032 = vmatpush.msra.mxu0 0.0
      %4033 = vmatpush.msra.mxu0 0.0
      %4034 = vmatpush.msra.mxu0 0.0
      %4035 = vmatpush.msra.mxu0 0.0
      %4036 = vmatpush.msra.mxu0 0.0
      %4037 = vmatpush.msra.mxu0 %v4003
      %4038 = vmatpush.msra.mxu0 %v4000
      %4039 = vmatpush.msra.mxu0 %v3997
      %4040 = vmatmul.f32.gmra.mxu0 %v4016
      %v4041 = vpop.f32.mrf.mxu0
      %v4042 = vadd.f32 0.0, %v4041
      %4043 = vmatmul.f32.gmra.mxu0 %v4019
      %v4044 = vpop.f32.mrf.mxu0
      %v4045 = vadd.f32 0.0, %v4044
      %4046 = vmatmul.f32.gmra.mxu0 %v4022
      %v4047 = vpop.f32.mrf.mxu0
      %v4048 = vadd.f32 0.0, %v4047
      %4049 = vdwg.mxu0
      %4050 = vmatpush.msra.mxu0 0.0
      %4051 = vmatpush.msra.mxu0 0.0
      %4052 = vmatpush.msra.mxu0 0.0
      %4053 = vmatpush.msra.mxu0 0.0
      %4054 = vmatpush.msra.mxu0 0.0
      %4055 = vmatpush.msra.mxu0 0.0
      %4056 = vmatpush.msra.mxu0 0.0
      %4057 = vmatpush.msra.mxu0 0.0
      %4058 = vmatpush.msra.mxu0 0.0
      %4059 = vmatpush.msra.mxu0 0.0
      %4060 = vmatpush.msra.mxu0 0.0
      %4061 = vmatpush.msra.mxu0 0.0
      %4062 = vmatpush.msra.mxu0 0.0
      %4063 = vmatpush.msra.mxu0 %v4004
      %4064 = vmatpush.msra.mxu0 %v4001
      %4065 = vmatpush.msra.mxu0 %v3998
      %4066 = vmatmul.f32.gmra.mxu0 %v4016
      %v4067 = vpop.f32.mrf.mxu0
      %v4068 = vadd.f32 0.0, %v4067
      %4069 = vmatmul.f32.gmra.mxu0 %v4019
      %v4070 = vpop.f32.mrf.mxu0
      %v4071 = vadd.f32 0.0, %v4070
      %4072 = vmatmul.f32.gmra.mxu0 %v4022
      %v4073 = vpop.f32.mrf.mxu0
      %v4074 = vadd.f32 0.0, %v4073
      %4075 = vdwg.mxu0
      %4076 = vmatpush.msra.mxu0 0.0
      %4077 = vmatpush.msra.mxu0 0.0
      %4078 = vmatpush.msra.mxu0 0.0
      %4079 = vmatpush.msra.mxu0 0.0
      %4080 = vmatpush.msra.mxu0 0.0
      %4081 = vmatpush.msra.mxu0 0.0
      %4082 = vmatpush.msra.mxu0 0.0
      %4083 = vmatpush.msra.mxu0 0.0
      %4084 = vmatpush.msra.mxu0 0.0
      %4085 = vmatpush.msra.mxu0 0.0
      %4086 = vmatpush.msra.mxu0 0.0
      %4087 = vmatpush.msra.mxu0 0.0
      %4088 = vmatpush.msra.mxu0 0.0
      %4089 = vmatpush.msra.mxu0 %v4005
      %4090 = vmatpush.msra.mxu0 %v4002
      %4091 = vmatpush.msra.mxu0 %v3999
      %4092 = vmatmul.f32.gmra.mxu0 %v4016
      %v4093 = vpop.f32.mrf.mxu0
      %v4094 = vadd.f32 0.0, %v4093
      %4095 = vmatmul.f32.gmra.mxu0 %v4019
      %v4096 = vpop.f32.mrf.mxu0
      %v4097 = vadd.f32 0.0, %v4096
      %4098 = vmatmul.f32.gmra.mxu0 %v4022
      %v4099 = vpop.f32.mrf.mxu0
      %v4100 = vadd.f32 0.0, %v4099
      %4101 = vdwg.mxu0
      %v4102 = vadd.f32 %v3937, %v4042
      %v4103 = vadd.f32 %v3938, %v4068
      %v4104 = vadd.f32 %v3939, %v4094
      %v4105 = vadd.f32 %v3940, %v4045
      %v4106 = vadd.f32 %v3941, %v4071
      %v4107 = vadd.f32 %v3942, %v4097
      %v4108 = vadd.f32 %v3943, %v4048
      %v4109 = vadd.f32 %v3944, %v4074
      %v4110 = vadd.f32 %v3945, %v4100
      %v4111 = vld [vmem:[%s8 + $0x90] sm:$0xff]
      %v4112 = vld [vmem:[%s8 + $0x98] sm:$0xff]
      %v4113 = vld [vmem:[%s8 + $0xa0] sm:$0xff]
      %4114 = vrot.lane.b32.xlu0 %v3949, 111
      %v4115 = vpop.permute.xlu0 %4114
      %4116 = vrot.lane.b32.xlu0 %v3950, 111
      %v4117 = vpop.permute.xlu0 %4116
      %4118 = vrot.lane.b32.xlu0 %v3951, 111
      %v4119 = vpop.permute.xlu0 %4118
      %4120 = vrot.lane.b32.xlu0 %v3952, 111
      %v4121 = vpop.permute.xlu0 %4120
      %4122 = vrot.lane.b32.xlu0 %v3953, 111
      %v4123 = vpop.permute.xlu0 %4122
      %4124 = vrot.lane.b32.xlu0 %v3954, 111
      %v4125 = vpop.permute.xlu0 %4124
      %4126 = vrot.lane.b32.xlu0 %v3955, 111
      %v4127 = vpop.permute.xlu0 %4126
      %4128 = vrot.lane.b32.xlu0 %v3956, 111
      %v4129 = vpop.permute.xlu0 %4128
      %4130 = vrot.lane.b32.xlu0 %v3957, 111
      %v4131 = vpop.permute.xlu0 %4130
      %4132 = vrot.lane.b32.xlu0 %v3958, 111
      %v4133 = vpop.permute.xlu0 %4132
      %4134 = vrot.lane.b32.xlu0 %v3959, 111
      %v4135 = vpop.permute.xlu0 %4134
      %4136 = vrot.lane.b32.xlu0 %v3960, 111
      %v4137 = vpop.permute.xlu0 %4136
      %v4138 = vsel %vm931, %v4115, %v4117
      %v4139 = vsel %vm931, %v4117, %v4119
      %v4140 = vsel %vm931, %v4119, %v4121
      %v4141 = vsel %vm931, %v4123, %v4125
      %v4142 = vsel %vm931, %v4125, %v4127
      %v4143 = vsel %vm931, %v4127, %v4129
      %v4144 = vsel %vm931, %v4131, %v4133
      %v4145 = vsel %vm931, %v4133, %v4135
      %v4146 = vsel %vm931, %v4135, %v4137
      %v4157 = vsel %vm3348, %v4111, 0
      %v4160 = vsel %vm3348, %v4112, 0
      %v4163 = vsel %vm3348, %v4113, 0
      %4165 = vmatpush.msra.mxu0 0.0
      %4166 = vmatpush.msra.mxu0 0.0
      %4167 = vmatpush.msra.mxu0 0.0
      %4168 = vmatpush.msra.mxu0 0.0
      %4169 = vmatpush.msra.mxu0 0.0
      %4170 = vmatpush.msra.mxu0 0.0
      %4171 = vmatpush.msra.mxu0 0.0
      %4172 = vmatpush.msra.mxu0 0.0
      %4173 = vmatpush.msra.mxu0 0.0
      %4174 = vmatpush.msra.mxu0 0.0
      %4175 = vmatpush.msra.mxu0 0.0
      %4176 = vmatpush.msra.mxu0 0.0
      %4177 = vmatpush.msra.mxu0 0.0
      %4178 = vmatpush.msra.mxu0 %v4144
      %4179 = vmatpush.msra.mxu0 %v4141
      %4180 = vmatpush.msra.mxu0 %v4138
      %4181 = vmatmul.f32.gmra.mxu0 %v4157
      %v4182 = vpop.f32.mrf.mxu0
      %v4183 = vadd.f32 0.0, %v4182
      %4184 = vmatmul.f32.gmra.mxu0 %v4160
      %v4185 = vpop.f32.mrf.mxu0
      %v4186 = vadd.f32 0.0, %v4185
      %4187 = vmatmul.f32.gmra.mxu0 %v4163
      %v4188 = vpop.f32.mrf.mxu0
      %v4189 = vadd.f32 0.0, %v4188
      %4190 = vdwg.mxu0
      %4191 = vmatpush.msra.mxu0 0.0
      %4192 = vmatpush.msra.mxu0 0.0
      %4193 = vmatpush.msra.mxu0 0.0
      %4194 = vmatpush.msra.mxu0 0.0
      %4195 = vmatpush.msra.mxu0 0.0
      %4196 = vmatpush.msra.mxu0 0.0
      %4197 = vmatpush.msra.mxu0 0.0
      %4198 = vmatpush.msra.mxu0 0.0
      %4199 = vmatpush.msra.mxu0 0.0
      %4200 = vmatpush.msra.mxu0 0.0
      %4201 = vmatpush.msra.mxu0 0.0
      %4202 = vmatpush.msra.mxu0 0.0
      %4203 = vmatpush.msra.mxu0 0.0
      %4204 = vmatpush.msra.mxu0 %v4145
      %4205 = vmatpush.msra.mxu0 %v4142
      %4206 = vmatpush.msra.mxu0 %v4139
      %4207 = vmatmul.f32.gmra.mxu0 %v4157
      %v4208 = vpop.f32.mrf.mxu0
      %v4209 = vadd.f32 0.0, %v4208
      %4210 = vmatmul.f32.gmra.mxu0 %v4160
      %v4211 = vpop.f32.mrf.mxu0
      %v4212 = vadd.f32 0.0, %v4211
      %4213 = vmatmul.f32.gmra.mxu0 %v4163
      %v4214 = vpop.f32.mrf.mxu0
      %v4215 = vadd.f32 0.0, %v4214
      %4216 = vdwg.mxu0
      %4217 = vmatpush.msra.mxu0 0.0
      %4218 = vmatpush.msra.mxu0 0.0
      %4219 = vmatpush.msra.mxu0 0.0
      %4220 = vmatpush.msra.mxu0 0.0
      %4221 = vmatpush.msra.mxu0 0.0
      %4222 = vmatpush.msra.mxu0 0.0
      %4223 = vmatpush.msra.mxu0 0.0
      %4224 = vmatpush.msra.mxu0 0.0
      %4225 = vmatpush.msra.mxu0 0.0
      %4226 = vmatpush.msra.mxu0 0.0
      %4227 = vmatpush.msra.mxu0 0.0
      %4228 = vmatpush.msra.mxu0 0.0
      %4229 = vmatpush.msra.mxu0 0.0
      %4230 = vmatpush.msra.mxu0 %v4146
      %4231 = vmatpush.msra.mxu0 %v4143
      %4232 = vmatpush.msra.mxu0 %v4140
      %4233 = vmatmul.f32.gmra.mxu0 %v4157
      %v4234 = vpop.f32.mrf.mxu0
      %v4235 = vadd.f32 0.0, %v4234
      %4236 = vmatmul.f32.gmra.mxu0 %v4160
      %v4237 = vpop.f32.mrf.mxu0
      %v4238 = vadd.f32 0.0, %v4237
      %4239 = vmatmul.f32.gmra.mxu0 %v4163
      %v4240 = vpop.f32.mrf.mxu0
      %v4241 = vadd.f32 0.0, %v4240
      %4242 = vdwg.mxu0
      %v4243 = vadd.f32 %v4102, %v4183
      %v4244 = vadd.f32 %v4103, %v4209
      %v4245 = vadd.f32 %v4104, %v4235
      %v4246 = vadd.f32 %v4105, %v4186
      %v4247 = vadd.f32 %v4106, %v4212
      %v4248 = vadd.f32 %v4107, %v4238
      %v4249 = vadd.f32 %v4108, %v4189
      %v4250 = vadd.f32 %v4109, %v4215
      %v4251 = vadd.f32 %v4110, %v4241
      %v4252 = vld [vmem:[%s8 + $0xa8] sm:$0xff]
      %v4253 = vld [vmem:[%s8 + $0xb0] sm:$0xff]
      %v4254 = vld [vmem:[%s8 + $0xb8] sm:$0xff]
      %4255 = vrot.lane.b32.xlu0 %v3949, 110
      %v4256 = vpop.permute.xlu0 %4255
      %4257 = vrot.lane.b32.xlu0 %v3950, 110
      %v4258 = vpop.permute.xlu0 %4257
      %4259 = vrot.lane.b32.xlu0 %v3951, 110
      %v4260 = vpop.permute.xlu0 %4259
      %4261 = vrot.lane.b32.xlu0 %v3952, 110
      %v4262 = vpop.permute.xlu0 %4261
      %4263 = vrot.lane.b32.xlu0 %v3953, 110
      %v4264 = vpop.permute.xlu0 %4263
      %4265 = vrot.lane.b32.xlu0 %v3954, 110
      %v4266 = vpop.permute.xlu0 %4265
      %4267 = vrot.lane.b32.xlu0 %v3955, 110
      %v4268 = vpop.permute.xlu0 %4267
      %4269 = vrot.lane.b32.xlu0 %v3956, 110
      %v4270 = vpop.permute.xlu0 %4269
      %4271 = vrot.lane.b32.xlu0 %v3957, 110
      %v4272 = vpop.permute.xlu0 %4271
      %4273 = vrot.lane.b32.xlu0 %v3958, 110
      %v4274 = vpop.permute.xlu0 %4273
      %4275 = vrot.lane.b32.xlu0 %v3959, 110
      %v4276 = vpop.permute.xlu0 %4275
      %4277 = vrot.lane.b32.xlu0 %v3960, 110
      %v4278 = vpop.permute.xlu0 %4277
      %v4279 = vsel %vm1013, %v4256, %v4258
      %v4280 = vsel %vm1013, %v4258, %v4260
      %v4281 = vsel %vm1013, %v4260, %v4262
      %v4282 = vsel %vm1013, %v4264, %v4266
      %v4283 = vsel %vm1013, %v4266, %v4268
      %v4284 = vsel %vm1013, %v4268, %v4270
      %v4285 = vsel %vm1013, %v4272, %v4274
      %v4286 = vsel %vm1013, %v4274, %v4276
      %v4287 = vsel %vm1013, %v4276, %v4278
      %v4298 = vsel %vm3348, %v4252, 0
      %v4301 = vsel %vm3348, %v4253, 0
      %v4304 = vsel %vm3348, %v4254, 0
      %4306 = vmatpush.msra.mxu0 0.0
      %4307 = vmatpush.msra.mxu0 0.0
      %4308 = vmatpush.msra.mxu0 0.0
      %4309 = vmatpush.msra.mxu0 0.0
      %4310 = vmatpush.msra.mxu0 0.0
      %4311 = vmatpush.msra.mxu0 0.0
      %4312 = vmatpush.msra.mxu0 0.0
      %4313 = vmatpush.msra.mxu0 0.0
      %4314 = vmatpush.msra.mxu0 0.0
      %4315 = vmatpush.msra.mxu0 0.0
      %4316 = vmatpush.msra.mxu0 0.0
      %4317 = vmatpush.msra.mxu0 0.0
      %4318 = vmatpush.msra.mxu0 0.0
      %4319 = vmatpush.msra.mxu0 %v4285
      %4320 = vmatpush.msra.mxu0 %v4282
      %4321 = vmatpush.msra.mxu0 %v4279
      %4322 = vmatmul.f32.gmra.mxu0 %v4298
      %v4323 = vpop.f32.mrf.mxu0
      %v4324 = vadd.f32 0.0, %v4323
      %4325 = vmatmul.f32.gmra.mxu0 %v4301
      %v4326 = vpop.f32.mrf.mxu0
      %v4327 = vadd.f32 0.0, %v4326
      %4328 = vmatmul.f32.gmra.mxu0 %v4304
      %v4329 = vpop.f32.mrf.mxu0
      %v4330 = vadd.f32 0.0, %v4329
      %4331 = vdwg.mxu0
      %4332 = vmatpush.msra.mxu0 0.0
      %4333 = vmatpush.msra.mxu0 0.0
      %4334 = vmatpush.msra.mxu0 0.0
      %4335 = vmatpush.msra.mxu0 0.0
      %4336 = vmatpush.msra.mxu0 0.0
      %4337 = vmatpush.msra.mxu0 0.0
      %4338 = vmatpush.msra.mxu0 0.0
      %4339 = vmatpush.msra.mxu0 0.0
      %4340 = vmatpush.msra.mxu0 0.0
      %4341 = vmatpush.msra.mxu0 0.0
      %4342 = vmatpush.msra.mxu0 0.0
      %4343 = vmatpush.msra.mxu0 0.0
      %4344 = vmatpush.msra.mxu0 0.0
      %4345 = vmatpush.msra.mxu0 %v4286
      %4346 = vmatpush.msra.mxu0 %v4283
      %4347 = vmatpush.msra.mxu0 %v4280
      %4348 = vmatmul.f32.gmra.mxu0 %v4298
      %v4349 = vpop.f32.mrf.mxu0
      %v4350 = vadd.f32 0.0, %v4349
      %4351 = vmatmul.f32.gmra.mxu0 %v4301
      %v4352 = vpop.f32.mrf.mxu0
      %v4353 = vadd.f32 0.0, %v4352
      %4354 = vmatmul.f32.gmra.mxu0 %v4304
      %v4355 = vpop.f32.mrf.mxu0
      %v4356 = vadd.f32 0.0, %v4355
      %4357 = vdwg.mxu0
      %4358 = vmatpush.msra.mxu0 0.0
      %4359 = vmatpush.msra.mxu0 0.0
      %4360 = vmatpush.msra.mxu0 0.0
      %4361 = vmatpush.msra.mxu0 0.0
      %4362 = vmatpush.msra.mxu0 0.0
      %4363 = vmatpush.msra.mxu0 0.0
      %4364 = vmatpush.msra.mxu0 0.0
      %4365 = vmatpush.msra.mxu0 0.0
      %4366 = vmatpush.msra.mxu0 0.0
      %4367 = vmatpush.msra.mxu0 0.0
      %4368 = vmatpush.msra.mxu0 0.0
      %4369 = vmatpush.msra.mxu0 0.0
      %4370 = vmatpush.msra.mxu0 0.0
      %4371 = vmatpush.msra.mxu0 %v4287
      %4372 = vmatpush.msra.mxu0 %v4284
      %4373 = vmatpush.msra.mxu0 %v4281
      %4374 = vmatmul.f32.gmra.mxu0 %v4298
      %v4375 = vpop.f32.mrf.mxu0
      %v4376 = vadd.f32 0.0, %v4375
      %4377 = vmatmul.f32.gmra.mxu0 %v4301
      %v4378 = vpop.f32.mrf.mxu0
      %v4379 = vadd.f32 0.0, %v4378
      %4380 = vmatmul.f32.gmra.mxu0 %v4304
      %v4381 = vpop.f32.mrf.mxu0
      %v4382 = vadd.f32 0.0, %v4381
      %4383 = vdwg.mxu0
      %v4384 = vadd.f32 %v4243, %v4324
      %v4385 = vadd.f32 %v4244, %v4350
      %v4386 = vadd.f32 %v4245, %v4376
      %v4387 = vadd.f32 %v4246, %v4327
      %v4388 = vadd.f32 %v4247, %v4353
      %v4389 = vadd.f32 %v4248, %v4379
      %v4390 = vadd.f32 %v4249, %v4330
      %v4391 = vadd.f32 %v4250, %v4356
      %v4392 = vadd.f32 %v4251, %v4382
      %v4393 = vld [vmem:[%s8 + $0xc0] sm:$0xff]
      %v4394 = vld [vmem:[%s8 + $0xc8] sm:$0xff]
      %v4395 = vld [vmem:[%s8 + $0xd0] sm:$0xff]
      %4396 = vrot.lane.b32.xlu0 %v3949, 109
      %v4397 = vpop.permute.xlu0 %4396
      %4398 = vrot.lane.b32.xlu0 %v3950, 109
      %v4399 = vpop.permute.xlu0 %4398
      %4400 = vrot.lane.b32.xlu0 %v3951, 109
      %v4401 = vpop.permute.xlu0 %4400
      %4402 = vrot.lane.b32.xlu0 %v3952, 109
      %v4403 = vpop.permute.xlu0 %4402
      %4404 = vrot.lane.b32.xlu0 %v3953, 109
      %v4405 = vpop.permute.xlu0 %4404
      %4406 = vrot.lane.b32.xlu0 %v3954, 109
      %v4407 = vpop.permute.xlu0 %4406
      %4408 = vrot.lane.b32.xlu0 %v3955, 109
      %v4409 = vpop.permute.xlu0 %4408
      %4410 = vrot.lane.b32.xlu0 %v3956, 109
      %v4411 = vpop.permute.xlu0 %4410
      %4412 = vrot.lane.b32.xlu0 %v3957, 109
      %v4413 = vpop.permute.xlu0 %4412
      %4414 = vrot.lane.b32.xlu0 %v3958, 109
      %v4415 = vpop.permute.xlu0 %4414
      %4416 = vrot.lane.b32.xlu0 %v3959, 109
      %v4417 = vpop.permute.xlu0 %4416
      %4418 = vrot.lane.b32.xlu0 %v3960, 109
      %v4419 = vpop.permute.xlu0 %4418
      %v4420 = vsel %vm1095, %v4397, %v4399
      %v4421 = vsel %vm1095, %v4399, %v4401
      %v4422 = vsel %vm1095, %v4401, %v4403
      %v4423 = vsel %vm1095, %v4405, %v4407
      %v4424 = vsel %vm1095, %v4407, %v4409
      %v4425 = vsel %vm1095, %v4409, %v4411
      %v4426 = vsel %vm1095, %v4413, %v4415
      %v4427 = vsel %vm1095, %v4415, %v4417
      %v4428 = vsel %vm1095, %v4417, %v4419
      %v4439 = vsel %vm3348, %v4393, 0
      %v4442 = vsel %vm3348, %v4394, 0
      %v4445 = vsel %vm3348, %v4395, 0
      %4447 = vmatpush.msra.mxu0 0.0
      %4448 = vmatpush.msra.mxu0 0.0
      %4449 = vmatpush.msra.mxu0 0.0
      %4450 = vmatpush.msra.mxu0 0.0
      %4451 = vmatpush.msra.mxu0 0.0
      %4452 = vmatpush.msra.mxu0 0.0
      %4453 = vmatpush.msra.mxu0 0.0
      %4454 = vmatpush.msra.mxu0 0.0
      %4455 = vmatpush.msra.mxu0 0.0
      %4456 = vmatpush.msra.mxu0 0.0
      %4457 = vmatpush.msra.mxu0 0.0
      %4458 = vmatpush.msra.mxu0 0.0
      %4459 = vmatpush.msra.mxu0 0.0
      %4460 = vmatpush.msra.mxu0 %v4426
      %4461 = vmatpush.msra.mxu0 %v4423
      %4462 = vmatpush.msra.mxu0 %v4420
      %4463 = vmatmul.f32.gmra.mxu0 %v4439
      %v4464 = vpop.f32.mrf.mxu0
      %v4465 = vadd.f32 0.0, %v4464
      %4466 = vmatmul.f32.gmra.mxu0 %v4442
      %v4467 = vpop.f32.mrf.mxu0
      %v4468 = vadd.f32 0.0, %v4467
      %4469 = vmatmul.f32.gmra.mxu0 %v4445
      %v4470 = vpop.f32.mrf.mxu0
      %v4471 = vadd.f32 0.0, %v4470
      %4472 = vdwg.mxu0
      %4473 = vmatpush.msra.mxu0 0.0
      %4474 = vmatpush.msra.mxu0 0.0
      %4475 = vmatpush.msra.mxu0 0.0
      %4476 = vmatpush.msra.mxu0 0.0
      %4477 = vmatpush.msra.mxu0 0.0
      %4478 = vmatpush.msra.mxu0 0.0
      %4479 = vmatpush.msra.mxu0 0.0
      %4480 = vmatpush.msra.mxu0 0.0
      %4481 = vmatpush.msra.mxu0 0.0
      %4482 = vmatpush.msra.mxu0 0.0
      %4483 = vmatpush.msra.mxu0 0.0
      %4484 = vmatpush.msra.mxu0 0.0
      %4485 = vmatpush.msra.mxu0 0.0
      %4486 = vmatpush.msra.mxu0 %v4427
      %4487 = vmatpush.msra.mxu0 %v4424
      %4488 = vmatpush.msra.mxu0 %v4421
      %4489 = vmatmul.f32.gmra.mxu0 %v4439
      %v4490 = vpop.f32.mrf.mxu0
      %v4491 = vadd.f32 0.0, %v4490
      %4492 = vmatmul.f32.gmra.mxu0 %v4442
      %v4493 = vpop.f32.mrf.mxu0
      %v4494 = vadd.f32 0.0, %v4493
      %4495 = vmatmul.f32.gmra.mxu0 %v4445
      %v4496 = vpop.f32.mrf.mxu0
      %v4497 = vadd.f32 0.0, %v4496
      %4498 = vdwg.mxu0
      %4499 = vmatpush.msra.mxu0 0.0
      %4500 = vmatpush.msra.mxu0 0.0
      %4501 = vmatpush.msra.mxu0 0.0
      %4502 = vmatpush.msra.mxu0 0.0
      %4503 = vmatpush.msra.mxu0 0.0
      %4504 = vmatpush.msra.mxu0 0.0
      %4505 = vmatpush.msra.mxu0 0.0
      %4506 = vmatpush.msra.mxu0 0.0
      %4507 = vmatpush.msra.mxu0 0.0
      %4508 = vmatpush.msra.mxu0 0.0
      %4509 = vmatpush.msra.mxu0 0.0
      %4510 = vmatpush.msra.mxu0 0.0
      %4511 = vmatpush.msra.mxu0 0.0
      %4512 = vmatpush.msra.mxu0 %v4428
      %4513 = vmatpush.msra.mxu0 %v4425
      %4514 = vmatpush.msra.mxu0 %v4422
      %4515 = vmatmul.f32.gmra.mxu0 %v4439
      %v4516 = vpop.f32.mrf.mxu0
      %v4517 = vadd.f32 0.0, %v4516
      %4518 = vmatmul.f32.gmra.mxu0 %v4442
      %v4519 = vpop.f32.mrf.mxu0
      %v4520 = vadd.f32 0.0, %v4519
      %4521 = vmatmul.f32.gmra.mxu0 %v4445
      %v4522 = vpop.f32.mrf.mxu0
      %v4523 = vadd.f32 0.0, %v4522
      %4524 = vdwg.mxu0
      %v4525 = vadd.f32 %v4384, %v4465
      %v4526 = vadd.f32 %v4385, %v4491
      %v4527 = vadd.f32 %v4386, %v4517
      %v4528 = vadd.f32 %v4387, %v4468
      %v4529 = vadd.f32 %v4388, %v4494
      %v4530 = vadd.f32 %v4389, %v4520
      %v4531 = vadd.f32 %v4390, %v4471
      %v4532 = vadd.f32 %v4391, %v4497
      %v4533 = vadd.f32 %v4392, %v4523
      %v4534 = vld [vmem:[%s9] sm:$0xff]
      %v4535 = vld [vmem:[%s9 + $0x8] sm:$0xff]
      %v4536 = vld [vmem:[%s9 + $0x10] sm:$0xff]
      %4538 = vset.pattern.permute.xlu0 0
      %4539 = vperm.xlu0 %4538, %v4534
      %v4540 = vpop.permute.xlu0 %4539
      %4543 = vset.pattern.permute.xlu0 0
      %4544 = vperm.xlu0 %4543, %v4535
      %v4545 = vpop.permute.xlu0 %4544
      %4548 = vset.pattern.permute.xlu0 0
      %4549 = vperm.xlu0 %4548, %v4536
      %v4550 = vpop.permute.xlu0 %4549
      %v4552 = vadd.f32 %v4525, %v4540
      %v4553 = vadd.f32 %v4526, %v4540
      %v4554 = vadd.f32 %v4527, %v4540
      %v4555 = vadd.f32 %v4528, %v4545
      %v4556 = vadd.f32 %v4529, %v4545
      %v4557 = vadd.f32 %v4530, %v4545
      %v4558 = vadd.f32 %v4531, %v4550
      %v4559 = vadd.f32 %v4532, %v4550
      %v4560 = vadd.f32 %v4533, %v4550
      %v4561 = vmax.f32 %v4552, 0.0
      %v4562 = vmax.f32 %v4553, 0.0
      %v4563 = vmax.f32 %v4554, 0.0
      %v4564 = vmax.f32 %v4555, 0.0
      %v4565 = vmax.f32 %v4556, 0.0
      %v4566 = vmax.f32 %v4557, 0.0
      %v4567 = vmax.f32 %v4558, 0.0
      %v4568 = vmax.f32 %v4559, 0.0
      %v4569 = vmax.f32 %v4560, 0.0
      %v4570 = vsel %vm1184, %v4561, 0.0
      %v4571 = vsel %vm1185, %v4562, 0.0
      %v4572 = vsel %vm1186, %v4563, 0.0
      %v4573 = vsel %vm1184, %v4564, 0.0
      %v4574 = vsel %vm1185, %v4565, 0.0
      %v4575 = vsel %vm1186, %v4566, 0.0
      %v4576 = vsel %vm1184, %v4567, 0.0
      %v4577 = vsel %vm1185, %v4568, 0.0
      %v4578 = vsel %vm1186, %v4569, 0.0
      %4579 = vst [vmem:[#allocation5 + $0x8] sm:$0xff] %v4570
      %4580 = vst [vmem:[#allocation5 + $0x10] sm:$0xff] %v4571
      %4581 = vst [vmem:[#allocation5 + $0x18] sm:$0xff] %v4572
      %4582 = vst [vmem:[#allocation5 + $0x30] sm:$0xff] %v4573
      %4583 = vst [vmem:[#allocation5 + $0x38] sm:$0xff] %v4574
      %4584 = vst [vmem:[#allocation5 + $0x40] sm:$0xff] %v4575
      %4585 = vst [vmem:[#allocation5 + $0x58] sm:$0xff] %v4576
      %4586 = vst [vmem:[#allocation5 + $0x60] sm:$0xff] %v4577
      %4587 = vst [vmem:[#allocation5 + $0x68] sm:$0xff] %v4578
      %v4588 = vld [vmem:[%s10] sm:$0xff]
      %v4589 = vld [vmem:[#allocation5] sm:$0xff]
      %v4590 = vld [vmem:[#allocation5 + $0x8] sm:$0xff]
      %v4591 = vld [vmem:[#allocation5 + $0x10] sm:$0xff]
      %v4592 = vld [vmem:[#allocation5 + $0x18] sm:$0xff]
      %v4593 = vld [vmem:[#allocation5 + $0x28] sm:$0xff]
      %v4594 = vld [vmem:[#allocation5 + $0x30] sm:$0xff]
      %v4595 = vld [vmem:[#allocation5 + $0x38] sm:$0xff]
      %v4596 = vld [vmem:[#allocation5 + $0x40] sm:$0xff]
      %v4597 = vld [vmem:[#allocation5 + $0x50] sm:$0xff]
      %v4598 = vld [vmem:[#allocation5 + $0x58] sm:$0xff]
      %v4599 = vld [vmem:[#allocation5 + $0x60] sm:$0xff]
      %v4600 = vld [vmem:[#allocation5 + $0x68] sm:$0xff]
      %v4601 = vld [vmem:[%s10 + $0x8] sm:$0xff]
      %4614 = vrot.lane.b32.xlu0 %v4589, 18
      %v4615 = vpop.permute.xlu0 %4614
      %4616 = vrot.lane.b32.xlu0 %v4590, 18
      %v4617 = vpop.permute.xlu0 %4616
      %4618 = vrot.lane.b32.xlu0 %v4591, 18
      %v4619 = vpop.permute.xlu0 %4618
      %4620 = vrot.lane.b32.xlu0 %v4592, 18
      %v4621 = vpop.permute.xlu0 %4620
      %4622 = vrot.lane.b32.xlu0 %v4593, 18
      %v4623 = vpop.permute.xlu0 %4622
      %4624 = vrot.lane.b32.xlu0 %v4594, 18
      %v4625 = vpop.permute.xlu0 %4624
      %4626 = vrot.lane.b32.xlu0 %v4595, 18
      %v4627 = vpop.permute.xlu0 %4626
      %4628 = vrot.lane.b32.xlu0 %v4596, 18
      %v4629 = vpop.permute.xlu0 %4628
      %4630 = vrot.lane.b32.xlu0 %v4597, 18
      %v4631 = vpop.permute.xlu0 %4630
      %4632 = vrot.lane.b32.xlu0 %v4598, 18
      %v4633 = vpop.permute.xlu0 %4632
      %4634 = vrot.lane.b32.xlu0 %v4599, 18
      %v4635 = vpop.permute.xlu0 %4634
      %4636 = vrot.lane.b32.xlu0 %v4600, 18
      %v4637 = vpop.permute.xlu0 %4636
      %v4638 = vsel %vm452, %v4615, %v4617
      %v4639 = vsel %vm452, %v4617, %v4619
      %v4640 = vsel %vm452, %v4619, %v4621
      %v4641 = vsel %vm452, %v4623, %v4625
      %v4642 = vsel %vm452, %v4625, %v4627
      %v4643 = vsel %vm452, %v4627, %v4629
      %v4644 = vsel %vm452, %v4631, %v4633
      %v4645 = vsel %vm452, %v4633, %v4635
      %v4646 = vsel %vm452, %v4635, %v4637
      %v4657 = vsel %vm3348, %v4601, 0
      %4659 = vmatpush.msra.mxu0 0.0
      %4660 = vmatpush.msra.mxu0 0.0
      %4661 = vmatpush.msra.mxu0 0.0
      %4662 = vmatpush.msra.mxu0 0.0
      %4663 = vmatpush.msra.mxu0 0.0
      %4664 = vmatpush.msra.mxu0 0.0
      %4665 = vmatpush.msra.mxu0 0.0
      %4666 = vmatpush.msra.mxu0 0.0
      %4667 = vmatpush.msra.mxu0 0.0
      %4668 = vmatpush.msra.mxu0 0.0
      %4669 = vmatpush.msra.mxu0 0.0
      %4670 = vmatpush.msra.mxu0 0.0
      %4671 = vmatpush.msra.mxu0 0.0
      %4672 = vmatpush.msra.mxu0 %v4644
      %4673 = vmatpush.msra.mxu0 %v4641
      %4674 = vmatpush.msra.mxu0 %v4638
      %4675 = vmatmul.f32.gmra.mxu0 %v4657
      %v4676 = vpop.f32.mrf.mxu0
      %v4677 = vadd.f32 0.0, %v4676
      %4678 = vdwg.mxu0
      %4679 = vmatpush.msra.mxu0 0.0
      %4680 = vmatpush.msra.mxu0 0.0
      %4681 = vmatpush.msra.mxu0 0.0
      %4682 = vmatpush.msra.mxu0 0.0
      %4683 = vmatpush.msra.mxu0 0.0
      %4684 = vmatpush.msra.mxu0 0.0
      %4685 = vmatpush.msra.mxu0 0.0
      %4686 = vmatpush.msra.mxu0 0.0
      %4687 = vmatpush.msra.mxu0 0.0
      %4688 = vmatpush.msra.mxu0 0.0
      %4689 = vmatpush.msra.mxu0 0.0
      %4690 = vmatpush.msra.mxu0 0.0
      %4691 = vmatpush.msra.mxu0 0.0
      %4692 = vmatpush.msra.mxu0 %v4645
      %4693 = vmatpush.msra.mxu0 %v4642
      %4694 = vmatpush.msra.mxu0 %v4639
      %4695 = vmatmul.f32.gmra.mxu0 %v4657
      %v4696 = vpop.f32.mrf.mxu0
      %v4697 = vadd.f32 0.0, %v4696
      %4698 = vdwg.mxu0
      %4699 = vmatpush.msra.mxu0 0.0
      %4700 = vmatpush.msra.mxu0 0.0
      %4701 = vmatpush.msra.mxu0 0.0
      %4702 = vmatpush.msra.mxu0 0.0
      %4703 = vmatpush.msra.mxu0 0.0
      %4704 = vmatpush.msra.mxu0 0.0
      %4705 = vmatpush.msra.mxu0 0.0
      %4706 = vmatpush.msra.mxu0 0.0
      %4707 = vmatpush.msra.mxu0 0.0
      %4708 = vmatpush.msra.mxu0 0.0
      %4709 = vmatpush.msra.mxu0 0.0
      %4710 = vmatpush.msra.mxu0 0.0
      %4711 = vmatpush.msra.mxu0 0.0
      %4712 = vmatpush.msra.mxu0 %v4646
      %4713 = vmatpush.msra.mxu0 %v4643
      %4714 = vmatpush.msra.mxu0 %v4640
      %4715 = vmatmul.f32.gmra.mxu0 %v4657
      %v4716 = vpop.f32.mrf.mxu0
      %v4717 = vadd.f32 0.0, %v4716
      %4718 = vdwg.mxu0
      %4719 = vrot.lane.b32.xlu0 %v4589, 19
      %v4720 = vpop.permute.xlu0 %4719
      %4721 = vrot.lane.b32.xlu0 %v4590, 19
      %v4722 = vpop.permute.xlu0 %4721
      %4723 = vrot.lane.b32.xlu0 %v4591, 19
      %v4724 = vpop.permute.xlu0 %4723
      %4725 = vrot.lane.b32.xlu0 %v4592, 19
      %v4726 = vpop.permute.xlu0 %4725
      %4727 = vrot.lane.b32.xlu0 %v4593, 19
      %v4728 = vpop.permute.xlu0 %4727
      %4729 = vrot.lane.b32.xlu0 %v4594, 19
      %v4730 = vpop.permute.xlu0 %4729
      %4731 = vrot.lane.b32.xlu0 %v4595, 19
      %v4732 = vpop.permute.xlu0 %4731
      %4733 = vrot.lane.b32.xlu0 %v4596, 19
      %v4734 = vpop.permute.xlu0 %4733
      %4735 = vrot.lane.b32.xlu0 %v4597, 19
      %v4736 = vpop.permute.xlu0 %4735
      %4737 = vrot.lane.b32.xlu0 %v4598, 19
      %v4738 = vpop.permute.xlu0 %4737
      %4739 = vrot.lane.b32.xlu0 %v4599, 19
      %v4740 = vpop.permute.xlu0 %4739
      %4741 = vrot.lane.b32.xlu0 %v4600, 19
      %v4742 = vpop.permute.xlu0 %4741
      %v4743 = vsel %vm531, %v4720, %v4722
      %v4744 = vsel %vm531, %v4722, %v4724
      %v4745 = vsel %vm531, %v4724, %v4726
      %v4746 = vsel %vm531, %v4728, %v4730
      %v4747 = vsel %vm531, %v4730, %v4732
      %v4748 = vsel %vm531, %v4732, %v4734
      %v4749 = vsel %vm531, %v4736, %v4738
      %v4750 = vsel %vm531, %v4738, %v4740
      %v4751 = vsel %vm531, %v4740, %v4742
      %v4762 = vsel %vm3348, %v4588, 0
      %4764 = vmatpush.msra.mxu0 0.0
      %4765 = vmatpush.msra.mxu0 0.0
      %4766 = vmatpush.msra.mxu0 0.0
      %4767 = vmatpush.msra.mxu0 0.0
      %4768 = vmatpush.msra.mxu0 0.0
      %4769 = vmatpush.msra.mxu0 0.0
      %4770 = vmatpush.msra.mxu0 0.0
      %4771 = vmatpush.msra.mxu0 0.0
      %4772 = vmatpush.msra.mxu0 0.0
      %4773 = vmatpush.msra.mxu0 0.0
      %4774 = vmatpush.msra.mxu0 0.0
      %4775 = vmatpush.msra.mxu0 0.0
      %4776 = vmatpush.msra.mxu0 0.0
      %4777 = vmatpush.msra.mxu0 %v4749
      %4778 = vmatpush.msra.mxu0 %v4746
      %4779 = vmatpush.msra.mxu0 %v4743
      %4780 = vmatmul.f32.gmra.mxu0 %v4762
      %v4781 = vpop.f32.mrf.mxu0
      %v4782 = vadd.f32 %v4677, %v4781
      %4783 = vdwg.mxu0
      %4784 = vmatpush.msra.mxu0 0.0
      %4785 = vmatpush.msra.mxu0 0.0
      %4786 = vmatpush.msra.mxu0 0.0
      %4787 = vmatpush.msra.mxu0 0.0
      %4788 = vmatpush.msra.mxu0 0.0
      %4789 = vmatpush.msra.mxu0 0.0
      %4790 = vmatpush.msra.mxu0 0.0
      %4791 = vmatpush.msra.mxu0 0.0
      %4792 = vmatpush.msra.mxu0 0.0
      %4793 = vmatpush.msra.mxu0 0.0
      %4794 = vmatpush.msra.mxu0 0.0
      %4795 = vmatpush.msra.mxu0 0.0
      %4796 = vmatpush.msra.mxu0 0.0
      %4797 = vmatpush.msra.mxu0 %v4750
      %4798 = vmatpush.msra.mxu0 %v4747
      %4799 = vmatpush.msra.mxu0 %v4744
      %4800 = vmatmul.f32.gmra.mxu0 %v4762
      %v4801 = vpop.f32.mrf.mxu0
      %v4802 = vadd.f32 %v4697, %v4801
      %4803 = vdwg.mxu0
      %4804 = vmatpush.msra.mxu0 0.0
      %4805 = vmatpush.msra.mxu0 0.0
      %4806 = vmatpush.msra.mxu0 0.0
      %4807 = vmatpush.msra.mxu0 0.0
      %4808 = vmatpush.msra.mxu0 0.0
      %4809 = vmatpush.msra.mxu0 0.0
      %4810 = vmatpush.msra.mxu0 0.0
      %4811 = vmatpush.msra.mxu0 0.0
      %4812 = vmatpush.msra.mxu0 0.0
      %4813 = vmatpush.msra.mxu0 0.0
      %4814 = vmatpush.msra.mxu0 0.0
      %4815 = vmatpush.msra.mxu0 0.0
      %4816 = vmatpush.msra.mxu0 0.0
      %4817 = vmatpush.msra.mxu0 %v4751
      %4818 = vmatpush.msra.mxu0 %v4748
      %4819 = vmatpush.msra.mxu0 %v4745
      %4820 = vmatmul.f32.gmra.mxu0 %v4762
      %v4821 = vpop.f32.mrf.mxu0
      %v4822 = vadd.f32 %v4717, %v4821
      %4823 = vdwg.mxu0
      %v4824 = vld [vmem:[%s10 + $0x10] sm:$0xff]
      %4825 = vrot.lane.b32.xlu0 %v4589, 17
      %v4826 = vpop.permute.xlu0 %4825
      %4827 = vrot.lane.b32.xlu0 %v4590, 17
      %v4828 = vpop.permute.xlu0 %4827
      %4829 = vrot.lane.b32.xlu0 %v4591, 17
      %v4830 = vpop.permute.xlu0 %4829
      %4831 = vrot.lane.b32.xlu0 %v4592, 17
      %v4832 = vpop.permute.xlu0 %4831
      %4833 = vrot.lane.b32.xlu0 %v4593, 17
      %v4834 = vpop.permute.xlu0 %4833
      %4835 = vrot.lane.b32.xlu0 %v4594, 17
      %v4836 = vpop.permute.xlu0 %4835
      %4837 = vrot.lane.b32.xlu0 %v4595, 17
      %v4838 = vpop.permute.xlu0 %4837
      %4839 = vrot.lane.b32.xlu0 %v4596, 17
      %v4840 = vpop.permute.xlu0 %4839
      %4841 = vrot.lane.b32.xlu0 %v4597, 17
      %v4842 = vpop.permute.xlu0 %4841
      %4843 = vrot.lane.b32.xlu0 %v4598, 17
      %v4844 = vpop.permute.xlu0 %4843
      %4845 = vrot.lane.b32.xlu0 %v4599, 17
      %v4846 = vpop.permute.xlu0 %4845
      %4847 = vrot.lane.b32.xlu0 %v4600, 17
      %v4848 = vpop.permute.xlu0 %4847
      %v4849 = vsel %vm610, %v4826, %v4828
      %v4850 = vsel %vm610, %v4828, %v4830
      %v4851 = vsel %vm610, %v4830, %v4832
      %v4852 = vsel %vm610, %v4834, %v4836
      %v4853 = vsel %vm610, %v4836, %v4838
      %v4854 = vsel %vm610, %v4838, %v4840
      %v4855 = vsel %vm610, %v4842, %v4844
      %v4856 = vsel %vm610, %v4844, %v4846
      %v4857 = vsel %vm610, %v4846, %v4848
      %v4868 = vsel %vm3348, %v4824, 0
      %4870 = vmatpush.msra.mxu0 0.0
      %4871 = vmatpush.msra.mxu0 0.0
      %4872 = vmatpush.msra.mxu0 0.0
      %4873 = vmatpush.msra.mxu0 0.0
      %4874 = vmatpush.msra.mxu0 0.0
      %4875 = vmatpush.msra.mxu0 0.0
      %4876 = vmatpush.msra.mxu0 0.0
      %4877 = vmatpush.msra.mxu0 0.0
      %4878 = vmatpush.msra.mxu0 0.0
      %4879 = vmatpush.msra.mxu0 0.0
      %4880 = vmatpush.msra.mxu0 0.0
      %4881 = vmatpush.msra.mxu0 0.0
      %4882 = vmatpush.msra.mxu0 0.0
      %4883 = vmatpush.msra.mxu0 %v4855
      %4884 = vmatpush.msra.mxu0 %v4852
      %4885 = vmatpush.msra.mxu0 %v4849
      %4886 = vmatmul.f32.gmra.mxu0 %v4868
      %v4887 = vpop.f32.mrf.mxu0
      %v4888 = vadd.f32 0.0, %v4887
      %4889 = vdwg.mxu0
      %4890 = vmatpush.msra.mxu0 0.0
      %4891 = vmatpush.msra.mxu0 0.0
      %4892 = vmatpush.msra.mxu0 0.0
      %4893 = vmatpush.msra.mxu0 0.0
      %4894 = vmatpush.msra.mxu0 0.0
      %4895 = vmatpush.msra.mxu0 0.0
      %4896 = vmatpush.msra.mxu0 0.0
      %4897 = vmatpush.msra.mxu0 0.0
      %4898 = vmatpush.msra.mxu0 0.0
      %4899 = vmatpush.msra.mxu0 0.0
      %4900 = vmatpush.msra.mxu0 0.0
      %4901 = vmatpush.msra.mxu0 0.0
      %4902 = vmatpush.msra.mxu0 0.0
      %4903 = vmatpush.msra.mxu0 %v4856
      %4904 = vmatpush.msra.mxu0 %v4853
      %4905 = vmatpush.msra.mxu0 %v4850
      %4906 = vmatmul.f32.gmra.mxu0 %v4868
      %v4907 = vpop.f32.mrf.mxu0
      %v4908 = vadd.f32 0.0, %v4907
      %4909 = vdwg.mxu0
      %4910 = vmatpush.msra.mxu0 0.0
      %4911 = vmatpush.msra.mxu0 0.0
      %4912 = vmatpush.msra.mxu0 0.0
      %4913 = vmatpush.msra.mxu0 0.0
      %4914 = vmatpush.msra.mxu0 0.0
      %4915 = vmatpush.msra.mxu0 0.0
      %4916 = vmatpush.msra.mxu0 0.0
      %4917 = vmatpush.msra.mxu0 0.0
      %4918 = vmatpush.msra.mxu0 0.0
      %4919 = vmatpush.msra.mxu0 0.0
      %4920 = vmatpush.msra.mxu0 0.0
      %4921 = vmatpush.msra.mxu0 0.0
      %4922 = vmatpush.msra.mxu0 0.0
      %4923 = vmatpush.msra.mxu0 %v4857
      %4924 = vmatpush.msra.mxu0 %v4854
      %4925 = vmatpush.msra.mxu0 %v4851
      %4926 = vmatmul.f32.gmra.mxu0 %v4868
      %v4927 = vpop.f32.mrf.mxu0
      %v4928 = vadd.f32 0.0, %v4927
      %4929 = vdwg.mxu0
      %v4930 = vadd.f32 %v4782, %v4888
      %v4931 = vadd.f32 %v4802, %v4908
      %v4932 = vadd.f32 %v4822, %v4928
      %v4933 = vld [vmem:[%s10 + $0x18] sm:$0xff]
      %4934 = vrot.lane.b32.xlu0 %v4589, 1
      %v4935 = vpop.permute.xlu0 %4934
      %4936 = vrot.lane.b32.xlu0 %v4590, 1
      %v4937 = vpop.permute.xlu0 %4936
      %4938 = vrot.lane.b32.xlu0 %v4591, 1
      %v4939 = vpop.permute.xlu0 %4938
      %4940 = vrot.lane.b32.xlu0 %v4592, 1
      %v4941 = vpop.permute.xlu0 %4940
      %4942 = vrot.lane.b32.xlu0 %v4593, 1
      %v4943 = vpop.permute.xlu0 %4942
      %4944 = vrot.lane.b32.xlu0 %v4594, 1
      %v4945 = vpop.permute.xlu0 %4944
      %4946 = vrot.lane.b32.xlu0 %v4595, 1
      %v4947 = vpop.permute.xlu0 %4946
      %4948 = vrot.lane.b32.xlu0 %v4596, 1
      %v4949 = vpop.permute.xlu0 %4948
      %4950 = vrot.lane.b32.xlu0 %v4597, 1
      %v4951 = vpop.permute.xlu0 %4950
      %4952 = vrot.lane.b32.xlu0 %v4598, 1
      %v4953 = vpop.permute.xlu0 %4952
      %4954 = vrot.lane.b32.xlu0 %v4599, 1
      %v4955 = vpop.permute.xlu0 %4954
      %4956 = vrot.lane.b32.xlu0 %v4600, 1
      %v4957 = vpop.permute.xlu0 %4956
      %v4958 = vsel %vm692, %v4935, %v4937
      %v4959 = vsel %vm692, %v4937, %v4939
      %v4960 = vsel %vm692, %v4939, %v4941
      %v4961 = vsel %vm692, %v4943, %v4945
      %v4962 = vsel %vm692, %v4945, %v4947
      %v4963 = vsel %vm692, %v4947, %v4949
      %v4964 = vsel %vm692, %v4951, %v4953
      %v4965 = vsel %vm692, %v4953, %v4955
      %v4966 = vsel %vm692, %v4955, %v4957
      %v4977 = vsel %vm3348, %v4933, 0
      %4979 = vmatpush.msra.mxu0 0.0
      %4980 = vmatpush.msra.mxu0 0.0
      %4981 = vmatpush.msra.mxu0 0.0
      %4982 = vmatpush.msra.mxu0 0.0
      %4983 = vmatpush.msra.mxu0 0.0
      %4984 = vmatpush.msra.mxu0 0.0
      %4985 = vmatpush.msra.mxu0 0.0
      %4986 = vmatpush.msra.mxu0 0.0
      %4987 = vmatpush.msra.mxu0 0.0
      %4988 = vmatpush.msra.mxu0 0.0
      %4989 = vmatpush.msra.mxu0 0.0
      %4990 = vmatpush.msra.mxu0 0.0
      %4991 = vmatpush.msra.mxu0 0.0
      %4992 = vmatpush.msra.mxu0 %v4964
      %4993 = vmatpush.msra.mxu0 %v4961
      %4994 = vmatpush.msra.mxu0 %v4958
      %4995 = vmatmul.f32.gmra.mxu0 %v4977
      %v4996 = vpop.f32.mrf.mxu0
      %v4997 = vadd.f32 0.0, %v4996
      %4998 = vdwg.mxu0
      %4999 = vmatpush.msra.mxu0 0.0
      %5000 = vmatpush.msra.mxu0 0.0
      %5001 = vmatpush.msra.mxu0 0.0
      %5002 = vmatpush.msra.mxu0 0.0
      %5003 = vmatpush.msra.mxu0 0.0
      %5004 = vmatpush.msra.mxu0 0.0
      %5005 = vmatpush.msra.mxu0 0.0
      %5006 = vmatpush.msra.mxu0 0.0
      %5007 = vmatpush.msra.mxu0 0.0
      %5008 = vmatpush.msra.mxu0 0.0
      %5009 = vmatpush.msra.mxu0 0.0
      %5010 = vmatpush.msra.mxu0 0.0
      %5011 = vmatpush.msra.mxu0 0.0
      %5012 = vmatpush.msra.mxu0 %v4965
      %5013 = vmatpush.msra.mxu0 %v4962
      %5014 = vmatpush.msra.mxu0 %v4959
      %5015 = vmatmul.f32.gmra.mxu0 %v4977
      %v5016 = vpop.f32.mrf.mxu0
      %v5017 = vadd.f32 0.0, %v5016
      %5018 = vdwg.mxu0
      %5019 = vmatpush.msra.mxu0 0.0
      %5020 = vmatpush.msra.mxu0 0.0
      %5021 = vmatpush.msra.mxu0 0.0
      %5022 = vmatpush.msra.mxu0 0.0
      %5023 = vmatpush.msra.mxu0 0.0
      %5024 = vmatpush.msra.mxu0 0.0
      %5025 = vmatpush.msra.mxu0 0.0
      %5026 = vmatpush.msra.mxu0 0.0
      %5027 = vmatpush.msra.mxu0 0.0
      %5028 = vmatpush.msra.mxu0 0.0
      %5029 = vmatpush.msra.mxu0 0.0
      %5030 = vmatpush.msra.mxu0 0.0
      %5031 = vmatpush.msra.mxu0 0.0
      %5032 = vmatpush.msra.mxu0 %v4966
      %5033 = vmatpush.msra.mxu0 %v4963
      %5034 = vmatpush.msra.mxu0 %v4960
      %5035 = vmatmul.f32.gmra.mxu0 %v4977
      %v5036 = vpop.f32.mrf.mxu0
      %v5037 = vadd.f32 0.0, %v5036
      %5038 = vdwg.mxu0
      %v5039 = vadd.f32 %v4930, %v4997
      %v5040 = vadd.f32 %v4931, %v5017
      %v5041 = vadd.f32 %v4932, %v5037
      %v5042 = vld [vmem:[%s10 + $0x20] sm:$0xff]
      %v5044 = vsel %vm3348, %v5042, 0
      %5046 = vmatpush.msra.mxu0 0.0
      %5047 = vmatpush.msra.mxu0 0.0
      %5048 = vmatpush.msra.mxu0 0.0
      %5049 = vmatpush.msra.mxu0 0.0
      %5050 = vmatpush.msra.mxu0 0.0
      %5051 = vmatpush.msra.mxu0 0.0
      %5052 = vmatpush.msra.mxu0 0.0
      %5053 = vmatpush.msra.mxu0 0.0
      %5054 = vmatpush.msra.mxu0 0.0
      %5055 = vmatpush.msra.mxu0 0.0
      %5056 = vmatpush.msra.mxu0 0.0
      %5057 = vmatpush.msra.mxu0 0.0
      %5058 = vmatpush.msra.mxu0 0.0
      %5059 = vmatpush.msra.mxu0 %v4598
      %5060 = vmatpush.msra.mxu0 %v4594
      %5061 = vmatpush.msra.mxu0 %v4590
      %5062 = vmatmul.f32.gmra.mxu0 %v5044
      %v5063 = vpop.f32.mrf.mxu0
      %v5064 = vadd.f32 0.0, %v5063
      %5065 = vdwg.mxu0
      %5066 = vmatpush.msra.mxu0 0.0
      %5067 = vmatpush.msra.mxu0 0.0
      %5068 = vmatpush.msra.mxu0 0.0
      %5069 = vmatpush.msra.mxu0 0.0
      %5070 = vmatpush.msra.mxu0 0.0
      %5071 = vmatpush.msra.mxu0 0.0
      %5072 = vmatpush.msra.mxu0 0.0
      %5073 = vmatpush.msra.mxu0 0.0
      %5074 = vmatpush.msra.mxu0 0.0
      %5075 = vmatpush.msra.mxu0 0.0
      %5076 = vmatpush.msra.mxu0 0.0
      %5077 = vmatpush.msra.mxu0 0.0
      %5078 = vmatpush.msra.mxu0 0.0
      %5079 = vmatpush.msra.mxu0 %v4599
      %5080 = vmatpush.msra.mxu0 %v4595
      %5081 = vmatpush.msra.mxu0 %v4591
      %5082 = vmatmul.f32.gmra.mxu0 %v5044
      %v5083 = vpop.f32.mrf.mxu0
      %v5084 = vadd.f32 0.0, %v5083
      %5085 = vdwg.mxu0
      %5086 = vmatpush.msra.mxu0 0.0
      %5087 = vmatpush.msra.mxu0 0.0
      %5088 = vmatpush.msra.mxu0 0.0
      %5089 = vmatpush.msra.mxu0 0.0
      %5090 = vmatpush.msra.mxu0 0.0
      %5091 = vmatpush.msra.mxu0 0.0
      %5092 = vmatpush.msra.mxu0 0.0
      %5093 = vmatpush.msra.mxu0 0.0
      %5094 = vmatpush.msra.mxu0 0.0
      %5095 = vmatpush.msra.mxu0 0.0
      %5096 = vmatpush.msra.mxu0 0.0
      %5097 = vmatpush.msra.mxu0 0.0
      %5098 = vmatpush.msra.mxu0 0.0
      %5099 = vmatpush.msra.mxu0 %v4600
      %5100 = vmatpush.msra.mxu0 %v4596
      %5101 = vmatpush.msra.mxu0 %v4592
      %5102 = vmatmul.f32.gmra.mxu0 %v5044
      %v5103 = vpop.f32.mrf.mxu0
      %v5104 = vadd.f32 0.0, %v5103
      %5105 = vdwg.mxu0
      %v5106 = vadd.f32 %v5039, %v5064
      %v5107 = vadd.f32 %v5040, %v5084
      %v5108 = vadd.f32 %v5041, %v5104
      %v5109 = vld [vmem:[%s10 + $0x28] sm:$0xff]
      %v5110 = vld [vmem:[#allocation5 + $0x8] sm:$0xff]
      %v5111 = vld [vmem:[#allocation5 + $0x10] sm:$0xff]
      %v5112 = vld [vmem:[#allocation5 + $0x18] sm:$0xff]
      %v5113 = vld [vmem:[#allocation5 + $0x20] sm:$0xff]
      %v5114 = vld [vmem:[#allocation5 + $0x30] sm:$0xff]
      %v5115 = vld [vmem:[#allocation5 + $0x38] sm:$0xff]
      %v5116 = vld [vmem:[#allocation5 + $0x40] sm:$0xff]
      %v5117 = vld [vmem:[#allocation5 + $0x48] sm:$0xff]
      %v5118 = vld [vmem:[#allocation5 + $0x58] sm:$0xff]
      %v5119 = vld [vmem:[#allocation5 + $0x60] sm:$0xff]
      %v5120 = vld [vmem:[#allocation5 + $0x68] sm:$0xff]
      %v5121 = vld [vmem:[#allocation5 + $0x70] sm:$0xff]
      %5134 = vrot.lane.b32.xlu0 %v5110, 127
      %v5135 = vpop.permute.xlu0 %5134
      %5136 = vrot.lane.b32.xlu0 %v5111, 127
      %v5137 = vpop.permute.xlu0 %5136
      %5138 = vrot.lane.b32.xlu0 %v5112, 127
      %v5139 = vpop.permute.xlu0 %5138
      %5140 = vrot.lane.b32.xlu0 %v5113, 127
      %v5141 = vpop.permute.xlu0 %5140
      %5142 = vrot.lane.b32.xlu0 %v5114, 127
      %v5143 = vpop.permute.xlu0 %5142
      %5144 = vrot.lane.b32.xlu0 %v5115, 127
      %v5145 = vpop.permute.xlu0 %5144
      %5146 = vrot.lane.b32.xlu0 %v5116, 127
      %v5147 = vpop.permute.xlu0 %5146
      %5148 = vrot.lane.b32.xlu0 %v5117, 127
      %v5149 = vpop.permute.xlu0 %5148
      %5150 = vrot.lane.b32.xlu0 %v5118, 127
      %v5151 = vpop.permute.xlu0 %5150
      %5152 = vrot.lane.b32.xlu0 %v5119, 127
      %v5153 = vpop.permute.xlu0 %5152
      %5154 = vrot.lane.b32.xlu0 %v5120, 127
      %v5155 = vpop.permute.xlu0 %5154
      %5156 = vrot.lane.b32.xlu0 %v5121, 127
      %v5157 = vpop.permute.xlu0 %5156
      %v5158 = vsel %vm849, %v5135, %v5137
      %v5159 = vsel %vm849, %v5137, %v5139
      %v5160 = vsel %vm849, %v5139, %v5141
      %v5161 = vsel %vm849, %v5143, %v5145
      %v5162 = vsel %vm849, %v5145, %v5147
      %v5163 = vsel %vm849, %v5147, %v5149
      %v5164 = vsel %vm849, %v5151, %v5153
      %v5165 = vsel %vm849, %v5153, %v5155
      %v5166 = vsel %vm849, %v5155, %v5157
      %v5177 = vsel %vm3348, %v5109, 0
      %5179 = vmatpush.msra.mxu0 0.0
      %5180 = vmatpush.msra.mxu0 0.0
      %5181 = vmatpush.msra.mxu0 0.0
      %5182 = vmatpush.msra.mxu0 0.0
      %5183 = vmatpush.msra.mxu0 0.0
      %5184 = vmatpush.msra.mxu0 0.0
      %5185 = vmatpush.msra.mxu0 0.0
      %5186 = vmatpush.msra.mxu0 0.0
      %5187 = vmatpush.msra.mxu0 0.0
      %5188 = vmatpush.msra.mxu0 0.0
      %5189 = vmatpush.msra.mxu0 0.0
      %5190 = vmatpush.msra.mxu0 0.0
      %5191 = vmatpush.msra.mxu0 0.0
      %5192 = vmatpush.msra.mxu0 %v5164
      %5193 = vmatpush.msra.mxu0 %v5161
      %5194 = vmatpush.msra.mxu0 %v5158
      %5195 = vmatmul.f32.gmra.mxu0 %v5177
      %v5196 = vpop.f32.mrf.mxu0
      %v5197 = vadd.f32 0.0, %v5196
      %5198 = vdwg.mxu0
      %5199 = vmatpush.msra.mxu0 0.0
      %5200 = vmatpush.msra.mxu0 0.0
      %5201 = vmatpush.msra.mxu0 0.0
      %5202 = vmatpush.msra.mxu0 0.0
      %5203 = vmatpush.msra.mxu0 0.0
      %5204 = vmatpush.msra.mxu0 0.0
      %5205 = vmatpush.msra.mxu0 0.0
      %5206 = vmatpush.msra.mxu0 0.0
      %5207 = vmatpush.msra.mxu0 0.0
      %5208 = vmatpush.msra.mxu0 0.0
      %5209 = vmatpush.msra.mxu0 0.0
      %5210 = vmatpush.msra.mxu0 0.0
      %5211 = vmatpush.msra.mxu0 0.0
      %5212 = vmatpush.msra.mxu0 %v5165
      %5213 = vmatpush.msra.mxu0 %v5162
      %5214 = vmatpush.msra.mxu0 %v5159
      %5215 = vmatmul.f32.gmra.mxu0 %v5177
      %v5216 = vpop.f32.mrf.mxu0
      %v5217 = vadd.f32 0.0, %v5216
      %5218 = vdwg.mxu0
      %5219 = vmatpush.msra.mxu0 0.0
      %5220 = vmatpush.msra.mxu0 0.0
      %5221 = vmatpush.msra.mxu0 0.0
      %5222 = vmatpush.msra.mxu0 0.0
      %5223 = vmatpush.msra.mxu0 0.0
      %5224 = vmatpush.msra.mxu0 0.0
      %5225 = vmatpush.msra.mxu0 0.0
      %5226 = vmatpush.msra.mxu0 0.0
      %5227 = vmatpush.msra.mxu0 0.0
      %5228 = vmatpush.msra.mxu0 0.0
      %5229 = vmatpush.msra.mxu0 0.0
      %5230 = vmatpush.msra.mxu0 0.0
      %5231 = vmatpush.msra.mxu0 0.0
      %5232 = vmatpush.msra.mxu0 %v5166
      %5233 = vmatpush.msra.mxu0 %v5163
      %5234 = vmatpush.msra.mxu0 %v5160
      %5235 = vmatmul.f32.gmra.mxu0 %v5177
      %v5236 = vpop.f32.mrf.mxu0
      %v5237 = vadd.f32 0.0, %v5236
      %5238 = vdwg.mxu0
      %v5239 = vadd.f32 %v5106, %v5197
      %v5240 = vadd.f32 %v5107, %v5217
      %v5241 = vadd.f32 %v5108, %v5237
      %v5242 = vld [vmem:[%s10 + $0x30] sm:$0xff]
      %5243 = vrot.lane.b32.xlu0 %v5110, 111
      %v5244 = vpop.permute.xlu0 %5243
      %5245 = vrot.lane.b32.xlu0 %v5111, 111
      %v5246 = vpop.permute.xlu0 %5245
      %5247 = vrot.lane.b32.xlu0 %v5112, 111
      %v5248 = vpop.permute.xlu0 %5247
      %5249 = vrot.lane.b32.xlu0 %v5113, 111
      %v5250 = vpop.permute.xlu0 %5249
      %5251 = vrot.lane.b32.xlu0 %v5114, 111
      %v5252 = vpop.permute.xlu0 %5251
      %5253 = vrot.lane.b32.xlu0 %v5115, 111
      %v5254 = vpop.permute.xlu0 %5253
      %5255 = vrot.lane.b32.xlu0 %v5116, 111
      %v5256 = vpop.permute.xlu0 %5255
      %5257 = vrot.lane.b32.xlu0 %v5117, 111
      %v5258 = vpop.permute.xlu0 %5257
      %5259 = vrot.lane.b32.xlu0 %v5118, 111
      %v5260 = vpop.permute.xlu0 %5259
      %5261 = vrot.lane.b32.xlu0 %v5119, 111
      %v5262 = vpop.permute.xlu0 %5261
      %5263 = vrot.lane.b32.xlu0 %v5120, 111
      %v5264 = vpop.permute.xlu0 %5263
      %5265 = vrot.lane.b32.xlu0 %v5121, 111
      %v5266 = vpop.permute.xlu0 %5265
      %v5267 = vsel %vm931, %v5244, %v5246
      %v5268 = vsel %vm931, %v5246, %v5248
      %v5269 = vsel %vm931, %v5248, %v5250
      %v5270 = vsel %vm931, %v5252, %v5254
      %v5271 = vsel %vm931, %v5254, %v5256
      %v5272 = vsel %vm931, %v5256, %v5258
      %v5273 = vsel %vm931, %v5260, %v5262
      %v5274 = vsel %vm931, %v5262, %v5264
      %v5275 = vsel %vm931, %v5264, %v5266
      %v5286 = vsel %vm3348, %v5242, 0
      %5288 = vmatpush.msra.mxu0 0.0
      %5289 = vmatpush.msra.mxu0 0.0
      %5290 = vmatpush.msra.mxu0 0.0
      %5291 = vmatpush.msra.mxu0 0.0
      %5292 = vmatpush.msra.mxu0 0.0
      %5293 = vmatpush.msra.mxu0 0.0
      %5294 = vmatpush.msra.mxu0 0.0
      %5295 = vmatpush.msra.mxu0 0.0
      %5296 = vmatpush.msra.mxu0 0.0
      %5297 = vmatpush.msra.mxu0 0.0
      %5298 = vmatpush.msra.mxu0 0.0
      %5299 = vmatpush.msra.mxu0 0.0
      %5300 = vmatpush.msra.mxu0 0.0
      %5301 = vmatpush.msra.mxu0 %v5273
      %5302 = vmatpush.msra.mxu0 %v5270
      %5303 = vmatpush.msra.mxu0 %v5267
      %5304 = vmatmul.f32.gmra.mxu0 %v5286
      %v5305 = vpop.f32.mrf.mxu0
      %v5306 = vadd.f32 0.0, %v5305
      %5307 = vdwg.mxu0
      %5308 = vmatpush.msra.mxu0 0.0
      %5309 = vmatpush.msra.mxu0 0.0
      %5310 = vmatpush.msra.mxu0 0.0
      %5311 = vmatpush.msra.mxu0 0.0
      %5312 = vmatpush.msra.mxu0 0.0
      %5313 = vmatpush.msra.mxu0 0.0
      %5314 = vmatpush.msra.mxu0 0.0
      %5315 = vmatpush.msra.mxu0 0.0
      %5316 = vmatpush.msra.mxu0 0.0
      %5317 = vmatpush.msra.mxu0 0.0
      %5318 = vmatpush.msra.mxu0 0.0
      %5319 = vmatpush.msra.mxu0 0.0
      %5320 = vmatpush.msra.mxu0 0.0
      %5321 = vmatpush.msra.mxu0 %v5274
      %5322 = vmatpush.msra.mxu0 %v5271
      %5323 = vmatpush.msra.mxu0 %v5268
      %5324 = vmatmul.f32.gmra.mxu0 %v5286
      %v5325 = vpop.f32.mrf.mxu0
      %v5326 = vadd.f32 0.0, %v5325
      %5327 = vdwg.mxu0
      %5328 = vmatpush.msra.mxu0 0.0
      %5329 = vmatpush.msra.mxu0 0.0
      %5330 = vmatpush.msra.mxu0 0.0
      %5331 = vmatpush.msra.mxu0 0.0
      %5332 = vmatpush.msra.mxu0 0.0
      %5333 = vmatpush.msra.mxu0 0.0
      %5334 = vmatpush.msra.mxu0 0.0
      %5335 = vmatpush.msra.mxu0 0.0
      %5336 = vmatpush.msra.mxu0 0.0
      %5337 = vmatpush.msra.mxu0 0.0
      %5338 = vmatpush.msra.mxu0 0.0
      %5339 = vmatpush.msra.mxu0 0.0
      %5340 = vmatpush.msra.mxu0 0.0
      %5341 = vmatpush.msra.mxu0 %v5275
      %5342 = vmatpush.msra.mxu0 %v5272
      %5343 = vmatpush.msra.mxu0 %v5269
      %5344 = vmatmul.f32.gmra.mxu0 %v5286
      %v5345 = vpop.f32.mrf.mxu0
      %v5346 = vadd.f32 0.0, %v5345
      %5347 = vdwg.mxu0
      %v5348 = vadd.f32 %v5239, %v5306
      %v5349 = vadd.f32 %v5240, %v5326
      %v5350 = vadd.f32 %v5241, %v5346
      %v5351 = vld [vmem:[%s10 + $0x38] sm:$0xff]
      %5352 = vrot.lane.b32.xlu0 %v5110, 110
      %v5353 = vpop.permute.xlu0 %5352
      %5354 = vrot.lane.b32.xlu0 %v5111, 110
      %v5355 = vpop.permute.xlu0 %5354
      %5356 = vrot.lane.b32.xlu0 %v5112, 110
      %v5357 = vpop.permute.xlu0 %5356
      %5358 = vrot.lane.b32.xlu0 %v5113, 110
      %v5359 = vpop.permute.xlu0 %5358
      %5360 = vrot.lane.b32.xlu0 %v5114, 110
      %v5361 = vpop.permute.xlu0 %5360
      %5362 = vrot.lane.b32.xlu0 %v5115, 110
      %v5363 = vpop.permute.xlu0 %5362
      %5364 = vrot.lane.b32.xlu0 %v5116, 110
      %v5365 = vpop.permute.xlu0 %5364
      %5366 = vrot.lane.b32.xlu0 %v5117, 110
      %v5367 = vpop.permute.xlu0 %5366
      %5368 = vrot.lane.b32.xlu0 %v5118, 110
      %v5369 = vpop.permute.xlu0 %5368
      %5370 = vrot.lane.b32.xlu0 %v5119, 110
      %v5371 = vpop.permute.xlu0 %5370
      %5372 = vrot.lane.b32.xlu0 %v5120, 110
      %v5373 = vpop.permute.xlu0 %5372
      %5374 = vrot.lane.b32.xlu0 %v5121, 110
      %v5375 = vpop.permute.xlu0 %5374
      %v5376 = vsel %vm1013, %v5353, %v5355
      %v5377 = vsel %vm1013, %v5355, %v5357
      %v5378 = vsel %vm1013, %v5357, %v5359
      %v5379 = vsel %vm1013, %v5361, %v5363
      %v5380 = vsel %vm1013, %v5363, %v5365
      %v5381 = vsel %vm1013, %v5365, %v5367
      %v5382 = vsel %vm1013, %v5369, %v5371
      %v5383 = vsel %vm1013, %v5371, %v5373
      %v5384 = vsel %vm1013, %v5373, %v5375
      %v5395 = vsel %vm3348, %v5351, 0
      %5397 = vmatpush.msra.mxu0 0.0
      %5398 = vmatpush.msra.mxu0 0.0
      %5399 = vmatpush.msra.mxu0 0.0
      %5400 = vmatpush.msra.mxu0 0.0
      %5401 = vmatpush.msra.mxu0 0.0
      %5402 = vmatpush.msra.mxu0 0.0
      %5403 = vmatpush.msra.mxu0 0.0
      %5404 = vmatpush.msra.mxu0 0.0
      %5405 = vmatpush.msra.mxu0 0.0
      %5406 = vmatpush.msra.mxu0 0.0
      %5407 = vmatpush.msra.mxu0 0.0
      %5408 = vmatpush.msra.mxu0 0.0
      %5409 = vmatpush.msra.mxu0 0.0
      %5410 = vmatpush.msra.mxu0 %v5382
      %5411 = vmatpush.msra.mxu0 %v5379
      %5412 = vmatpush.msra.mxu0 %v5376
      %5413 = vmatmul.f32.gmra.mxu0 %v5395
      %v5414 = vpop.f32.mrf.mxu0
      %v5415 = vadd.f32 0.0, %v5414
      %5416 = vdwg.mxu0
      %5417 = vmatpush.msra.mxu0 0.0
      %5418 = vmatpush.msra.mxu0 0.0
      %5419 = vmatpush.msra.mxu0 0.0
      %5420 = vmatpush.msra.mxu0 0.0
      %5421 = vmatpush.msra.mxu0 0.0
      %5422 = vmatpush.msra.mxu0 0.0
      %5423 = vmatpush.msra.mxu0 0.0
      %5424 = vmatpush.msra.mxu0 0.0
      %5425 = vmatpush.msra.mxu0 0.0
      %5426 = vmatpush.msra.mxu0 0.0
      %5427 = vmatpush.msra.mxu0 0.0
      %5428 = vmatpush.msra.mxu0 0.0
      %5429 = vmatpush.msra.mxu0 0.0
      %5430 = vmatpush.msra.mxu0 %v5383
      %5431 = vmatpush.msra.mxu0 %v5380
      %5432 = vmatpush.msra.mxu0 %v5377
      %5433 = vmatmul.f32.gmra.mxu0 %v5395
      %v5434 = vpop.f32.mrf.mxu0
      %v5435 = vadd.f32 0.0, %v5434
      %5436 = vdwg.mxu0
      %5437 = vmatpush.msra.mxu0 0.0
      %5438 = vmatpush.msra.mxu0 0.0
      %5439 = vmatpush.msra.mxu0 0.0
      %5440 = vmatpush.msra.mxu0 0.0
      %5441 = vmatpush.msra.mxu0 0.0
      %5442 = vmatpush.msra.mxu0 0.0
      %5443 = vmatpush.msra.mxu0 0.0
      %5444 = vmatpush.msra.mxu0 0.0
      %5445 = vmatpush.msra.mxu0 0.0
      %5446 = vmatpush.msra.mxu0 0.0
      %5447 = vmatpush.msra.mxu0 0.0
      %5448 = vmatpush.msra.mxu0 0.0
      %5449 = vmatpush.msra.mxu0 0.0
      %5450 = vmatpush.msra.mxu0 %v5384
      %5451 = vmatpush.msra.mxu0 %v5381
      %5452 = vmatpush.msra.mxu0 %v5378
      %5453 = vmatmul.f32.gmra.mxu0 %v5395
      %v5454 = vpop.f32.mrf.mxu0
      %v5455 = vadd.f32 0.0, %v5454
      %5456 = vdwg.mxu0
      %v5457 = vadd.f32 %v5348, %v5415
      %v5458 = vadd.f32 %v5349, %v5435
      %v5459 = vadd.f32 %v5350, %v5455
      %v5460 = vld [vmem:[%s10 + $0x40] sm:$0xff]
      %5461 = vrot.lane.b32.xlu0 %v5110, 109
      %v5462 = vpop.permute.xlu0 %5461
      %5463 = vrot.lane.b32.xlu0 %v5111, 109
      %v5464 = vpop.permute.xlu0 %5463
      %5465 = vrot.lane.b32.xlu0 %v5112, 109
      %v5466 = vpop.permute.xlu0 %5465
      %5467 = vrot.lane.b32.xlu0 %v5113, 109
      %v5468 = vpop.permute.xlu0 %5467
      %5469 = vrot.lane.b32.xlu0 %v5114, 109
      %v5470 = vpop.permute.xlu0 %5469
      %5471 = vrot.lane.b32.xlu0 %v5115, 109
      %v5472 = vpop.permute.xlu0 %5471
      %5473 = vrot.lane.b32.xlu0 %v5116, 109
      %v5474 = vpop.permute.xlu0 %5473
      %5475 = vrot.lane.b32.xlu0 %v5117, 109
      %v5476 = vpop.permute.xlu0 %5475
      %5477 = vrot.lane.b32.xlu0 %v5118, 109
      %v5478 = vpop.permute.xlu0 %5477
      %5479 = vrot.lane.b32.xlu0 %v5119, 109
      %v5480 = vpop.permute.xlu0 %5479
      %5481 = vrot.lane.b32.xlu0 %v5120, 109
      %v5482 = vpop.permute.xlu0 %5481
      %5483 = vrot.lane.b32.xlu0 %v5121, 109
      %v5484 = vpop.permute.xlu0 %5483
      %v5485 = vsel %vm1095, %v5462, %v5464
      %v5486 = vsel %vm1095, %v5464, %v5466
      %v5487 = vsel %vm1095, %v5466, %v5468
      %v5488 = vsel %vm1095, %v5470, %v5472
      %v5489 = vsel %vm1095, %v5472, %v5474
      %v5490 = vsel %vm1095, %v5474, %v5476
      %v5491 = vsel %vm1095, %v5478, %v5480
      %v5492 = vsel %vm1095, %v5480, %v5482
      %v5493 = vsel %vm1095, %v5482, %v5484
      %v5504 = vsel %vm3348, %v5460, 0
      %5506 = vmatpush.msra.mxu0 0.0
      %5507 = vmatpush.msra.mxu0 0.0
      %5508 = vmatpush.msra.mxu0 0.0
      %5509 = vmatpush.msra.mxu0 0.0
      %5510 = vmatpush.msra.mxu0 0.0
      %5511 = vmatpush.msra.mxu0 0.0
      %5512 = vmatpush.msra.mxu0 0.0
      %5513 = vmatpush.msra.mxu0 0.0
      %5514 = vmatpush.msra.mxu0 0.0
      %5515 = vmatpush.msra.mxu0 0.0
      %5516 = vmatpush.msra.mxu0 0.0
      %5517 = vmatpush.msra.mxu0 0.0
      %5518 = vmatpush.msra.mxu0 0.0
      %5519 = vmatpush.msra.mxu0 %v5491
      %5520 = vmatpush.msra.mxu0 %v5488
      %5521 = vmatpush.msra.mxu0 %v5485
      %5522 = vmatmul.f32.gmra.mxu0 %v5504
      %v5523 = vpop.f32.mrf.mxu0
      %v5524 = vadd.f32 0.0, %v5523
      %5525 = vdwg.mxu0
      %5526 = vmatpush.msra.mxu0 0.0
      %5527 = vmatpush.msra.mxu0 0.0
      %5528 = vmatpush.msra.mxu0 0.0
      %5529 = vmatpush.msra.mxu0 0.0
      %5530 = vmatpush.msra.mxu0 0.0
      %5531 = vmatpush.msra.mxu0 0.0
      %5532 = vmatpush.msra.mxu0 0.0
      %5533 = vmatpush.msra.mxu0 0.0
      %5534 = vmatpush.msra.mxu0 0.0
      %5535 = vmatpush.msra.mxu0 0.0
      %5536 = vmatpush.msra.mxu0 0.0
      %5537 = vmatpush.msra.mxu0 0.0
      %5538 = vmatpush.msra.mxu0 0.0
      %5539 = vmatpush.msra.mxu0 %v5492
      %5540 = vmatpush.msra.mxu0 %v5489
      %5541 = vmatpush.msra.mxu0 %v5486
      %5542 = vmatmul.f32.gmra.mxu0 %v5504
      %v5543 = vpop.f32.mrf.mxu0
      %v5544 = vadd.f32 0.0, %v5543
      %5545 = vdwg.mxu0
      %5546 = vmatpush.msra.mxu0 0.0
      %5547 = vmatpush.msra.mxu0 0.0
      %5548 = vmatpush.msra.mxu0 0.0
      %5549 = vmatpush.msra.mxu0 0.0
      %5550 = vmatpush.msra.mxu0 0.0
      %5551 = vmatpush.msra.mxu0 0.0
      %5552 = vmatpush.msra.mxu0 0.0
      %5553 = vmatpush.msra.mxu0 0.0
      %5554 = vmatpush.msra.mxu0 0.0
      %5555 = vmatpush.msra.mxu0 0.0
      %5556 = vmatpush.msra.mxu0 0.0
      %5557 = vmatpush.msra.mxu0 0.0
      %5558 = vmatpush.msra.mxu0 0.0
      %5559 = vmatpush.msra.mxu0 %v5493
      %5560 = vmatpush.msra.mxu0 %v5490
      %5561 = vmatpush.msra.mxu0 %v5487
      %5562 = vmatmul.f32.gmra.mxu0 %v5504
      %v5563 = vpop.f32.mrf.mxu0
      %v5564 = vadd.f32 0.0, %v5563
      %5565 = vdwg.mxu0
      %v5566 = vadd.f32 %v5457, %v5524
      %v5567 = vadd.f32 %v5458, %v5544
      %v5568 = vadd.f32 %v5459, %v5564
      %v5569 = vld [vmem:[%s11] sm:$0xff]
      %5571 = vset.pattern.permute.xlu0 0
      %5572 = vperm.xlu0 %5571, %v5569
      %v5573 = vpop.permute.xlu0 %5572
      %v5575 = vadd.f32 %v5566, %v5573
      %v5576 = vadd.f32 %v5567, %v5573
      %v5577 = vadd.f32 %v5568, %v5573
      %v5578 = vxor.u32 %v5575, 2147483648
      %v5579 = vxor.u32 %v5576, 2147483648
      %v5580 = vxor.u32 %v5577, 2147483648
      %v5581 = vmul.f32 %v5578, 1.442695
      %v5582 = vpow.pop %v5581
      %v5583 = vmul.f32 %v5579, 1.442695
      %v5584 = vpow.pop %v5583
      %v5585 = vmul.f32 %v5580, 1.442695
      %v5586 = vpow.pop %v5585
      %v5587 = vadd.f32 %v5582, 1.0
      %v5588 = vadd.f32 %v5584, 1.0
      %v5589 = vadd.f32 %v5586, 1.0
      %v5590 = vrcp.pop %v5587
      %v5591 = vmul.f32 %v5587, %v5590
      %v5592 = vsub.f32 1.0, %v5591
      %v5593 = vmul.f32 %v5590, %v5592
      %v5594 = vadd.f32 %v5590, %v5593
      %vm5595 = vweird.f32 %v5587
      %vm5596 = vweird.f32 %v5590
      %vm5597 = vmor %vm5595, %vm5596
      %v5598 = vsel %vm5597, %v5590, %v5594
      %v5599 = vand.u32 2147483647, %v5587
      %vm5600 = vcmp.eq.f32.partialorder %v5599, 8.507059e+37
      %v5601 = vand.u32 %v5587, 2147483648
      %v5602 = vor.u32 1.1754944e-38, %v5601
      %v5603 = vsel %vm5600, %v5602, %v5598
      %v5604 = vmul.f32 1.0, %v5603
      %v5605 = vrcp.pop %v5588
      %v5606 = vmul.f32 %v5588, %v5605
      %v5607 = vsub.f32 1.0, %v5606
      %v5608 = vmul.f32 %v5605, %v5607
      %v5609 = vadd.f32 %v5605, %v5608
      %vm5610 = vweird.f32 %v5588
      %vm5611 = vweird.f32 %v5605
      %vm5612 = vmor %vm5610, %vm5611
      %v5613 = vsel %vm5612, %v5605, %v5609
      %v5614 = vand.u32 2147483647, %v5588
      %vm5615 = vcmp.eq.f32.partialorder %v5614, 8.507059e+37
      %v5616 = vand.u32 %v5588, 2147483648
      %v5617 = vor.u32 1.1754944e-38, %v5616
      %v5618 = vsel %vm5615, %v5617, %v5613
      %v5619 = vmul.f32 1.0, %v5618
      %v5620 = vrcp.pop %v5589
      %v5621 = vmul.f32 %v5589, %v5620
      %v5622 = vsub.f32 1.0, %v5621
      %v5623 = vmul.f32 %v5620, %v5622
      %v5624 = vadd.f32 %v5620, %v5623
      %vm5625 = vweird.f32 %v5589
      %vm5626 = vweird.f32 %v5620
      %vm5627 = vmor %vm5625, %vm5626
      %v5628 = vsel %vm5627, %v5620, %v5624
      %v5629 = vand.u32 2147483647, %v5589
      %vm5630 = vcmp.eq.f32.partialorder %v5629, 8.507059e+37
      %v5631 = vand.u32 %v5589, 2147483648
      %v5632 = vor.u32 1.1754944e-38, %v5631
      %v5633 = vsel %vm5630, %v5632, %v5628
      %v5634 = vmul.f32 1.0, %v5633
      %5635 = vst [vmem:[%s413] sm:$0xff] %v5604
      %5636 = vst [vmem:[%s413 + $0x8] sm:$0xff] %v5619
      %5637 = vst [vmem:[%s413 + $0x10] sm:$0xff] %v5634
      %p5638 = scmp.lt.s32.totalorder %s23, 1
      %s5639 = scalar_select %p5638, %s23, 1
      %s5640 = smul.addr %s5639, 3
      %s5641 = smul.addr %s5640, 8
      %s5642 = scalar_lea.vmem %s12, %s5641
      // Predicated region
      $region69: #{forward.1} parent=67 // pred_check
        %p5643 = pneg %p298
      $region70: #{forward.1} parent=67 // pred_check_branch
        %5645 = sbr.rel (%p5643) target = $region72
      $region71: #{forward.1} parent=67 // pred_region
        _
      $region72: #{forward.1} parent=67 // pred_fallthru
        _
    $region68: #{forward.1} parent=5 // pred_fallthru
      _
    %p5646 = scmp.le.s32.totalorder 2, %s18
    // Predicated region
    $region73: #{forward.1} parent=5 // pred_check
      %p5647 = pneg %p5646
    $region74: #{forward.1} parent=5 // pred_check_branch
      %5649 = sbr.rel (%p5647) target = $region76
    $region75: #{forward.1} parent=5 // pred_region
      %s5650 = ssub.s32 %s18, 2
      // Predicated region
      $region77: #{forward.1} parent=75 // pred_check
        %p5651 = pneg %p304
      $region78: #{forward.1} parent=75 // pred_check_branch
        %5653 = sbr.rel (%p5651) target = $region80
      $region79: #{forward.1} parent=75 // pred_region
        %p5654 = scmp.lt.s32.totalorder %s24, 1
        %s5655 = scalar_select %p5654, %s24, 1
        %s5656 = smul.addr %s5655, 3
        %s5657 = smul.addr %s5656, 8
        %s5658 = scalar_lea.vmem %s12, %s5657
      $region80: #{forward.1} parent=75 // pred_fallthru
        _
    $region76: #{forward.1} parent=5 // pred_fallthru
      _
  $region6: #{forward.1} parent=0 // loop_footer
    %s22 = sadd.s32 1, %s18
  $region7: #{forward.1} parent=0 // loop_footer_branch
    %17 = sbr.rel target = $region3
  $region8: #{forward.1} parent=0 // loop_exit
    _

</llo_original>
